<compile_context>
chip_gen: v5e
topology: v5e:2x2
jax: 0.10.0
libtpu: 0.0.40
codegen_flags: <defaults>
</compile_context>

<pallas_src>
import functools

import jax
import jax.numpy as jnp
import numpy as np
from jax import lax
from jax.experimental import pallas as pl
from jax.experimental.pallas import tpu as pltpu

N_CLASSES = 2      # fc3 output features
N_PAD = 128        # lane-dense padding of fc3 / the kernel output
M_PAD = 8          # sublane-dense padding of the batch dim


def _width_chain(w0):
    """Static width chain: conv(k3,s2) x2 -> pool(k1,s2) -> conv x2 -> pool."""
    wc1 = (w0 - 3) // 2 + 1
    wc2 = (wc1 - 3) // 2 + 1
    wp1 = (wc2 - 1) // 2 + 1
    wc3 = (wp1 - 3) // 2 + 1
    wc4 = (wc3 - 3) // 2 + 1
    wp2 = (wc4 - 1) // 2 + 1
    return wc1, wc2, wp1, wc3, wc4, wp2


# ------------------------------ fused kernel --------------------------------

def _conv4_fc2_kernel(batch, w0,
                      x_ref,
                      cw1_ref, b1_ref, cw2_ref, b2_ref,
                      cw3_ref, b3_ref, cw4_ref, b4_ref,
                      bf1_ref, bf2_ref, bf3_ref,
                      wf1_hbm, wf2_hbm, wf3_hbm,
                      o_ref,
                      act_a, act_b, fc1_in,
                      wf1_v, wf2_v, wf3_v, dma_sem):
    """Whole-network forward.  All shapes/offsets are static at trace time.

    x_ref   : (B*W0, 4)   width-major input; sample b at rows [b*W0, (b+1)*W0)
    cwN_ref : (3*Cin, Cout) per-conv tap-concatenated weight, bN_ref: (1, Cout)
    wfN_hbm : fc weights left in HBM (memory_space=pl.ANY), DMA'd manually
    o_ref   : (M_PAD, N_PAD) -- rows >= B and cols >= N_CLASSES are padding
    """
    f32 = jnp.float32
    B = batch

    # Kick off the big FC-weight DMAs first; they overlap the conv chain.
    cp1 = pltpu.make_async_copy(wf1_hbm, wf1_v, dma_sem.at[0])
    cp2 = pltpu.make_async_copy(wf2_hbm, wf2_v, dma_sem.at[1])
    cp3 = pltpu.make_async_copy(wf3_hbm, wf3_v, dma_sem.at[2])
    cp1.start(); cp2.start(); cp3.start()

    wc1, wc2, wp1, wc3, wc4, wp2 = _width_chain(w0)

    def conv_layer(src_ref, src_offs, w_out, stride, wcat_ref, b_ref, dst_ref):
        """Strided-read im2col conv: one MXU matmul per layer for all samples.

        src rows [src_offs[b], ...) hold sample b (width on sublanes, channels
        on lanes).  stride=2 is a plain stride-2 conv; stride=4 means a
        preceding MaxPool2d(1,2) has been folded into the tap reads (tap d
        then starts at 2*d).
        """
        cin = wcat_ref.shape[0] // 3
        cout = wcat_ref.shape[1]
        tap_step = stride // 2              # tap d starts at d (s=2) / 2d (s=4)
        blocks = []
        for off in src_offs:
            taps = []
            for d in range(3):
                rows = src_ref[pl.ds(off + d * tap_step, w_out, stride=stride), :]
                taps.append(rows[:, :cin])
            blocks.append(jnp.concatenate(taps, axis=-1))         # (w_out, 3*cin)
        im2col = jnp.concatenate(blocks, axis=0)                  # (B*w_out, 3*cin)
        y = jnp.dot(im2col, wcat_ref[...], preferred_element_type=f32)
        y = jnp.maximum(y + b_ref[...], 0.0)
        dst_ref[0:B * w_out, 0:cout] = y

    # conv1: x (B*W0, 4) -> act_a rows [0, B*wc1), 32 ch
    conv_layer(x_ref, [b * w0 for b in range(B)], wc1, 2, cw1_ref, b1_ref, act_a)
    # conv2: act_a -> act_b rows [0, B*wc2), 32 ch
    conv_layer(act_a, [b * wc1 for b in range(B)], wc2, 2, cw2_ref, b2_ref, act_b)
    # pool1 folded into conv3's taps (stride 4): act_b -> act_a, 64 ch
    conv_layer(act_b, [b * wc2 for b in range(B)], wc3, 4, cw3_ref, b3_ref, act_a)
    # conv4: act_a -> act_b rows [0, B*wc4), 64 ch
    conv_layer(act_a, [b * wc3 for b in range(B)], wc4, 2, cw4_ref, b4_ref, act_b)

    # pool2 + NCHW flatten: PyTorch's (c, w) flatten order is absorbed into the
    # host-side row reorder of fc1's weight, so here we only lane-concatenate
    # each sample's wp2 pooled rows (= conv4 rows 0, 2, ...) into one 128-lane
    # row of the (M_PAD, flatten) fc1 input tile.
    c4 = cw4_ref.shape[1]
    fc1_in[...] = jnp.zeros_like(fc1_in)
    for b in range(B):
        for w in range(wp2):
            r = b * wc4 + 2 * w
            fc1_in[b:b + 1, w * c4:(w + 1) * c4] = act_b[r:r + 1, 0:c4]

    # Fully-connected head: one batched matmul per layer; wait on each weight
    # DMA only right before its matmul.
    cp1.wait()
    h = jnp.dot(fc1_in[...], wf1_v[...], preferred_element_type=f32)
    h = jnp.maximum(h + bf1_ref[...], 0.0)                         # (M_PAD, 1024)
    cp2.wait()
    h = jnp.dot(h, wf2_v[...], preferred_element_type=f32)
    h = jnp.maximum(h + bf2_ref[...], 0.0)                         # (M_PAD, 512)
    cp3.wait()
    out = jnp.dot(h, wf3_v[...], preferred_element_type=f32) + bf3_ref[...]
    o_ref[...] = out.astype(o_ref.dtype)                           # (M_PAD, N_PAD)


# ------------------------------ host wrappers --------------------------------

def _full_spec(shape):
    zeros = (0,) * len(shape)
    return pl.BlockSpec(shape, lambda i, _z=zeros: _z)


def prepare_params(p):
    """One-time host-side re-layout of the PyTorch-convention parameters."""
    def conv_cat(w):
        co, ci, kh, kw = w.shape
        # (Cout,Cin,KH,KW) -> (KW*Cin*KH, Cout), rows kw-major then (cin, kh),
        # matching the in-kernel lane-concat [tap0 | tap1 | tap2] of im2col.
        return jnp.transpose(w, (3, 1, 2, 0)).reshape(kw * ci * kh, co)

    c_out4 = p["w4"].shape[0]                   # 64
    flatten = p["wf1"].shape[0]                 # 128
    wp2 = flatten // c_out4                     # 2
    # PyTorch flatten order is (c, w); the kernel assembles (w, c) -> reorder.
    wf1_r = (p["wf1"].reshape(c_out4, wp2, -1)
             .transpose(1, 0, 2).reshape(flatten, -1))
    wf3_pad = jnp.pad(p["wf3"], ((0, 0), (0, N_PAD - p["wf3"].shape[1])))
    bf3_pad = jnp.pad(p["bf3"], (0, N_PAD - p["bf3"].shape[0]))
    return {
        "cw1": conv_cat(p["w1"]), "b1": p["b1"].reshape(1, -1),
        "cw2": conv_cat(p["w2"]), "b2": p["b2"].reshape(1, -1),
        "cw3": conv_cat(p["w3"]), "b3": p["b3"].reshape(1, -1),
        "cw4": conv_cat(p["w4"]), "b4": p["b4"].reshape(1, -1),
        "wf1": wf1_r,   "bf1": p["bf1"].reshape(1, -1),
        "wf2": p["wf2"], "bf2": p["bf2"].reshape(1, -1),
        "wf3": wf3_pad, "bf3": bf3_pad.reshape(1, -1),
    }


@jax.jit
def conv4_fc2_forward(x, prep):
    """x: (B, 1, 4, W) NCHW float32; prep: output of prepare_params()."""
    B, C, H, W = x.shape
    assert C == 1 and H == 4, (C, H)
    # Width-major re-layout of the tiny (4 KB) input.
    # TODO(synk): could be folded in-kernel as a (4,W)->(W,4) XLU transpose to
    # drop this one small host-side XLA op.
    x2d = jnp.swapaxes(x[:, 0, :, :], 1, 2).reshape(B * W, H)      # (B*W, 4)

    wc1, wc2, wp1, wc3, wc4, wp2 = _width_chain(W)
    flatten = prep["wf1"].shape[0]
    assert flatten == wp2 * prep["cw4"].shape[1], (flatten, wp2)
    m_pad = max(M_PAD, ((B + 7) // 8) * 8)
    rows_a = ((B * max(wc1, wc3) + 7) // 8) * 8       # conv1 / conv3 outputs
    rows_b = ((B * max(wc2, wc4) + 7) // 8) * 8       # conv2 / conv4 outputs
    ch_a = max(prep["cw1"].shape[1], prep["cw3"].shape[1])
    ch_b = max(prep["cw2"].shape[1], prep["cw4"].shape[1])

    vmem_args = (x2d,
                 prep["cw1"], prep["b1"], prep["cw2"], prep["b2"],
                 prep["cw3"], prep["b3"], prep["cw4"], prep["b4"],
                 prep["bf1"], prep["bf2"], prep["bf3"])
    any_args = (prep["wf1"], prep["wf2"], prep["wf3"])

    kernel = functools.partial(_conv4_fc2_kernel, B, W)

    out = pl.pallas_call(
        kernel,
        out_shape=jax.ShapeDtypeStruct((m_pad, N_PAD), jnp.float32),
        grid=(1,),   # single fused step; total VMEM footprint ~3 MB
        in_specs=[_full_spec(a.shape) for a in vmem_args]
                 + [pl.BlockSpec(memory_space=pl.ANY)] * len(any_args),
        out_specs=pl.BlockSpec((m_pad, N_PAD), lambda i: (0, 0)),
        scratch_shapes=[
            pltpu.VMEM((rows_a, ch_a), jnp.float32),      # ping activation buf
            pltpu.VMEM((rows_b, ch_b), jnp.float32),      # pong activation buf
            pltpu.VMEM((m_pad, flatten), jnp.float32),    # fc1 input tile
            pltpu.VMEM(prep["wf1"].shape, jnp.float32),   # fc1 weight (DMA dst)
            pltpu.VMEM(prep["wf2"].shape, jnp.float32),   # fc2 weight (DMA dst)
            pltpu.VMEM(prep["wf3"].shape, jnp.float32),   # fc3 weight (DMA dst)
            pltpu.SemaphoreType.DMA((3,)),
        ],
        compiler_params=pltpu.CompilerParams(
            dimension_semantics=("arbitrary",)),
    )(*vmem_args, *any_args)
    return out[:B, :N_CLASSES]


# ------------------------------- parameters ---------------------------------

def init_params(key, flatten_size):
    ks = jax.random.split(key, 14)

    def u(k, shape, fan_in):
        bound = 1.0 / np.sqrt(fan_in)
        return jax.random.uniform(k, shape, jnp.float32, -bound, bound)

    return {
        "w1": u(ks[0], (32, 1, 4, 3), 1 * 4 * 3),  "b1": u(ks[1], (32,), 1 * 4 * 3),
        "w2": u(ks[2], (32, 32, 1, 3), 32 * 3),    "b2": u(ks[3], (32,), 32 * 3),
        "w3": u(ks[4], (64, 32, 1, 3), 32 * 3),    "b3": u(ks[5], (64,), 32 * 3),
        "w4": u(ks[6], (64, 64, 1, 3), 64 * 3),    "b4": u(ks[7], (64,), 64 * 3),
        # FC weights stored (in, out) for direct matmul use.
        "wf1": u(ks[8],  (flatten_size, 1024), flatten_size), "bf1": u(ks[9],  (1024,), flatten_size),
        "wf2": u(ks[10], (1024, 512), 1024),                  "bf2": u(ks[11], (512,), 1024),
        "wf3": u(ks[12], (512, 2), 512),                      "bf3": u(ks[13], (2,), 512),
    }


# ------------------------------ pure-JAX reference ---------------------------

def reference_forward(x, p):
    hi = lax.Precision.HIGHEST

    def conv(x, w, b, stride):
        y = lax.conv_general_dilated(
            x, w, window_strides=stride, padding="VALID",
            dimension_numbers=("NCHW", "OIHW", "NCHW"), precision=hi)
        return jax.nn.relu(y + b[None, :, None, None])

    x = conv(x, p["w1"], p["b1"], (1, 2))
    x = conv(x, p["w2"], p["b2"], (1, 2))
    x = x[:, :, ::2, ::2]                    # MaxPool2d(1, 2): 1x1 window, stride 2
    x = conv(x, p["w3"], p["b3"], (1, 2))
    x = conv(x, p["w4"], p["b4"], (1, 2))
    x = x[:, :, ::2, ::2]
    x = x.reshape(x.shape[0], -1)
    x = jax.nn.relu(jnp.dot(x, p["wf1"], precision=hi) + p["bf1"])
    x = jax.nn.relu(jnp.dot(x, p["wf2"], precision=hi) + p["bf2"])
    return jnp.dot(x, p["wf3"], precision=hi) + p["bf3"]


# ----------------------------------- main ------------------------------------

if __name__ == "__main__":
    # Input (B=2, C=1, H=4, W=128):
    #   conv1 -> (2,32,1,63); conv2 -> (2,32,1,31); pool -> (2,32,1,16)
    #   conv3 -> (2,64,1,7);  conv4 -> (2,64,1,3);  pool -> (2,64,1,2)
    #   flatten_size = 64 * 1 * 2 = 128
    B, C, H, W = 2, 1, 4, 128
    flatten_size = 128

    key = jax.random.PRNGKey(0)
    kx, kp = jax.random.split(key)
    x = jax.random.normal(kx, (B, C, H, W), jnp.float32)
    params = init_params(kp, flatten_size)
    prep = prepare_params(params)

    out = conv4_fc2_forward(x, prep)
    out = jax.block_until_ready(out)
    assert out.shape == (B, N_CLASSES), out.shape
    assert bool(jnp.all(jnp.isfinite(out)))

    ref = reference_forward(x, params)
    err = float(jnp.max(jnp.abs(out - ref)))
    scale = float(jnp.max(jnp.abs(ref))) + 1e-6
    assert np.isfinite(err) and err <= 1e-3 + 1e-2 * scale, (err, scale)

    print("KERNEL_OK")
</pallas_src>

<mosaic_0001>
module attributes {stable_mosaic.version = 11 : i64} {
  func.func @_conv4_fc2_kernel(%arg0: i32, %arg1: memref<256x4xf32, #tpu.memory_space<vmem>>, %arg2: memref<12x32xf32, #tpu.memory_space<vmem>>, %arg3: memref<1x32xf32, #tpu.memory_space<vmem>>, %arg4: memref<96x32xf32, #tpu.memory_space<vmem>>, %arg5: memref<1x32xf32, #tpu.memory_space<vmem>>, %arg6: memref<96x64xf32, #tpu.memory_space<vmem>>, %arg7: memref<1x64xf32, #tpu.memory_space<vmem>>, %arg8: memref<192x64xf32, #tpu.memory_space<vmem>>, %arg9: memref<1x64xf32, #tpu.memory_space<vmem>>, %arg10: memref<1x1024xf32, #tpu.memory_space<vmem>>, %arg11: memref<1x512xf32, #tpu.memory_space<vmem>>, %arg12: memref<1x128xf32, #tpu.memory_space<vmem>>, %arg13: memref<128x1024xf32, #tpu.memory_space<any>>, %arg14: memref<1024x512xf32, #tpu.memory_space<any>>, %arg15: memref<512x128xf32, #tpu.memory_space<any>>, %arg16: memref<8x128xf32, #tpu.memory_space<vmem>>, %arg17: memref<128x64xf32, #tpu.memory_space<vmem>>, %arg18: memref<64x64xf32, #tpu.memory_space<vmem>>, %arg19: memref<8x128xf32, #tpu.memory_space<vmem>>, %arg20: memref<128x1024xf32, #tpu.memory_space<vmem>>, %arg21: memref<1024x512xf32, #tpu.memory_space<vmem>>, %arg22: memref<512x128xf32, #tpu.memory_space<vmem>>, %arg23: memref<3x!tpu.dma_semaphore, #tpu.memory_space<semaphore_mem>>) attributes {dimension_semantics = [#tpu.dimension_semantics<arbitrary>], iteration_bounds = array<i64: 1>, scalar_prefetch = 0 : i64, scratch_operands = 7 : i64, tpu.core_type = #tpu.core_type<tc>, window_params = [{pipeline_mode = #tpu.pipeline_mode<synchronous>, transform_indices = @transform_0, window_bounds = array<i64: 256, 4>}, {pipeline_mode = #tpu.pipeline_mode<synchronous>, transform_indices = @transform_1, window_bounds = array<i64: 12, 32>}, {pipeline_mode = #tpu.pipeline_mode<synchronous>, transform_indices = @transform_2, window_bounds = array<i64: 1, 32>}, {pipeline_mode = #tpu.pipeline_mode<synchronous>, transform_indices = @transform_3, window_bounds = array<i64: 96, 32>}, {pipeline_mode = #tpu.pipeline_mode<synchronous>, transform_indices = @transform_4, window_bounds = array<i64: 1, 32>}, {pipeline_mode = #tpu.pipeline_mode<synchronous>, transform_indices = @transform_5, window_bounds = array<i64: 96, 64>}, {pipeline_mode = #tpu.pipeline_mode<synchronous>, transform_indices = @transform_6, window_bounds = array<i64: 1, 64>}, {pipeline_mode = #tpu.pipeline_mode<synchronous>, transform_indices = @transform_7, window_bounds = array<i64: 192, 64>}, {pipeline_mode = #tpu.pipeline_mode<synchronous>, transform_indices = @transform_8, window_bounds = array<i64: 1, 64>}, {pipeline_mode = #tpu.pipeline_mode<synchronous>, transform_indices = @transform_9, window_bounds = array<i64: 1, 1024>}, {pipeline_mode = #tpu.pipeline_mode<synchronous>, transform_indices = @transform_10, window_bounds = array<i64: 1, 512>}, {pipeline_mode = #tpu.pipeline_mode<synchronous>, transform_indices = @transform_11, window_bounds = array<i64: 1, 128>}, {}, {}, {}, {pipeline_mode = #tpu.pipeline_mode<synchronous>, transform_indices = @transform_15, window_bounds = array<i64: 8, 128>}]} {
    %c0_i32 = arith.constant 0 : i32
    %0 = tpu.memref_slice %arg23[%c0_i32] : memref<3x!tpu.dma_semaphore, #tpu.memory_space<semaphore_mem>> -> memref<1x!tpu.dma_semaphore, #tpu.memory_space<semaphore_mem>>
    %1 = tpu.memref_squeeze %0 : memref<1x!tpu.dma_semaphore, #tpu.memory_space<semaphore_mem>> -> memref<!tpu.dma_semaphore, #tpu.memory_space<semaphore_mem>>
    tpu.enqueue_dma source(%arg13 : memref<128x1024xf32, #tpu.memory_space<any>>) target(%arg20 : memref<128x1024xf32, #tpu.memory_space<vmem>>) target_semaphore(%1 : memref<!tpu.dma_semaphore, #tpu.memory_space<semaphore_mem>>)
    %c1_i32 = arith.constant 1 : i32
    %2 = tpu.memref_slice %arg23[%c1_i32] : memref<3x!tpu.dma_semaphore, #tpu.memory_space<semaphore_mem>> -> memref<1x!tpu.dma_semaphore, #tpu.memory_space<semaphore_mem>>
    %3 = tpu.memref_squeeze %2 : memref<1x!tpu.dma_semaphore, #tpu.memory_space<semaphore_mem>> -> memref<!tpu.dma_semaphore, #tpu.memory_space<semaphore_mem>>
    tpu.enqueue_dma source(%arg14 : memref<1024x512xf32, #tpu.memory_space<any>>) target(%arg21 : memref<1024x512xf32, #tpu.memory_space<vmem>>) target_semaphore(%3 : memref<!tpu.dma_semaphore, #tpu.memory_space<semaphore_mem>>)
    %c2_i32 = arith.constant 2 : i32
    %4 = tpu.memref_slice %arg23[%c2_i32] : memref<3x!tpu.dma_semaphore, #tpu.memory_space<semaphore_mem>> -> memref<1x!tpu.dma_semaphore, #tpu.memory_space<semaphore_mem>>
    %5 = tpu.memref_squeeze %4 : memref<1x!tpu.dma_semaphore, #tpu.memory_space<semaphore_mem>> -> memref<!tpu.dma_semaphore, #tpu.memory_space<semaphore_mem>>
    tpu.enqueue_dma source(%arg15 : memref<512x128xf32, #tpu.memory_space<any>>) target(%arg22 : memref<512x128xf32, #tpu.memory_space<vmem>>) target_semaphore(%5 : memref<!tpu.dma_semaphore, #tpu.memory_space<semaphore_mem>>)
    %c0 = arith.constant 0 : index
    %c0_0 = arith.constant 0 : index
    %6 = tpu.strided_load %arg1[%c0, %c0_0] {strides = array<i32: 2, 1>} : memref<256x4xf32, #tpu.memory_space<vmem>>, vector<63x4xf32>
    %c1 = arith.constant 1 : index
    %c0_1 = arith.constant 0 : index
    %7 = tpu.strided_load %arg1[%c1, %c0_1] {strides = array<i32: 2, 1>} : memref<256x4xf32, #tpu.memory_space<vmem>>, vector<63x4xf32>
    %c2 = arith.constant 2 : index
    %c0_2 = arith.constant 0 : index
    %8 = tpu.strided_load %arg1[%c2, %c0_2] {strides = array<i32: 2, 1>} : memref<256x4xf32, #tpu.memory_space<vmem>>, vector<63x4xf32>
    %9 = tpu.concatenate %6, %7, %8 in 1 : vector<63x4xf32>, vector<63x4xf32>, vector<63x4xf32> -> vector<63x12xf32>
    %c128 = arith.constant 128 : index
    %c0_3 = arith.constant 0 : index
    %10 = tpu.strided_load %arg1[%c128, %c0_3] {strides = array<i32: 2, 1>} : memref<256x4xf32, #tpu.memory_space<vmem>>, vector<63x4xf32>
    %c129 = arith.constant 129 : index
    %c0_4 = arith.constant 0 : index
    %11 = tpu.strided_load %arg1[%c129, %c0_4] {strides = array<i32: 2, 1>} : memref<256x4xf32, #tpu.memory_space<vmem>>, vector<63x4xf32>
    %c130 = arith.constant 130 : index
    %c0_5 = arith.constant 0 : index
    %12 = tpu.strided_load %arg1[%c130, %c0_5] {strides = array<i32: 2, 1>} : memref<256x4xf32, #tpu.memory_space<vmem>>, vector<63x4xf32>
    %13 = tpu.concatenate %10, %11, %12 in 1 : vector<63x4xf32>, vector<63x4xf32>, vector<63x4xf32> -> vector<63x12xf32>
    %14 = tpu.concatenate %9, %13 in 0 : vector<63x12xf32>, vector<63x12xf32> -> vector<126x12xf32>
    %c0_6 = arith.constant 0 : index
    %c0_7 = arith.constant 0 : index
    %15 = vector.load %arg2[%c0_6, %c0_7] : memref<12x32xf32, #tpu.memory_space<vmem>>, vector<12x32xf32>
    %cst = arith.constant dense<0.000000e+00> : vector<126x32xf32>
    %16 = tpu.matmul %14, %15, %cst {dimension_numbers = #tpu.dot_dimension_numbers<[1], [0], [0], [1], [0, 0, 1, 1], [], []>} : vector<126x12xf32>, vector<12x32xf32>, vector<126x32xf32> -> vector<126x32xf32>
    %c0_8 = arith.constant 0 : index
    %c0_9 = arith.constant 0 : index
    %17 = vector.load %arg3[%c0_8, %c0_9] : memref<1x32xf32, #tpu.memory_space<vmem>>, vector<1x32xf32>
    %18 = vector.broadcast %17 : vector<1x32xf32> to vector<126x32xf32>
    %19 = arith.addf %16, %18 : vector<126x32xf32>
    %cst_10 = arith.constant 0.000000e+00 : f32
    %20 = vector.broadcast %cst_10 : f32 to vector<126x32xf32>
    %21 = arith.maximumf %19, %20 : vector<126x32xf32>
    %c0_11 = arith.constant 0 : index
    %c0_12 = arith.constant 0 : index
    %22 = vector.load %arg17[%c0_11, %c0_12] : memref<128x64xf32, #tpu.memory_space<vmem>>, vector<126x32xf32>
    tpu.vector_store %arg17[%c0_11, %c0_12], %21 {strides = array<i32>} : memref<128x64xf32, #tpu.memory_space<vmem>>, vector<126x32xf32>,
    %c0_13 = arith.constant 0 : index
    %c0_14 = arith.constant 0 : index
    %23 = tpu.strided_load %arg17[%c0_13, %c0_14] {strides = array<i32: 2, 1>} : memref<128x64xf32, #tpu.memory_space<vmem>>, vector<31x64xf32>
    %24 = vector.extract_strided_slice %23 {offsets = [0, 0], sizes = [31, 32], strides = [1, 1]} : vector<31x64xf32> to vector<31x32xf32>
    %c1_15 = arith.constant 1 : index
    %c0_16 = arith.constant 0 : index
    %25 = tpu.strided_load %arg17[%c1_15, %c0_16] {strides = array<i32: 2, 1>} : memref<128x64xf32, #tpu.memory_space<vmem>>, vector<31x64xf32>
    %26 = vector.extract_strided_slice %25 {offsets = [0, 0], sizes = [31, 32], strides = [1, 1]} : vector<31x64xf32> to vector<31x32xf32>
    %c2_17 = arith.constant 2 : index
    %c0_18 = arith.constant 0 : index
    %27 = tpu.strided_load %arg17[%c2_17, %c0_18] {strides = array<i32: 2, 1>} : memref<128x64xf32, #tpu.memory_space<vmem>>, vector<31x64xf32>
    %28 = vector.extract_strided_slice %27 {offsets = [0, 0], sizes = [31, 32], strides = [1, 1]} : vector<31x64xf32> to vector<31x32xf32>
    %29 = tpu.concatenate %24, %26, %28 in 1 : vector<31x32xf32>, vector<31x32xf32>, vector<31x32xf32> -> vector<31x96xf32>
    %c63 = arith.constant 63 : index
    %c0_19 = arith.constant 0 : index
    %30 = tpu.strided_load %arg17[%c63, %c0_19] {strides = array<i32: 2, 1>} : memref<128x64xf32, #tpu.memory_space<vmem>>, vector<31x64xf32>
    %31 = vector.extract_strided_slice %30 {offsets = [0, 0], sizes = [31, 32], strides = [1, 1]} : vector<31x64xf32> to vector<31x32xf32>
    %c64 = arith.constant 64 : index
    %c0_20 = arith.constant 0 : index
    %32 = tpu.strided_load %arg17[%c64, %c0_20] {strides = array<i32: 2, 1>} : memref<128x64xf32, #tpu.memory_space<vmem>>, vector<31x64xf32>
    %33 = vector.extract_strided_slice %32 {offsets = [0, 0], sizes = [31, 32], strides = [1, 1]} : vector<31x64xf32> to vector<31x32xf32>
    %c65 = arith.constant 65 : index
    %c0_21 = arith.constant 0 : index
    %34 = tpu.strided_load %arg17[%c65, %c0_21] {strides = array<i32: 2, 1>} : memref<128x64xf32, #tpu.memory_space<vmem>>, vector<31x64xf32>
    %35 = vector.extract_strided_slice %34 {offsets = [0, 0], sizes = [31, 32], strides = [1, 1]} : vector<31x64xf32> to vector<31x32xf32>
    %36 = tpu.concatenate %31, %33, %35 in 1 : vector<31x32xf32>, vector<31x32xf32>, vector<31x32xf32> -> vector<31x96xf32>
    %37 = tpu.concatenate %29, %36 in 0 : vector<31x96xf32>, vector<31x96xf32> -> vector<62x96xf32>
    %c0_22 = arith.constant 0 : index
    %c0_23 = arith.constant 0 : index
    %38 = vector.load %arg4[%c0_22, %c0_23] : memref<96x32xf32, #tpu.memory_space<vmem>>, vector<96x32xf32>
    %cst_24 = arith.constant dense<0.000000e+00> : vector<62x32xf32>
    %39 = tpu.matmul %37, %38, %cst_24 {dimension_numbers = #tpu.dot_dimension_numbers<[1], [0], [0], [1], [0, 0, 1, 1], [], []>} : vector<62x96xf32>, vector<96x32xf32>, vector<62x32xf32> -> vector<62x32xf32>
    %c0_25 = arith.constant 0 : index
    %c0_26 = arith.constant 0 : index
    %40 = vector.load %arg5[%c0_25, %c0_26] : memref<1x32xf32, #tpu.memory_space<vmem>>, vector<1x32xf32>
    %41 = vector.broadcast %40 : vector<1x32xf32> to vector<62x32xf32>
    %42 = arith.addf %39, %41 : vector<62x32xf32>
    %cst_27 = arith.constant 0.000000e+00 : f32
    %43 = vector.broadcast %cst_27 : f32 to vector<62x32xf32>
    %44 = arith.maximumf %42, %43 : vector<62x32xf32>
    %c0_28 = arith.constant 0 : index
    %c0_29 = arith.constant 0 : index
    %45 = vector.load %arg18[%c0_28, %c0_29] : memref<64x64xf32, #tpu.memory_space<vmem>>, vector<62x32xf32>
    tpu.vector_store %arg18[%c0_28, %c0_29], %44 {strides = array<i32>} : memref<64x64xf32, #tpu.memory_space<vmem>>, vector<62x32xf32>,
    %c0_30 = arith.constant 0 : index
    %c0_31 = arith.constant 0 : index
    %46 = tpu.strided_load %arg18[%c0_30, %c0_31] {strides = array<i32: 4, 1>} : memref<64x64xf32, #tpu.memory_space<vmem>>, vector<7x64xf32>
    %47 = vector.extract_strided_slice %46 {offsets = [0, 0], sizes = [7, 32], strides = [1, 1]} : vector<7x64xf32> to vector<7x32xf32>
    %c2_32 = arith.constant 2 : index
    %c0_33 = arith.constant 0 : index
    %48 = tpu.strided_load %arg18[%c2_32, %c0_33] {strides = array<i32: 4, 1>} : memref<64x64xf32, #tpu.memory_space<vmem>>, vector<7x64xf32>
    %49 = vector.extract_strided_slice %48 {offsets = [0, 0], sizes = [7, 32], strides = [1, 1]} : vector<7x64xf32> to vector<7x32xf32>
    %c4 = arith.constant 4 : index
    %c0_34 = arith.constant 0 : index
    %50 = tpu.strided_load %arg18[%c4, %c0_34] {strides = array<i32: 4, 1>} : memref<64x64xf32, #tpu.memory_space<vmem>>, vector<7x64xf32>
    %51 = vector.extract_strided_slice %50 {offsets = [0, 0], sizes = [7, 32], strides = [1, 1]} : vector<7x64xf32> to vector<7x32xf32>
    %52 = tpu.concatenate %47, %49, %51 in 1 : vector<7x32xf32>, vector<7x32xf32>, vector<7x32xf32> -> vector<7x96xf32>
    %c31 = arith.constant 31 : index
    %c0_35 = arith.constant 0 : index
    %53 = tpu.strided_load %arg18[%c31, %c0_35] {strides = array<i32: 4, 1>} : memref<64x64xf32, #tpu.memory_space<vmem>>, vector<7x64xf32>
    %54 = vector.extract_strided_slice %53 {offsets = [0, 0], sizes = [7, 32], strides = [1, 1]} : vector<7x64xf32> to vector<7x32xf32>
    %c33 = arith.constant 33 : index
    %c0_36 = arith.constant 0 : index
    %55 = tpu.strided_load %arg18[%c33, %c0_36] {strides = array<i32: 4, 1>} : memref<64x64xf32, #tpu.memory_space<vmem>>, vector<7x64xf32>
    %56 = vector.extract_strided_slice %55 {offsets = [0, 0], sizes = [7, 32], strides = [1, 1]} : vector<7x64xf32> to vector<7x32xf32>
    %c35 = arith.constant 35 : index
    %c0_37 = arith.constant 0 : index
    %57 = tpu.strided_load %arg18[%c35, %c0_37] {strides = array<i32: 4, 1>} : memref<64x64xf32, #tpu.memory_space<vmem>>, vector<7x64xf32>
    %58 = vector.extract_strided_slice %57 {offsets = [0, 0], sizes = [7, 32], strides = [1, 1]} : vector<7x64xf32> to vector<7x32xf32>
    %59 = tpu.concatenate %54, %56, %58 in 1 : vector<7x32xf32>, vector<7x32xf32>, vector<7x32xf32> -> vector<7x96xf32>
    %60 = tpu.concatenate %52, %59 in 0 : vector<7x96xf32>, vector<7x96xf32> -> vector<14x96xf32>
    %c0_38 = arith.constant 0 : index
    %c0_39 = arith.constant 0 : index
    %61 = vector.load %arg6[%c0_38, %c0_39] : memref<96x64xf32, #tpu.memory_space<vmem>>, vector<96x64xf32>
    %cst_40 = arith.constant dense<0.000000e+00> : vector<14x64xf32>
    %62 = tpu.matmul %60, %61, %cst_40 {dimension_numbers = #tpu.dot_dimension_numbers<[1], [0], [0], [1], [0, 0, 1, 1], [], []>} : vector<14x96xf32>, vector<96x64xf32>, vector<14x64xf32> -> vector<14x64xf32>
    %c0_41 = arith.constant 0 : index
    %c0_42 = arith.constant 0 : index
    %63 = vector.load %arg7[%c0_41, %c0_42] : memref<1x64xf32, #tpu.memory_space<vmem>>, vector<1x64xf32>
    %64 = vector.broadcast %63 : vector<1x64xf32> to vector<14x64xf32>
    %65 = arith.addf %62, %64 : vector<14x64xf32>
    %cst_43 = arith.constant 0.000000e+00 : f32
    %66 = vector.broadcast %cst_43 : f32 to vector<14x64xf32>
    %67 = arith.maximumf %65, %66 : vector<14x64xf32>
    %c0_44 = arith.constant 0 : index
    %c0_45 = arith.constant 0 : index
    %68 = vector.load %arg17[%c0_44, %c0_45] : memref<128x64xf32, #tpu.memory_space<vmem>>, vector<14x64xf32>
    tpu.vector_store %arg17[%c0_44, %c0_45], %67 {strides = array<i32>} : memref<128x64xf32, #tpu.memory_space<vmem>>, vector<14x64xf32>,
    %c0_46 = arith.constant 0 : index
    %c0_47 = arith.constant 0 : index
    %69 = tpu.strided_load %arg17[%c0_46, %c0_47] {strides = array<i32: 2, 1>} : memref<128x64xf32, #tpu.memory_space<vmem>>, vector<3x64xf32>
    %c1_48 = arith.constant 1 : index
    %c0_49 = arith.constant 0 : index
    %70 = tpu.strided_load %arg17[%c1_48, %c0_49] {strides = array<i32: 2, 1>} : memref<128x64xf32, #tpu.memory_space<vmem>>, vector<3x64xf32>
    %c2_50 = arith.constant 2 : index
    %c0_51 = arith.constant 0 : index
    %71 = tpu.strided_load %arg17[%c2_50, %c0_51] {strides = array<i32: 2, 1>} : memref<128x64xf32, #tpu.memory_space<vmem>>, vector<3x64xf32>
    %72 = tpu.concatenate %69, %70, %71 in 1 : vector<3x64xf32>, vector<3x64xf32>, vector<3x64xf32> -> vector<3x192xf32>
    %c7 = arith.constant 7 : index
    %c0_52 = arith.constant 0 : index
    %73 = tpu.strided_load %arg17[%c7, %c0_52] {strides = array<i32: 2, 1>} : memref<128x64xf32, #tpu.memory_space<vmem>>, vector<3x64xf32>
    %c8 = arith.constant 8 : index
    %c0_53 = arith.constant 0 : index
    %74 = tpu.strided_load %arg17[%c8, %c0_53] {strides = array<i32: 2, 1>} : memref<128x64xf32, #tpu.memory_space<vmem>>, vector<3x64xf32>
    %c9 = arith.constant 9 : index
    %c0_54 = arith.constant 0 : index
    %75 = tpu.strided_load %arg17[%c9, %c0_54] {strides = array<i32: 2, 1>} : memref<128x64xf32, #tpu.memory_space<vmem>>, vector<3x64xf32>
    %76 = tpu.concatenate %73, %74, %75 in 1 : vector<3x64xf32>, vector<3x64xf32>, vector<3x64xf32> -> vector<3x192xf32>
    %77 = tpu.concatenate %72, %76 in 0 : vector<3x192xf32>, vector<3x192xf32> -> vector<6x192xf32>
    %c0_55 = arith.constant 0 : index
    %c0_56 = arith.constant 0 : index
    %78 = vector.load %arg8[%c0_55, %c0_56] : memref<192x64xf32, #tpu.memory_space<vmem>>, vector<192x64xf32>
    %cst_57 = arith.constant dense<0.000000e+00> : vector<6x64xf32>
    %79 = tpu.matmul %77, %78, %cst_57 {dimension_numbers = #tpu.dot_dimension_numbers<[1], [0], [0], [1], [0, 0, 1, 1], [], []>} : vector<6x192xf32>, vector<192x64xf32>, vector<6x64xf32> -> vector<6x64xf32>
    %c0_58 = arith.constant 0 : index
    %c0_59 = arith.constant 0 : index
    %80 = vector.load %arg9[%c0_58, %c0_59] : memref<1x64xf32, #tpu.memory_space<vmem>>, vector<1x64xf32>
    %81 = vector.broadcast %80 : vector<1x64xf32> to vector<6x64xf32>
    %82 = arith.addf %79, %81 : vector<6x64xf32>
    %cst_60 = arith.constant 0.000000e+00 : f32
    %83 = vector.broadcast %cst_60 : f32 to vector<6x64xf32>
    %84 = arith.maximumf %82, %83 : vector<6x64xf32>
    %c0_61 = arith.constant 0 : index
    %c0_62 = arith.constant 0 : index
    %85 = vector.load %arg18[%c0_61, %c0_62] : memref<64x64xf32, #tpu.memory_space<vmem>>, vector<6x64xf32>
    tpu.vector_store %arg18[%c0_61, %c0_62], %84 {strides = array<i32>} : memref<64x64xf32, #tpu.memory_space<vmem>>, vector<6x64xf32>,
    %cst_63 = arith.constant 0.000000e+00 : f32
    %86 = vector.broadcast %cst_63 : f32 to vector<8x128xf32>
    %c0_64 = arith.constant 0 : index
    %c0_65 = arith.constant 0 : index
    %87 = vector.load %arg19[%c0_64, %c0_65] : memref<8x128xf32, #tpu.memory_space<vmem>>, vector<8x128xf32>
    tpu.vector_store %arg19[%c0_64, %c0_65], %86 {strides = array<i32>} : memref<8x128xf32, #tpu.memory_space<vmem>>, vector<8x128xf32>,
    %c0_66 = arith.constant 0 : index
    %c0_67 = arith.constant 0 : index
    %88 = vector.load %arg18[%c0_66, %c0_67] : memref<64x64xf32, #tpu.memory_space<vmem>>, vector<1x64xf32>
    %c0_68 = arith.constant 0 : index
    %c0_69 = arith.constant 0 : index
    %89 = vector.load %arg19[%c0_68, %c0_69] : memref<8x128xf32, #tpu.memory_space<vmem>>, vector<1x64xf32>
    tpu.vector_store %arg19[%c0_68, %c0_69], %88 {strides = array<i32>} : memref<8x128xf32, #tpu.memory_space<vmem>>, vector<1x64xf32>,
    %c2_70 = arith.constant 2 : index
    %c0_71 = arith.constant 0 : index
    %90 = vector.load %arg18[%c2_70, %c0_71] : memref<64x64xf32, #tpu.memory_space<vmem>>, vector<1x64xf32>
    %c0_72 = arith.constant 0 : index
    %c64_73 = arith.constant 64 : index
    %91 = vector.load %arg19[%c0_72, %c64_73] : memref<8x128xf32, #tpu.memory_space<vmem>>, vector<1x64xf32>
    tpu.vector_store %arg19[%c0_72, %c64_73], %90 {strides = array<i32>} : memref<8x128xf32, #tpu.memory_space<vmem>>, vector<1x64xf32>,
    %c3 = arith.constant 3 : index
    %c0_74 = arith.constant 0 : index
    %92 = vector.load %arg18[%c3, %c0_74] : memref<64x64xf32, #tpu.memory_space<vmem>>, vector<1x64xf32>
    %c1_75 = arith.constant 1 : index
    %c0_76 = arith.constant 0 : index
    %93 = vector.load %arg19[%c1_75, %c0_76] : memref<8x128xf32, #tpu.memory_space<vmem>>, vector<1x64xf32>
    tpu.vector_store %arg19[%c1_75, %c0_76], %92 {strides = array<i32>} : memref<8x128xf32, #tpu.memory_space<vmem>>, vector<1x64xf32>,
    %c5 = arith.constant 5 : index
    %c0_77 = arith.constant 0 : index
    %94 = vector.load %arg18[%c5, %c0_77] : memref<64x64xf32, #tpu.memory_space<vmem>>, vector<1x64xf32>
    %c1_78 = arith.constant 1 : index
    %c64_79 = arith.constant 64 : index
    %95 = vector.load %arg19[%c1_78, %c64_79] : memref<8x128xf32, #tpu.memory_space<vmem>>, vector<1x64xf32>
    tpu.vector_store %arg19[%c1_78, %c64_79], %94 {strides = array<i32>} : memref<8x128xf32, #tpu.memory_space<vmem>>, vector<1x64xf32>,
    %c0_i32_80 = arith.constant 0 : i32
    %96 = tpu.memref_slice %arg23[%c0_i32_80] : memref<3x!tpu.dma_semaphore, #tpu.memory_space<semaphore_mem>> -> memref<1x!tpu.dma_semaphore, #tpu.memory_space<semaphore_mem>>
    %97 = tpu.memref_squeeze %96 : memref<1x!tpu.dma_semaphore, #tpu.memory_space<semaphore_mem>> -> memref<!tpu.dma_semaphore, #tpu.memory_space<semaphore_mem>>
    tpu.wait_dma2 semaphore(%97 : memref<!tpu.dma_semaphore, #tpu.memory_space<semaphore_mem>>) src(%arg13 : memref<128x1024xf32, #tpu.memory_space<any>>) dst(%arg20 : memref<128x1024xf32, #tpu.memory_space<vmem>>)
    %c0_81 = arith.constant 0 : index
    %c0_82 = arith.constant 0 : index
    %98 = vector.load %arg19[%c0_81, %c0_82] : memref<8x128xf32, #tpu.memory_space<vmem>>, vector<8x128xf32>
    %c0_83 = arith.constant 0 : index
    %c0_84 = arith.constant 0 : index
    %99 = vector.load %arg20[%c0_83, %c0_84] : memref<128x1024xf32, #tpu.memory_space<vmem>>, vector<128x1024xf32>
    %cst_85 = arith.constant dense<0.000000e+00> : vector<8x1024xf32>
    %100 = tpu.matmul %98, %99, %cst_85 {dimension_numbers = #tpu.dot_dimension_numbers<[1], [0], [0], [1], [0, 0, 1, 1], [], []>} : vector<8x128xf32>, vector<128x1024xf32>, vector<8x1024xf32> -> vector<8x1024xf32>
    %c0_86 = arith.constant 0 : index
    %c0_87 = arith.constant 0 : index
    %101 = vector.load %arg10[%c0_86, %c0_87] : memref<1x1024xf32, #tpu.memory_space<vmem>>, vector<1x1024xf32>
    %102 = vector.broadcast %101 : vector<1x1024xf32> to vector<8x1024xf32>
    %103 = arith.addf %100, %102 : vector<8x1024xf32>
    %cst_88 = arith.constant 0.000000e+00 : f32
    %104 = vector.broadcast %cst_88 : f32 to vector<8x1024xf32>
    %105 = arith.maximumf %103, %104 : vector<8x1024xf32>
    %c1_i32_89 = arith.constant 1 : i32
    %106 = tpu.memref_slice %arg23[%c1_i32_89] : memref<3x!tpu.dma_semaphore, #tpu.memory_space<semaphore_mem>> -> memref<1x!tpu.dma_semaphore, #tpu.memory_space<semaphore_mem>>
    %107 = tpu.memref_squeeze %106 : memref<1x!tpu.dma_semaphore, #tpu.memory_space<semaphore_mem>> -> memref<!tpu.dma_semaphore, #tpu.memory_space<semaphore_mem>>
    tpu.wait_dma2 semaphore(%107 : memref<!tpu.dma_semaphore, #tpu.memory_space<semaphore_mem>>) src(%arg14 : memref<1024x512xf32, #tpu.memory_space<any>>) dst(%arg21 : memref<1024x512xf32, #tpu.memory_space<vmem>>)
    %c0_90 = arith.constant 0 : index
    %c0_91 = arith.constant 0 : index
    %108 = vector.load %arg21[%c0_90, %c0_91] : memref<1024x512xf32, #tpu.memory_space<vmem>>, vector<1024x512xf32>
    %cst_92 = arith.constant dense<0.000000e+00> : vector<8x512xf32>
    %109 = tpu.matmul %105, %108, %cst_92 {dimension_numbers = #tpu.dot_dimension_numbers<[1], [0], [0], [1], [0, 0, 1, 1], [], []>} : vector<8x1024xf32>, vector<1024x512xf32>, vector<8x512xf32> -> vector<8x512xf32>
    %c0_93 = arith.constant 0 : index
    %c0_94 = arith.constant 0 : index
    %110 = vector.load %arg11[%c0_93, %c0_94] : memref<1x512xf32, #tpu.memory_space<vmem>>, vector<1x512xf32>
    %111 = vector.broadcast %110 : vector<1x512xf32> to vector<8x512xf32>
    %112 = arith.addf %109, %111 : vector<8x512xf32>
    %cst_95 = arith.constant 0.000000e+00 : f32
    %113 = vector.broadcast %cst_95 : f32 to vector<8x512xf32>
    %114 = arith.maximumf %112, %113 : vector<8x512xf32>
    %c2_i32_96 = arith.constant 2 : i32
    %115 = tpu.memref_slice %arg23[%c2_i32_96] : memref<3x!tpu.dma_semaphore, #tpu.memory_space<semaphore_mem>> -> memref<1x!tpu.dma_semaphore, #tpu.memory_space<semaphore_mem>>
    %116 = tpu.memref_squeeze %115 : memref<1x!tpu.dma_semaphore, #tpu.memory_space<semaphore_mem>> -> memref<!tpu.dma_semaphore, #tpu.memory_space<semaphore_mem>>
    tpu.wait_dma2 semaphore(%116 : memref<!tpu.dma_semaphore, #tpu.memory_space<semaphore_mem>>) src(%arg15 : memref<512x128xf32, #tpu.memory_space<any>>) dst(%arg22 : memref<512x128xf32, #tpu.memory_space<vmem>>)
    %c0_97 = arith.constant 0 : index
    %c0_98 = arith.constant 0 : index
    %117 = vector.load %arg22[%c0_97, %c0_98] : memref<512x128xf32, #tpu.memory_space<vmem>>, vector<512x128xf32>
    %cst_99 = arith.constant dense<0.000000e+00> : vector<8x128xf32>
    %118 = tpu.matmul %114, %117, %cst_99 {dimension_numbers = #tpu.dot_dimension_numbers<[1], [0], [0], [1], [0, 0, 1, 1], [], []>} : vector<8x512xf32>, vector<512x128xf32>, vector<8x128xf32> -> vector<8x128xf32>
    %c0_100 = arith.constant 0 : index
    %c0_101 = arith.constant 0 : index
    %119 = vector.load %arg12[%c0_100, %c0_101] : memref<1x128xf32, #tpu.memory_space<vmem>>, vector<1x128xf32>
    %120 = vector.broadcast %119 : vector<1x128xf32> to vector<8x128xf32>
    %121 = arith.addf %118, %120 : vector<8x128xf32>
    %c0_102 = arith.constant 0 : index
    %c0_103 = arith.constant 0 : index
    %122 = vector.load %arg16[%c0_102, %c0_103] : memref<8x128xf32, #tpu.memory_space<vmem>>, vector<8x128xf32>
    tpu.vector_store %arg16[%c0_102, %c0_103], %121 {strides = array<i32>} : memref<8x128xf32, #tpu.memory_space<vmem>>, vector<8x128xf32>,
    return
  }
  func.func @transform_0(%arg0: i32) -> (i32, i32) {
    %c0_i32 = arith.constant 0 : i32
    %c0_i32_0 = arith.constant 0 : i32
    %c0_i32_1 = arith.constant 0 : i32
    return %c0_i32, %c0_i32_0 : i32, i32
  }
  func.func @transform_1(%arg0: i32) -> (i32, i32) {
    %c0_i32 = arith.constant 0 : i32
    %c0_i32_0 = arith.constant 0 : i32
    %c0_i32_1 = arith.constant 0 : i32
    return %c0_i32, %c0_i32_0 : i32, i32
  }
  func.func @transform_2(%arg0: i32) -> (i32, i32) {
    %c0_i32 = arith.constant 0 : i32
    %c0_i32_0 = arith.constant 0 : i32
    %c0_i32_1 = arith.constant 0 : i32
    return %c0_i32, %c0_i32_0 : i32, i32
  }
  func.func @transform_3(%arg0: i32) -> (i32, i32) {
    %c0_i32 = arith.constant 0 : i32
    %c0_i32_0 = arith.constant 0 : i32
    %c0_i32_1 = arith.constant 0 : i32
    return %c0_i32, %c0_i32_0 : i32, i32
  }
  func.func @transform_4(%arg0: i32) -> (i32, i32) {
    %c0_i32 = arith.constant 0 : i32
    %c0_i32_0 = arith.constant 0 : i32
    %c0_i32_1 = arith.constant 0 : i32
    return %c0_i32, %c0_i32_0 : i32, i32
  }
  func.func @transform_5(%arg0: i32) -> (i32, i32) {
    %c0_i32 = arith.constant 0 : i32
    %c0_i32_0 = arith.constant 0 : i32
    %c0_i32_1 = arith.constant 0 : i32
    return %c0_i32, %c0_i32_0 : i32, i32
  }
  func.func @transform_6(%arg0: i32) -> (i32, i32) {
    %c0_i32 = arith.constant 0 : i32
    %c0_i32_0 = arith.constant 0 : i32
    %c0_i32_1 = arith.constant 0 : i32
    return %c0_i32, %c0_i32_0 : i32, i32
  }
  func.func @transform_7(%arg0: i32) -> (i32, i32) {
    %c0_i32 = arith.constant 0 : i32
    %c0_i32_0 = arith.constant 0 : i32
    %c0_i32_1 = arith.constant 0 : i32
    return %c0_i32, %c0_i32_0 : i32, i32
  }
  func.func @transform_8(%arg0: i32) -> (i32, i32) {
    %c0_i32 = arith.constant 0 : i32
    %c0_i32_0 = arith.constant 0 : i32
    %c0_i32_1 = arith.constant 0 : i32
    return %c0_i32, %c0_i32_0 : i32, i32
  }
  func.func @transform_9(%arg0: i32) -> (i32, i32) {
    %c0_i32 = arith.constant 0 : i32
    %c0_i32_0 = arith.constant 0 : i32
    %c0_i32_1 = arith.constant 0 : i32
    return %c0_i32, %c0_i32_0 : i32, i32
  }
  func.func @transform_10(%arg0: i32) -> (i32, i32) {
    %c0_i32 = arith.constant 0 : i32
    %c0_i32_0 = arith.constant 0 : i32
    %c0_i32_1 = arith.constant 0 : i32
    return %c0_i32, %c0_i32_0 : i32, i32
  }
  func.func @transform_11(%arg0: i32) -> (i32, i32) {
    %c0_i32 = arith.constant 0 : i32
    %c0_i32_0 = arith.constant 0 : i32
    %c0_i32_1 = arith.constant 0 : i32
    return %c0_i32, %c0_i32_0 : i32, i32
  }
  func.func @transform_15(%arg0: i32) -> (i32, i32) {
    %c0_i32 = arith.constant 0 : i32
    %c0_i32_0 = arith.constant 0 : i32
    %c0_i32_1 = arith.constant 0 : i32
    return %c0_i32, %c0_i32_0 : i32, i32
  }
}

</mosaic_0001>

<llo_original>
// kernel: conv4_fc2_forward.1
$region0: #{conv4_fc2_forward.1}
  #allocation0 [shape = 'u32[]', space=smem, size = 0x4, offset = 0x4, fixed_abs, tag = 'smem constant byte address 0x4 - core index']
  #allocation1 [shape = 'u32[72,128]{1,0:T(1,128)}', space=vmem, size = 0x9000, scoped, tag = 'internal scratch']
  #allocation2 [shape = 'f32[128,64]{1,0:T(8,128)}', space=vmem, size = 0x10000, scoped, tag = 'scratch operand']
  #allocation3 [shape = 'f32[64,64]{1,0:T(8,128)}', space=vmem, size = 0x8000, scoped, tag = 'scratch operand']
  #allocation4 [shape = 'f32[8,128]{1,0:T(8,128)}', space=vmem, size = 0x1000, scoped, tag = 'scratch operand']
  #allocation5 [shape = 'f32[128,1024]{1,0:T(8,128)}', space=vmem, size = 0x80000, scoped, tag = 'scratch operand']
  #allocation6 [shape = 'f32[1024,512]{1,0:T(8,128)}', space=vmem, size = 0x200000, scoped, tag = 'scratch operand']
  #allocation7 [shape = 'f32[512,128]{1,0:T(8,128)}', space=vmem, size = 0x40000, scoped, tag = 'scratch operand']
  #allocation8 [shape = 's32[3]{0}', space=sflag, size = 0xc, scoped, tag = 'scratch operand']
  #allocation22 [shape = 's32[]', space=sflag, size = 0x4, offset = 0, fixed_abs, tag = 'sflag constant byte address 0x0 - dummy sync flag']
  #allocation23 [shape = 's32[]', space=sflag, size = 0x4, offset = 0, fixed_abs, tag = 'sflag constant byte address 0x0 - dummy sync flag']
  #allocation24 [shape = 'u32[]', space=smem, size = 0x4, offset = 0x44, fixed_abs, tag = 'smem constant byte address 0x44 - assertion arg 0']
  #allocation25 [shape = 'u32[]', space=smem, size = 0x4, offset = 0x48, fixed_abs, tag = 'smem constant byte address 0x48 - assertion arg 1']
  #allocation26 [shape = 's32[]', space=sflag, size = 0x4, offset = 0, fixed_abs, tag = 'sflag constant byte address 0x0 - dummy sync flag']
  #allocation27 [shape = 's32[]', space=sflag, size = 0x4, offset = 0, fixed_abs, tag = 'sflag constant byte address 0x0 - dummy sync flag']
  #allocation28 [shape = 's32[]', space=sflag, size = 0x4, offset = 0, fixed_abs, tag = 'sflag constant byte address 0x0 - dummy sync flag']
  #allocation29 [shape = 's32[]', space=sflag, size = 0x4, offset = 0, fixed_abs, tag = 'sflag constant byte address 0x0 - dummy sync flag']
  %s0 = inlined_call_operand.vmem [shape: f32[256,4], index: 0, kind: input, shape index: {}]
  %s1 = inlined_call_operand.hbm [shape: f32[12,32], index: 1, kind: input, shape index: {}]
  %s2 = inlined_call_operand.hbm [shape: f32[1,32], index: 2, kind: input, shape index: {}]
  %s3 = inlined_call_operand.vmem [shape: f32[96,32], index: 3, kind: input, shape index: {}]
  %s4 = inlined_call_operand.hbm [shape: f32[1,32], index: 4, kind: input, shape index: {}]
  %s5 = inlined_call_operand.vmem [shape: f32[96,64], index: 5, kind: input, shape index: {}]
  %s6 = inlined_call_operand.hbm [shape: f32[1,64], index: 6, kind: input, shape index: {}]
  %s7 = inlined_call_operand.vmem [shape: f32[192,64], index: 7, kind: input, shape index: {}]
  %s8 = inlined_call_operand.hbm [shape: f32[1,64], index: 8, kind: input, shape index: {}]
  %s9 = inlined_call_operand.hbm [shape: f32[1,1024], index: 9, kind: input, shape index: {}]
  %s10 = inlined_call_operand.hbm [shape: f32[1,512], index: 10, kind: input, shape index: {}]
  %s11 = inlined_call_operand.hbm [shape: f32[1,128], index: 11, kind: input, shape index: {}]
  %s12 = inlined_call_operand.hbm [shape: f32[128,1024], index: 12, kind: input, shape index: {}]
  %s13 = inlined_call_operand.hbm [shape: f32[1024,512], index: 13, kind: input, shape index: {}]
  %s14 = inlined_call_operand.hbm [shape: f32[512,128], index: 14, kind: input, shape index: {}]
  %s15 = inlined_call_operand.vmem [shape: f32[8,128], index: 15, kind: output, shape index: {}]
  %s16 = sld [smem:[#allocation0]]
  $region102: #{conv4_fc2_forward.1} parent=0
    _
  %s18 = ssub.s32 1, %s16
  %s19 = scalar_select 0, %s18, %s16
  $region1: #{conv4_fc2_forward.1} parent=0
    #allocation9 [shape = 'u8[8192]{0}', space=vmem, size = 0x2000, scoped, tag = 'input window, operand 1, single buffered']
    #allocation10 [shape = 's32[1]{0}', space=sflag, size = 0x4, scoped, tag = 'scoped memory for conv4_fc2_forward.1']
    #allocation11 [shape = 'u8[512]{0}', space=vmem, size = 0x400, scoped, tag = 'input window, operand 2, single buffered']
    #allocation12 [shape = 's32[1]{0}', space=sflag, size = 0x4, scoped, tag = 'scoped memory for conv4_fc2_forward.1']
    #allocation13 [shape = 'u8[512]{0}', space=vmem, size = 0x400, scoped, tag = 'input window, operand 4, single buffered']
    #allocation14 [shape = 'u8[512]{0}', space=vmem, size = 0x400, scoped, tag = 'input window, operand 6, single buffered']
    #allocation15 [shape = 's32[1]{0}', space=sflag, size = 0x4, scoped, tag = 'scoped memory for conv4_fc2_forward.1']
    #allocation16 [shape = 'u8[512]{0}', space=vmem, size = 0x400, scoped, tag = 'input window, operand 8, single buffered']
    #allocation17 [shape = 'u8[4096]{0}', space=vmem, size = 0x1000, scoped, tag = 'input window, operand 9, single buffered']
    #allocation18 [shape = 's32[1]{0}', space=sflag, size = 0x4, scoped, tag = 'scoped memory for conv4_fc2_forward.1']
    #allocation19 [shape = 'u8[2048]{0}', space=vmem, size = 0x800, scoped, tag = 'input window, operand 10, single buffered']
    #allocation20 [shape = 'u8[512]{0}', space=vmem, size = 0x400, scoped, tag = 'input window, operand 11, single buffered']
    #allocation21 [shape = 's32[1]{0}', space=sflag, size = 0x4, scoped, tag = 'scoped memory for conv4_fc2_forward.1']
    %20 = vsyncpa [#allocation10], 0
    %21 = vsyncpa [#allocation12], 0
    %22 = vsyncpa [#allocation15], 0
    %23 = vsyncpa [#allocation18], 0
    %24 = vsyncpa [#allocation21], 0
    // Predicated region
    $region2: #{conv4_fc2_forward.1} parent=1 // pred_check
      _
    $region3: #{conv4_fc2_forward.1} parent=1 // pred_check_branch
      %26 = sbr.rel (0) target = $region5
    $region4: #{conv4_fc2_forward.1} parent=1 // pred_region
      _
    $region5: #{conv4_fc2_forward.1} parent=1 // pred_fallthru
      _
    // Predicated region
    $region6: #{conv4_fc2_forward.1} parent=1 // pred_check
      _
    $region7: #{conv4_fc2_forward.1} parent=1 // pred_check_branch
      %28 = sbr.rel (0) target = $region9
    $region8: #{conv4_fc2_forward.1} parent=1 // pred_region
      %30 = vsyncadd [#allocation10], 0
      %s31 = sshll.u32 %s1, 4
      %s32 = int_to_ptr.hbm [resolvable:$true] %s31
      %s33 = sshll.u32 [#allocation9], 4
      %s34 = int_to_ptr.vmem [resolvable:$true] %s33
      %39 = dma.hbm_to_vmem [thread:$0]  %s32, 256, %s34, [#allocation10], 128, 128, 8
    $region9: #{conv4_fc2_forward.1} parent=1 // pred_fallthru
      _
    // Predicated region
    $region10: #{conv4_fc2_forward.1} parent=1 // pred_check
      _
    $region11: #{conv4_fc2_forward.1} parent=1 // pred_check_branch
      %41 = sbr.rel (0) target = $region13
    $region12: #{conv4_fc2_forward.1} parent=1 // pred_region
      %43 = vsyncadd [#allocation12], 0
      %s45 = sshll.u32 %s2, 4
      %s46 = int_to_ptr.hbm [resolvable:$true] %s45
      %s47 = sshll.u32 [#allocation11], 4
      %s48 = int_to_ptr.vmem [resolvable:$true] %s47
      %50 = dma.hbm_to_vmem [thread:$0]  %s46, 16, %s48, [#allocation12]
    $region13: #{conv4_fc2_forward.1} parent=1 // pred_fallthru
      _
    // Predicated region
    $region14: #{conv4_fc2_forward.1} parent=1 // pred_check
      _
    $region15: #{conv4_fc2_forward.1} parent=1 // pred_check_branch
      %52 = sbr.rel (0) target = $region17
    $region16: #{conv4_fc2_forward.1} parent=1 // pred_region
      _
    $region17: #{conv4_fc2_forward.1} parent=1 // pred_fallthru
      _
    // Predicated region
    $region18: #{conv4_fc2_forward.1} parent=1 // pred_check
      _
    $region19: #{conv4_fc2_forward.1} parent=1 // pred_check_branch
      %54 = sbr.rel (0) target = $region21
    $region20: #{conv4_fc2_forward.1} parent=1 // pred_region
      %56 = vsyncadd [#allocation12], 0
      %s58 = sshll.u32 %s4, 4
      %s59 = int_to_ptr.hbm [resolvable:$true] %s58
      %s60 = sshll.u32 [#allocation13], 4
      %s61 = int_to_ptr.vmem [resolvable:$true] %s60
      %63 = dma.hbm_to_vmem [thread:$0]  %s59, 16, %s61, [#allocation12]
    $region21: #{conv4_fc2_forward.1} parent=1 // pred_fallthru
      _
    // Predicated region
    $region22: #{conv4_fc2_forward.1} parent=1 // pred_check
      _
    $region23: #{conv4_fc2_forward.1} parent=1 // pred_check_branch
      %65 = sbr.rel (0) target = $region25
    $region24: #{conv4_fc2_forward.1} parent=1 // pred_region
      _
    $region25: #{conv4_fc2_forward.1} parent=1 // pred_fallthru
      _
    // Predicated region
    $region26: #{conv4_fc2_forward.1} parent=1 // pred_check
      _
    $region27: #{conv4_fc2_forward.1} parent=1 // pred_check_branch
      %67 = sbr.rel (0) target = $region29
    $region28: #{conv4_fc2_forward.1} parent=1 // pred_region
      %69 = vsyncadd [#allocation15], 0
      %s71 = sshll.u32 %s6, 4
      %s72 = int_to_ptr.hbm [resolvable:$true] %s71
      %s73 = sshll.u32 [#allocation14], 4
      %s74 = int_to_ptr.vmem [resolvable:$true] %s73
      %76 = dma.hbm_to_vmem [thread:$0]  %s72, 16, %s74, [#allocation15]
    $region29: #{conv4_fc2_forward.1} parent=1 // pred_fallthru
      _
    // Predicated region
    $region30: #{conv4_fc2_forward.1} parent=1 // pred_check
      _
    $region31: #{conv4_fc2_forward.1} parent=1 // pred_check_branch
      %78 = sbr.rel (0) target = $region33
    $region32: #{conv4_fc2_forward.1} parent=1 // pred_region
      _
    $region33: #{conv4_fc2_forward.1} parent=1 // pred_fallthru
      _
    // Predicated region
    $region34: #{conv4_fc2_forward.1} parent=1 // pred_check
      _
    $region35: #{conv4_fc2_forward.1} parent=1 // pred_check_branch
      %80 = sbr.rel (0) target = $region37
    $region36: #{conv4_fc2_forward.1} parent=1 // pred_region
      %82 = vsyncadd [#allocation15], 0
      %s84 = sshll.u32 %s8, 4
      %s85 = int_to_ptr.hbm [resolvable:$true] %s84
      %s86 = sshll.u32 [#allocation16], 4
      %s87 = int_to_ptr.vmem [resolvable:$true] %s86
      %89 = dma.hbm_to_vmem [thread:$0]  %s85, 16, %s87, [#allocation15]
    $region37: #{conv4_fc2_forward.1} parent=1 // pred_fallthru
      _
    // Predicated region
    $region38: #{conv4_fc2_forward.1} parent=1 // pred_check
      _
    $region39: #{conv4_fc2_forward.1} parent=1 // pred_check_branch
      %91 = sbr.rel (0) target = $region41
    $region40: #{conv4_fc2_forward.1} parent=1 // pred_region
      %93 = vsyncadd [#allocation18], 0
      %s95 = sshll.u32 %s9, 4
      %s96 = int_to_ptr.hbm [resolvable:$true] %s95
      %s97 = sshll.u32 [#allocation17], 4
      %s98 = int_to_ptr.vmem [resolvable:$true] %s97
      %100 = dma.hbm_to_vmem [thread:$0]  %s96, 128, %s98, [#allocation18]
    $region41: #{conv4_fc2_forward.1} parent=1 // pred_fallthru
      _
    // Predicated region
    $region42: #{conv4_fc2_forward.1} parent=1 // pred_check
      _
    $region43: #{conv4_fc2_forward.1} parent=1 // pred_check_branch
      %102 = sbr.rel (0) target = $region45
    $region44: #{conv4_fc2_forward.1} parent=1 // pred_region
      %104 = vsyncadd [#allocation18], 0
      %s106 = sshll.u32 %s10, 4
      %s107 = int_to_ptr.hbm [resolvable:$true] %s106
      %s108 = sshll.u32 [#allocation19], 4
      %s109 = int_to_ptr.vmem [resolvable:$true] %s108
      %111 = dma.hbm_to_vmem [thread:$0]  %s107, 64, %s109, [#allocation18]
    $region45: #{conv4_fc2_forward.1} parent=1 // pred_fallthru
      _
    // Predicated region
    $region46: #{conv4_fc2_forward.1} parent=1 // pred_check
      _
    $region47: #{conv4_fc2_forward.1} parent=1 // pred_check_branch
      %113 = sbr.rel (0) target = $region49
    $region48: #{conv4_fc2_forward.1} parent=1 // pred_region
      %115 = vsyncadd [#allocation21], 0
      %s117 = sshll.u32 %s11, 4
      %s118 = int_to_ptr.hbm [resolvable:$true] %s117
      %s119 = sshll.u32 [#allocation20], 4
      %s120 = int_to_ptr.vmem [resolvable:$true] %s119
      %122 = dma.hbm_to_vmem [thread:$0]  %s118, 16, %s120, [#allocation21]
    $region49: #{conv4_fc2_forward.1} parent=1 // pred_fallthru
      _
    // Predicated region
    $region50: #{conv4_fc2_forward.1} parent=1 // pred_check
      _
    $region51: #{conv4_fc2_forward.1} parent=1 // pred_check_branch
      %124 = sbr.rel (0) target = $region53
    $region52: #{conv4_fc2_forward.1} parent=1 // pred_region
      %126 = dma.done [#allocation10], 256
    $region53: #{conv4_fc2_forward.1} parent=1 // pred_fallthru
      _
    // Predicated region
    $region54: #{conv4_fc2_forward.1} parent=1 // pred_check
      _
    $region55: #{conv4_fc2_forward.1} parent=1 // pred_check_branch
      %128 = sbr.rel (0) target = $region57
    $region56: #{conv4_fc2_forward.1} parent=1 // pred_region
      %130 = dma.done [#allocation12], 16
    $region57: #{conv4_fc2_forward.1} parent=1 // pred_fallthru
      _
    // Predicated region
    $region58: #{conv4_fc2_forward.1} parent=1 // pred_check
      _
    $region59: #{conv4_fc2_forward.1} parent=1 // pred_check_branch
      %132 = sbr.rel (0) target = $region61
    $region60: #{conv4_fc2_forward.1} parent=1 // pred_region
      %134 = dma.done [#allocation12], 16
    $region61: #{conv4_fc2_forward.1} parent=1 // pred_fallthru
      _
    // Predicated region
    $region62: #{conv4_fc2_forward.1} parent=1 // pred_check
      _
    $region63: #{conv4_fc2_forward.1} parent=1 // pred_check_branch
      %136 = sbr.rel (0) target = $region65
    $region64: #{conv4_fc2_forward.1} parent=1 // pred_region
      %138 = dma.done [#allocation15], 16
    $region65: #{conv4_fc2_forward.1} parent=1 // pred_fallthru
      _
    // Predicated region
    $region66: #{conv4_fc2_forward.1} parent=1 // pred_check
      _
    $region67: #{conv4_fc2_forward.1} parent=1 // pred_check_branch
      %140 = sbr.rel (0) target = $region69
    $region68: #{conv4_fc2_forward.1} parent=1 // pred_region
      %142 = dma.done [#allocation15], 16
    $region69: #{conv4_fc2_forward.1} parent=1 // pred_fallthru
      _
    // Predicated region
    $region70: #{conv4_fc2_forward.1} parent=1 // pred_check
      _
    $region71: #{conv4_fc2_forward.1} parent=1 // pred_check_branch
      %144 = sbr.rel (0) target = $region73
    $region72: #{conv4_fc2_forward.1} parent=1 // pred_region
      %146 = dma.done [#allocation18], 128
    $region73: #{conv4_fc2_forward.1} parent=1 // pred_fallthru
      _
    // Predicated region
    $region74: #{conv4_fc2_forward.1} parent=1 // pred_check
      _
    $region75: #{conv4_fc2_forward.1} parent=1 // pred_check_branch
      %148 = sbr.rel (0) target = $region77
    $region76: #{conv4_fc2_forward.1} parent=1 // pred_region
      %150 = dma.done [#allocation18], 64
    $region77: #{conv4_fc2_forward.1} parent=1 // pred_fallthru
      _
    // Predicated region
    $region78: #{conv4_fc2_forward.1} parent=1 // pred_check
      _
    $region79: #{conv4_fc2_forward.1} parent=1 // pred_check_branch
      %152 = sbr.rel (0) target = $region81
    $region80: #{conv4_fc2_forward.1} parent=1 // pred_region
      %154 = dma.done [#allocation21], 16
    $region81: #{conv4_fc2_forward.1} parent=1 // pred_fallthru
      _
    // Predicated region
    $region82: #{conv4_fc2_forward.1} parent=1 // pred_check
      _
    $region83: #{conv4_fc2_forward.1} parent=1 // pred_check_branch
      %156 = sbr.rel target = $region85
    $region84: #{conv4_fc2_forward.1} parent=1 // pred_region
      %157 = sst [smem:[#allocation24]] [#allocation23]
      %158 = sst [smem:[#allocation25]] [#allocation22]
    $region85: #{conv4_fc2_forward.1} parent=1 // pred_fallthru
      _
    %160 = shalt.err (0)
    %s162 = sshll.u32 %s12, 4
    %s163 = int_to_ptr.hbm [resolvable:$true] %s162
    %s164 = sshll.u32 [#allocation5], 4
    %s165 = int_to_ptr.vmem [resolvable:$true] %s164
    %167 = dma.hbm_to_vmem [thread:$0]  %s163, 16384, %s165, [#allocation8]
    %s168 = scalar_lea.sflag [#allocation8], 1
    // Predicated region
    $region86: #{conv4_fc2_forward.1} parent=1 // pred_check
      _
    $region87: #{conv4_fc2_forward.1} parent=1 // pred_check_branch
      %170 = sbr.rel target = $region89
    $region88: #{conv4_fc2_forward.1} parent=1 // pred_region
      %171 = sst [smem:[#allocation24]] [#allocation27]
      %172 = sst [smem:[#allocation25]] [#allocation26]
    $region89: #{conv4_fc2_forward.1} parent=1 // pred_fallthru
      _
    %174 = shalt.err (0)
    %s176 = sshll.u32 %s13, 4
    %s177 = int_to_ptr.hbm [resolvable:$true] %s176
    %s178 = sshll.u32 [#allocation6], 4
    %s179 = int_to_ptr.vmem [resolvable:$true] %s178
    %181 = dma.hbm_to_vmem [thread:$0]  %s177, 65536, %s179, %s168
    %s182 = scalar_lea.sflag [#allocation8], 2
    // Predicated region
    $region90: #{conv4_fc2_forward.1} parent=1 // pred_check
      _
    $region91: #{conv4_fc2_forward.1} parent=1 // pred_check_branch
      %184 = sbr.rel target = $region93
    $region92: #{conv4_fc2_forward.1} parent=1 // pred_region
      %185 = sst [smem:[#allocation24]] [#allocation29]
      %186 = sst [smem:[#allocation25]] [#allocation28]
    $region93: #{conv4_fc2_forward.1} parent=1 // pred_fallthru
      _
    %188 = shalt.err (0)
    %s190 = sshll.u32 %s14, 4
    %s191 = int_to_ptr.hbm [resolvable:$true] %s190
    %s192 = sshll.u32 [#allocation7], 4
    %s193 = int_to_ptr.vmem [resolvable:$true] %s192
    %195 = dma.hbm_to_vmem [thread:$0]  %s191, 8192, %s193, %s182
    %v196 = vld [vmem:[%s0] ss:$2 sm:$0xff]
    %s197 = scalar_lea.vmem %s0, 16
    %v198 = vld [vmem:[%s197] ss:$2 sm:$0xff]
    %s199 = scalar_lea.vmem %s0, 32
    %v200 = vld [vmem:[%s199] ss:$2 sm:$0xff]
    %s201 = scalar_lea.vmem %s0, 48
    %v202 = vld [vmem:[%s201] ss:$2 sm:$0xff]
    %s203 = scalar_lea.vmem %s0, 64
    %v204 = vld [vmem:[%s203] ss:$2 sm:$0xff]
    %s205 = scalar_lea.vmem %s0, 80
    %v206 = vld [vmem:[%s205] ss:$2 sm:$0xff]
    %s207 = scalar_lea.vmem %s0, 96
    %v208 = vld [vmem:[%s207] ss:$2 sm:$0xff]
    %s209 = scalar_lea.vmem %s0, 112
    %v210 = vld [vmem:[%s209] ss:$2 sm:$0x7f]
    %s211 = scalar_lea.vmem %s0, 1
    %v212 = vld [vmem:[%s211] ss:$2 sm:$0xff]
    %s213 = scalar_lea.vmem %s0, 17
    %v214 = vld [vmem:[%s213] ss:$2 sm:$0xff]
    %s215 = scalar_lea.vmem %s0, 33
    %v216 = vld [vmem:[%s215] ss:$2 sm:$0xff]
    %s217 = scalar_lea.vmem %s0, 49
    %v218 = vld [vmem:[%s217] ss:$2 sm:$0xff]
    %s219 = scalar_lea.vmem %s0, 65
    %v220 = vld [vmem:[%s219] ss:$2 sm:$0xff]
    %s221 = scalar_lea.vmem %s0, 81
    %v222 = vld [vmem:[%s221] ss:$2 sm:$0xff]
    %s223 = scalar_lea.vmem %s0, 97
    %v224 = vld [vmem:[%s223] ss:$2 sm:$0xff]
    %s225 = scalar_lea.vmem %s0, 113
    %v226 = vld [vmem:[%s225] ss:$2 sm:$0x7f]
    %s227 = scalar_lea.vmem %s0, 2
    %v228 = vld [vmem:[%s227] ss:$2 sm:$0xff]
    %s229 = scalar_lea.vmem %s0, 18
    %v230 = vld [vmem:[%s229] ss:$2 sm:$0xff]
    %s231 = scalar_lea.vmem %s0, 34
    %v232 = vld [vmem:[%s231] ss:$2 sm:$0xff]
    %s233 = scalar_lea.vmem %s0, 50
    %v234 = vld [vmem:[%s233] ss:$2 sm:$0xff]
    %s235 = scalar_lea.vmem %s0, 66
    %v236 = vld [vmem:[%s235] ss:$2 sm:$0xff]
    %s237 = scalar_lea.vmem %s0, 82
    %v238 = vld [vmem:[%s237] ss:$2 sm:$0xff]
    %s239 = scalar_lea.vmem %s0, 98
    %v240 = vld [vmem:[%s239] ss:$2 sm:$0xff]
    %s241 = scalar_lea.vmem %s0, 114
    %v242 = vld [vmem:[%s241] ss:$2 sm:$0x7f]
    %251 = vrot.lane.b32.xlu0 %v212, 4
    %v252 = vpop.permute.xlu0 %251
    %253 = vrot.lane.b32.xlu0 %v214, 4
    %v254 = vpop.permute.xlu0 %253
    %255 = vrot.lane.b32.xlu0 %v216, 4
    %v256 = vpop.permute.xlu0 %255
    %257 = vrot.lane.b32.xlu0 %v218, 4
    %v258 = vpop.permute.xlu0 %257
    %259 = vrot.lane.b32.xlu0 %v220, 4
    %v260 = vpop.permute.xlu0 %259
    %261 = vrot.lane.b32.xlu0 %v222, 4
    %v262 = vpop.permute.xlu0 %261
    %263 = vrot.lane.b32.xlu0 %v224, 4
    %v264 = vpop.permute.xlu0 %263
    %265 = vrot.lane.b32.xlu0 %v226, 4
    %v266 = vpop.permute.xlu0 %265
    %283 = vrot.lane.b32.xlu0 %v228, 8
    %v284 = vpop.permute.xlu0 %283
    %285 = vrot.lane.b32.xlu0 %v230, 8
    %v286 = vpop.permute.xlu0 %285
    %287 = vrot.lane.b32.xlu0 %v232, 8
    %v288 = vpop.permute.xlu0 %287
    %289 = vrot.lane.b32.xlu0 %v234, 8
    %v290 = vpop.permute.xlu0 %289
    %291 = vrot.lane.b32.xlu0 %v236, 8
    %v292 = vpop.permute.xlu0 %291
    %293 = vrot.lane.b32.xlu0 %v238, 8
    %v294 = vpop.permute.xlu0 %293
    %295 = vrot.lane.b32.xlu0 %v240, 8
    %v296 = vpop.permute.xlu0 %295
    %297 = vrot.lane.b32.xlu0 %v242, 8
    %v298 = vpop.permute.xlu0 %297
    %vm307 = vcmask 31744
    %v308 = vsel %vm307, %v196, %v252
    %v309 = vsel %vm307, %v198, %v254
    %v310 = vsel %vm307, %v200, %v256
    %v311 = vsel %vm307, %v202, %v258
    %v312 = vsel %vm307, %v204, %v260
    %v313 = vsel %vm307, %v206, %v262
    %v314 = vsel %vm307, %v208, %v264
    %v315 = vsel %vm307, %v210, %v266
    %vm316 = vcmask 64512
    %v317 = vsel %vm316, %v308, %v284
    %v318 = vsel %vm316, %v309, %v286
    %v319 = vsel %vm316, %v310, %v288
    %v320 = vsel %vm316, %v311, %v290
    %v321 = vsel %vm316, %v312, %v292
    %v322 = vsel %vm316, %v313, %v294
    %v323 = vsel %vm316, %v314, %v296
    %v324 = vsel %vm316, %v315, %v298
    %s325 = scalar_lea.vmem %s0, 128
    %v326 = vld [vmem:[%s325] ss:$2 sm:$0xff]
    %s327 = scalar_lea.vmem %s0, 144
    %v328 = vld [vmem:[%s327] ss:$2 sm:$0xff]
    %s329 = scalar_lea.vmem %s0, 160
    %v330 = vld [vmem:[%s329] ss:$2 sm:$0xff]
    %s331 = scalar_lea.vmem %s0, 176
    %v332 = vld [vmem:[%s331] ss:$2 sm:$0xff]
    %s333 = scalar_lea.vmem %s0, 192
    %v334 = vld [vmem:[%s333] ss:$2 sm:$0xff]
    %s335 = scalar_lea.vmem %s0, 208
    %v336 = vld [vmem:[%s335] ss:$2 sm:$0xff]
    %s337 = scalar_lea.vmem %s0, 224
    %v338 = vld [vmem:[%s337] ss:$2 sm:$0xff]
    %s339 = scalar_lea.vmem %s0, 240
    %v340 = vld [vmem:[%s339] ss:$2 sm:$0x7f]
    %s341 = scalar_lea.vmem %s0, 129
    %v342 = vld [vmem:[%s341] ss:$2 sm:$0xff]
    %s343 = scalar_lea.vmem %s0, 145
    %v344 = vld [vmem:[%s343] ss:$2 sm:$0xff]
    %s345 = scalar_lea.vmem %s0, 161
    %v346 = vld [vmem:[%s345] ss:$2 sm:$0xff]
    %s347 = scalar_lea.vmem %s0, 177
    %v348 = vld [vmem:[%s347] ss:$2 sm:$0xff]
    %s349 = scalar_lea.vmem %s0, 193
    %v350 = vld [vmem:[%s349] ss:$2 sm:$0xff]
    %s351 = scalar_lea.vmem %s0, 209
    %v352 = vld [vmem:[%s351] ss:$2 sm:$0xff]
    %s353 = scalar_lea.vmem %s0, 225
    %v354 = vld [vmem:[%s353] ss:$2 sm:$0xff]
    %s355 = scalar_lea.vmem %s0, 241
    %v356 = vld [vmem:[%s355] ss:$2 sm:$0x7f]
    %s357 = scalar_lea.vmem %s0, 130
    %v358 = vld [vmem:[%s357] ss:$2 sm:$0xff]
    %s359 = scalar_lea.vmem %s0, 146
    %v360 = vld [vmem:[%s359] ss:$2 sm:$0xff]
    %s361 = scalar_lea.vmem %s0, 162
    %v362 = vld [vmem:[%s361] ss:$2 sm:$0xff]
    %s363 = scalar_lea.vmem %s0, 178
    %v364 = vld [vmem:[%s363] ss:$2 sm:$0xff]
    %s365 = scalar_lea.vmem %s0, 194
    %v366 = vld [vmem:[%s365] ss:$2 sm:$0xff]
    %s367 = scalar_lea.vmem %s0, 210
    %v368 = vld [vmem:[%s367] ss:$2 sm:$0xff]
    %s369 = scalar_lea.vmem %s0, 226
    %v370 = vld [vmem:[%s369] ss:$2 sm:$0xff]
    %s371 = scalar_lea.vmem %s0, 242
    %v372 = vld [vmem:[%s371] ss:$2 sm:$0x7f]
    %381 = vrot.lane.b32.xlu0 %v342, 4
    %v382 = vpop.permute.xlu0 %381
    %383 = vrot.lane.b32.xlu0 %v344, 4
    %v384 = vpop.permute.xlu0 %383
    %385 = vrot.lane.b32.xlu0 %v346, 4
    %v386 = vpop.permute.xlu0 %385
    %387 = vrot.lane.b32.xlu0 %v348, 4
    %v388 = vpop.permute.xlu0 %387
    %389 = vrot.lane.b32.xlu0 %v350, 4
    %v390 = vpop.permute.xlu0 %389
    %391 = vrot.lane.b32.xlu0 %v352, 4
    %v392 = vpop.permute.xlu0 %391
    %393 = vrot.lane.b32.xlu0 %v354, 4
    %v394 = vpop.permute.xlu0 %393
    %395 = vrot.lane.b32.xlu0 %v356, 4
    %v396 = vpop.permute.xlu0 %395
    %413 = vrot.lane.b32.xlu0 %v358, 8
    %v414 = vpop.permute.xlu0 %413
    %415 = vrot.lane.b32.xlu0 %v360, 8
    %v416 = vpop.permute.xlu0 %415
    %417 = vrot.lane.b32.xlu0 %v362, 8
    %v418 = vpop.permute.xlu0 %417
    %419 = vrot.lane.b32.xlu0 %v364, 8
    %v420 = vpop.permute.xlu0 %419
    %421 = vrot.lane.b32.xlu0 %v366, 8
    %v422 = vpop.permute.xlu0 %421
    %423 = vrot.lane.b32.xlu0 %v368, 8
    %v424 = vpop.permute.xlu0 %423
    %425 = vrot.lane.b32.xlu0 %v370, 8
    %v426 = vpop.permute.xlu0 %425
    %427 = vrot.lane.b32.xlu0 %v372, 8
    %v428 = vpop.permute.xlu0 %427
    %v437 = vsel %vm307, %v326, %v382
    %v438 = vsel %vm307, %v328, %v384
    %v439 = vsel %vm307, %v330, %v386
    %v440 = vsel %vm307, %v332, %v388
    %v441 = vsel %vm307, %v334, %v390
    %v442 = vsel %vm307, %v336, %v392
    %v443 = vsel %vm307, %v338, %v394
    %v444 = vsel %vm307, %v340, %v396
    %v445 = vsel %vm316, %v437, %v414
    %v446 = vsel %vm316, %v438, %v416
    %v447 = vsel %vm316, %v439, %v418
    %v448 = vsel %vm316, %v440, %v420
    %v449 = vsel %vm316, %v441, %v422
    %v450 = vsel %vm316, %v442, %v424
    %v451 = vsel %vm316, %v443, %v426
    %v452 = vsel %vm316, %v444, %v428
    %vm461 = vcmask 1046528
    %v462 = vrot.slane %v445, 1
    %v463 = vrot.slane %v446, 1
    %v464 = vsel %vm461, %v462, %v463
    %v465 = vrot.slane %v447, 1
    %v466 = vsel %vm461, %v463, %v465
    %v467 = vrot.slane %v448, 1
    %v468 = vsel %vm461, %v465, %v467
    %v469 = vrot.slane %v449, 1
    %v470 = vsel %vm461, %v467, %v469
    %v471 = vrot.slane %v450, 1
    %v472 = vsel %vm461, %v469, %v471
    %v473 = vrot.slane %v451, 1
    %v474 = vsel %vm461, %v471, %v473
    %v475 = vrot.slane %v452, 1
    %v476 = vsel %vm461, %v473, %v475
    %v478 = vsel %vm461, %v324, %v462
    %v479 = vld [vmem:[#allocation9] sm:$0xff]
    %v480 = vld [vmem:[#allocation9 + $0x8] sm:$0xf]
    %v481 = vld [vmem:[#allocation11] sm:$0x1]
    %v483 = vperm.slane %v481, 0
    %vm485 = vcmask 97280
    %v487 = vsel %vm485, %v317, 0
    %v490 = vsel %vm485, %v318, 0
    %v493 = vsel %vm485, %v319, 0
    %v496 = vsel %vm485, %v320, 0
    %v499 = vsel %vm485, %v321, 0
    %v502 = vsel %vm485, %v322, 0
    %v505 = vsel %vm485, %v323, 0
    %v508 = vsel %vm485, %v478, 0
    %v510 = vsel %vm485, %v464, 0
    %v512 = vsel %vm485, %v466, 0
    %v514 = vsel %vm485, %v468, 0
    %v516 = vsel %vm485, %v470, 0
    %v518 = vsel %vm485, %v472, 0
    %v520 = vsel %vm485, %v474, 0
    %v522 = vsel %vm485, %v476, 0
    %v524 = vsel %vm485, %v475, 0
    %vm526 = vcmask 1043456
    %v528 = vsel %vm526, %v480, 0
    %530 = vmatpush.msra.mxu0 0.0
    %531 = vmatpush.msra.mxu0 0.0
    %532 = vmatpush.msra.mxu0 0.0
    %533 = vmatpush.msra.mxu0 0.0
    %534 = vmatpush.msra.mxu0 0.0
    %535 = vmatpush.msra.mxu0 0.0
    %536 = vmatpush.msra.mxu0 0.0
    %537 = vmatpush.msra.mxu0 0.0
    %538 = vmatpush.msra.mxu0 0.0
    %539 = vmatpush.msra.mxu0 0.0
    %540 = vmatpush.msra.mxu0 0.0
    %541 = vmatpush.msra.mxu0 0.0
    %542 = vmatpush.msra.mxu0 0.0
    %543 = vmatpush.msra.mxu0 0.0
    %544 = vmatpush.msra.mxu0 %v528
    %545 = vmatpush.msra.mxu0 %v479
    %546 = vmatmul.f32.gmra.mxu0 %v487
    %v547 = vpop.f32.mrf.mxu0
    %v548 = vadd.f32 %v483, %v547
    %549 = vmatmul.f32.gmra.mxu0 %v490
    %v550 = vpop.f32.mrf.mxu0
    %v551 = vadd.f32 %v483, %v550
    %552 = vmatmul.f32.gmra.mxu0 %v493
    %v553 = vpop.f32.mrf.mxu0
    %v554 = vadd.f32 %v483, %v553
    %555 = vmatmul.f32.gmra.mxu0 %v496
    %v556 = vpop.f32.mrf.mxu0
    %v557 = vadd.f32 %v483, %v556
    %558 = vmatmul.f32.gmra.mxu0 %v499
    %v559 = vpop.f32.mrf.mxu0
    %v560 = vadd.f32 %v483, %v559
    %561 = vmatmul.f32.gmra.mxu0 %v502
    %v562 = vpop.f32.mrf.mxu0
    %v563 = vadd.f32 %v483, %v562
    %564 = vmatmul.f32.gmra.mxu0 %v505
    %v565 = vpop.f32.mrf.mxu0
    %v566 = vadd.f32 %v483, %v565
    %567 = vmatmul.f32.gmra.mxu0 %v508
    %v568 = vpop.f32.mrf.mxu0
    %v569 = vadd.f32 %v483, %v568
    %570 = vmatmul.f32.gmra.mxu0 %v510
    %v571 = vpop.f32.mrf.mxu0
    %v572 = vadd.f32 %v483, %v571
    %573 = vmatmul.f32.gmra.mxu0 %v512
    %v574 = vpop.f32.mrf.mxu0
    %v575 = vadd.f32 %v483, %v574
    %576 = vmatmul.f32.gmra.mxu0 %v514
    %v577 = vpop.f32.mrf.mxu0
    %v578 = vadd.f32 %v483, %v577
    %579 = vmatmul.f32.gmra.mxu0 %v516
    %v580 = vpop.f32.mrf.mxu0
    %v581 = vadd.f32 %v483, %v580
    %582 = vmatmul.f32.gmra.mxu0 %v518
    %v583 = vpop.f32.mrf.mxu0
    %v584 = vadd.f32 %v483, %v583
    %585 = vmatmul.f32.gmra.mxu0 %v520
    %v586 = vpop.f32.mrf.mxu0
    %v587 = vadd.f32 %v483, %v586
    %588 = vmatmul.f32.gmra.mxu0 %v522
    %v589 = vpop.f32.mrf.mxu0
    %v590 = vadd.f32 %v483, %v589
    %591 = vmatmul.f32.gmra.mxu0 %v524
    %v592 = vpop.f32.mrf.mxu0
    %v593 = vadd.f32 %v483, %v592
    %594 = vdwg.mxu0
    %v595 = vmax.f32 %v548, 0.0
    %v596 = vmax.f32 %v551, 0.0
    %v597 = vmax.f32 %v554, 0.0
    %v598 = vmax.f32 %v557, 0.0
    %v599 = vmax.f32 %v560, 0.0
    %v600 = vmax.f32 %v563, 0.0
    %v601 = vmax.f32 %v566, 0.0
    %v602 = vmax.f32 %v569, 0.0
    %v603 = vmax.f32 %v572, 0.0
    %v604 = vmax.f32 %v575, 0.0
    %v605 = vmax.f32 %v578, 0.0
    %v606 = vmax.f32 %v581, 0.0
    %v607 = vmax.f32 %v584, 0.0
    %v608 = vmax.f32 %v587, 0.0
    %v609 = vmax.f32 %v590, 0.0
    %v610 = vmax.f32 %v593, 0.0
    %vm611 = vcmask 261120
    %612 = vst.msk [vmem:[#allocation2] sm:$0xff] %vm611, %v595
    %613 = vst.msk [vmem:[#allocation2 + $0x8] sm:$0xff] %vm611, %v596
    %614 = vst.msk [vmem:[#allocation2 + $0x10] sm:$0xff] %vm611, %v597
    %615 = vst.msk [vmem:[#allocation2 + $0x18] sm:$0xff] %vm611, %v598
    %616 = vst.msk [vmem:[#allocation2 + $0x20] sm:$0xff] %vm611, %v599
    %617 = vst.msk [vmem:[#allocation2 + $0x28] sm:$0xff] %vm611, %v600
    %618 = vst.msk [vmem:[#allocation2 + $0x30] sm:$0xff] %vm611, %v601
    %619 = vst.msk [vmem:[#allocation2 + $0x38] sm:$0xff] %vm611, %v602
    %620 = vst.msk [vmem:[#allocation2 + $0x40] sm:$0xff] %vm611, %v603
    %621 = vst.msk [vmem:[#allocation2 + $0x48] sm:$0xff] %vm611, %v604
    %622 = vst.msk [vmem:[#allocation2 + $0x50] sm:$0xff] %vm611, %v605
    %623 = vst.msk [vmem:[#allocation2 + $0x58] sm:$0xff] %vm611, %v606
    %624 = vst.msk [vmem:[#allocation2 + $0x60] sm:$0xff] %vm611, %v607
    %625 = vst.msk [vmem:[#allocation2 + $0x68] sm:$0xff] %vm611, %v608
    %626 = vst.msk [vmem:[#allocation2 + $0x70] sm:$0xff] %vm611, %v609
    %vm627 = vcmask 259072
    %628 = vst.msk [vmem:[#allocation2 + $0x78] sm:$0x3f] %vm627, %v610
    %v629 = vld [vmem:[#allocation2] ss:$2 sm:$0xff]
    %s630 = scalar_lea.vmem [#allocation2], 16
    %v631 = vld [vmem:[%s630] ss:$2 sm:$0xff]
    %s632 = scalar_lea.vmem [#allocation2], 32
    %v633 = vld [vmem:[%s632] ss:$2 sm:$0xff]
    %s634 = scalar_lea.vmem [#allocation2], 48
    %v635 = vld [vmem:[%s634] ss:$2 sm:$0x7f]
    %s636 = scalar_lea.vmem [#allocation2], 1
    %v637 = vld [vmem:[%s636] ss:$2 sm:$0xff]
    %s638 = scalar_lea.vmem [#allocation2], 17
    %v639 = vld [vmem:[%s638] ss:$2 sm:$0xff]
    %s640 = scalar_lea.vmem [#allocation2], 33
    %v641 = vld [vmem:[%s640] ss:$2 sm:$0xff]
    %s642 = scalar_lea.vmem [#allocation2], 49
    %v643 = vld [vmem:[%s642] ss:$2 sm:$0x7f]
    %s644 = scalar_lea.vmem [#allocation2], 2
    %v645 = vld [vmem:[%s644] ss:$2 sm:$0xff]
    %s646 = scalar_lea.vmem [#allocation2], 18
    %v647 = vld [vmem:[%s646] ss:$2 sm:$0xff]
    %s648 = scalar_lea.vmem [#allocation2], 34
    %v649 = vld [vmem:[%s648] ss:$2 sm:$0xff]
    %s650 = scalar_lea.vmem [#allocation2], 50
    %v651 = vld [vmem:[%s650] ss:$2 sm:$0x7f]
    %656 = vrot.lane.b32.xlu0 %v637, 32
    %v657 = vpop.permute.xlu0 %656
    %658 = vrot.lane.b32.xlu0 %v639, 32
    %v659 = vpop.permute.xlu0 %658
    %660 = vrot.lane.b32.xlu0 %v641, 32
    %v661 = vpop.permute.xlu0 %660
    %662 = vrot.lane.b32.xlu0 %v643, 32
    %v663 = vpop.permute.xlu0 %662
    %672 = vrot.lane.b32.xlu0 %v645, 64
    %v673 = vpop.permute.xlu0 %672
    %674 = vrot.lane.b32.xlu0 %v647, 64
    %v675 = vpop.permute.xlu0 %674
    %676 = vrot.lane.b32.xlu0 %v649, 64
    %v677 = vpop.permute.xlu0 %676
    %678 = vrot.lane.b32.xlu0 %v651, 64
    %v679 = vpop.permute.xlu0 %678
    %v684 = vsel %vm611, %v629, %v657
    %v685 = vsel %vm611, %v631, %v659
    %v686 = vsel %vm611, %v633, %v661
    %v687 = vsel %vm611, %v635, %v663
    %vm688 = vcmask 523264
    %v689 = vsel %vm688, %v684, %v673
    %v690 = vsel %vm688, %v685, %v675
    %v691 = vsel %vm688, %v686, %v677
    %v692 = vsel %vm688, %v687, %v679
    %s693 = scalar_lea.vmem [#allocation2], 63
    %v694 = vld [vmem:[%s693] ss:$2 sm:$0xff]
    %s695 = scalar_lea.vmem [#allocation2], 79
    %v696 = vld [vmem:[%s695] ss:$2 sm:$0xff]
    %s697 = scalar_lea.vmem [#allocation2], 95
    %v698 = vld [vmem:[%s697] ss:$2 sm:$0xff]
    %s699 = scalar_lea.vmem [#allocation2], 111
    %v700 = vld [vmem:[%s699] ss:$2 sm:$0x7f]
    %s701 = scalar_lea.vmem [#allocation2], 64
    %v702 = vld [vmem:[%s701] ss:$2 sm:$0xff]
    %s703 = scalar_lea.vmem [#allocation2], 80
    %v704 = vld [vmem:[%s703] ss:$2 sm:$0xff]
    %s705 = scalar_lea.vmem [#allocation2], 96
    %v706 = vld [vmem:[%s705] ss:$2 sm:$0xff]
    %s707 = scalar_lea.vmem [#allocation2], 112
    %v708 = vld [vmem:[%s707] ss:$2 sm:$0x7f]
    %s709 = scalar_lea.vmem [#allocation2], 65
    %v710 = vld [vmem:[%s709] ss:$2 sm:$0xff]
    %s711 = scalar_lea.vmem [#allocation2], 81
    %v712 = vld [vmem:[%s711] ss:$2 sm:$0xff]
    %s713 = scalar_lea.vmem [#allocation2], 97
    %v714 = vld [vmem:[%s713] ss:$2 sm:$0xff]
    %s715 = scalar_lea.vmem [#allocation2], 113
    %v716 = vld [vmem:[%s715] ss:$2 sm:$0x7f]
    %721 = vrot.lane.b32.xlu0 %v702, 32
    %v722 = vpop.permute.xlu0 %721
    %723 = vrot.lane.b32.xlu0 %v704, 32
    %v724 = vpop.permute.xlu0 %723
    %725 = vrot.lane.b32.xlu0 %v706, 32
    %v726 = vpop.permute.xlu0 %725
    %727 = vrot.lane.b32.xlu0 %v708, 32
    %v728 = vpop.permute.xlu0 %727
    %737 = vrot.lane.b32.xlu0 %v710, 64
    %v738 = vpop.permute.xlu0 %737
    %739 = vrot.lane.b32.xlu0 %v712, 64
    %v740 = vpop.permute.xlu0 %739
    %741 = vrot.lane.b32.xlu0 %v714, 64
    %v742 = vpop.permute.xlu0 %741
    %743 = vrot.lane.b32.xlu0 %v716, 64
    %v744 = vpop.permute.xlu0 %743
    %v749 = vsel %vm611, %v694, %v722
    %v750 = vsel %vm611, %v696, %v724
    %v751 = vsel %vm611, %v698, %v726
    %v752 = vsel %vm611, %v700, %v728
    %v753 = vsel %vm688, %v749, %v738
    %v754 = vsel %vm688, %v750, %v740
    %v755 = vsel %vm688, %v751, %v742
    %v756 = vsel %vm688, %v752, %v744
    %v761 = vrot.slane %v753, 1
    %v762 = vrot.slane %v754, 1
    %v763 = vsel %vm461, %v761, %v762
    %v764 = vrot.slane %v755, 1
    %v765 = vsel %vm461, %v762, %v764
    %v766 = vrot.slane %v756, 1
    %v767 = vsel %vm461, %v764, %v766
    %v769 = vsel %vm461, %v692, %v761
    %v770 = vld [vmem:[%s3] sm:$0xff]
    %v771 = vld [vmem:[%s3 + $0x8] sm:$0xff]
    %v772 = vld [vmem:[%s3 + $0x10] sm:$0xff]
    %v773 = vld [vmem:[%s3 + $0x18] sm:$0xff]
    %v774 = vld [vmem:[%s3 + $0x20] sm:$0xff]
    %v775 = vld [vmem:[%s3 + $0x28] sm:$0xff]
    %v776 = vld [vmem:[%s3 + $0x30] sm:$0xff]
    %v777 = vld [vmem:[%s3 + $0x38] sm:$0xff]
    %v778 = vld [vmem:[%s3 + $0x40] sm:$0xff]
    %v779 = vld [vmem:[%s3 + $0x48] sm:$0xff]
    %v780 = vld [vmem:[%s3 + $0x50] sm:$0xff]
    %v781 = vld [vmem:[%s3 + $0x58] sm:$0xff]
    %v782 = vld [vmem:[#allocation13] sm:$0x1]
    %v784 = vperm.slane %v782, 0
    %vm786 = vcmask 785408
    %v788 = vsel %vm786, %v689, 0
    %v791 = vsel %vm786, %v690, 0
    %v794 = vsel %vm786, %v691, 0
    %v797 = vsel %vm786, %v769, 0
    %v799 = vsel %vm786, %v763, 0
    %v801 = vsel %vm786, %v765, 0
    %v803 = vsel %vm786, %v767, 0
    %v805 = vsel %vm786, %v766, 0
    %807 = vmatpush.msra.mxu0 0.0
    %808 = vmatpush.msra.mxu0 0.0
    %809 = vmatpush.msra.mxu0 0.0
    %810 = vmatpush.msra.mxu0 0.0
    %811 = vmatpush.msra.mxu0 %v781
    %812 = vmatpush.msra.mxu0 %v780
    %813 = vmatpush.msra.mxu0 %v779
    %814 = vmatpush.msra.mxu0 %v778
    %815 = vmatpush.msra.mxu0 %v777
    %816 = vmatpush.msra.mxu0 %v776
    %817 = vmatpush.msra.mxu0 %v775
    %818 = vmatpush.msra.mxu0 %v774
    %819 = vmatpush.msra.mxu0 %v773
    %820 = vmatpush.msra.mxu0 %v772
    %821 = vmatpush.msra.mxu0 %v771
    %822 = vmatpush.msra.mxu0 %v770
    %823 = vmatmul.f32.gmra.mxu0 %v788
    %v824 = vpop.f32.mrf.mxu0
    %v825 = vadd.f32 %v784, %v824
    %826 = vmatmul.f32.gmra.mxu0 %v791
    %v827 = vpop.f32.mrf.mxu0
    %v828 = vadd.f32 %v784, %v827
    %829 = vmatmul.f32.gmra.mxu0 %v794
    %v830 = vpop.f32.mrf.mxu0
    %v831 = vadd.f32 %v784, %v830
    %832 = vmatmul.f32.gmra.mxu0 %v797
    %v833 = vpop.f32.mrf.mxu0
    %v834 = vadd.f32 %v784, %v833
    %835 = vmatmul.f32.gmra.mxu0 %v799
    %v836 = vpop.f32.mrf.mxu0
    %v837 = vadd.f32 %v784, %v836
    %838 = vmatmul.f32.gmra.mxu0 %v801
    %v839 = vpop.f32.mrf.mxu0
    %v840 = vadd.f32 %v784, %v839
    %841 = vmatmul.f32.gmra.mxu0 %v803
    %v842 = vpop.f32.mrf.mxu0
    %v843 = vadd.f32 %v784, %v842
    %844 = vmatmul.f32.gmra.mxu0 %v805
    %v845 = vpop.f32.mrf.mxu0
    %v846 = vadd.f32 %v784, %v845
    %847 = vdwg.mxu0
    %v848 = vmax.f32 %v825, 0.0
    %v849 = vmax.f32 %v828, 0.0
    %v850 = vmax.f32 %v831, 0.0
    %v851 = vmax.f32 %v834, 0.0
    %v852 = vmax.f32 %v837, 0.0
    %v853 = vmax.f32 %v840, 0.0
    %v854 = vmax.f32 %v843, 0.0
    %v855 = vmax.f32 %v846, 0.0
    %856 = vst.msk [vmem:[#allocation3] sm:$0xff] %vm611, %v848
    %857 = vst.msk [vmem:[#allocation3 + $0x8] sm:$0xff] %vm611, %v849
    %858 = vst.msk [vmem:[#allocation3 + $0x10] sm:$0xff] %vm611, %v850
    %859 = vst.msk [vmem:[#allocation3 + $0x18] sm:$0xff] %vm611, %v851
    %860 = vst.msk [vmem:[#allocation3 + $0x20] sm:$0xff] %vm611, %v852
    %861 = vst.msk [vmem:[#allocation3 + $0x28] sm:$0xff] %vm611, %v853
    %862 = vst.msk [vmem:[#allocation3 + $0x30] sm:$0xff] %vm611, %v854
    %863 = vst.msk [vmem:[#allocation3 + $0x38] sm:$0x3f] %vm627, %v855
    %v864 = vld [vmem:[#allocation3] ss:$4 sm:$0x7f]
    %s865 = scalar_lea.vmem [#allocation3], 2
    %v866 = vld [vmem:[%s865] ss:$4 sm:$0x7f]
    %s867 = scalar_lea.vmem [#allocation3], 4
    %v868 = vld [vmem:[%s867] ss:$4 sm:$0x7f]
    %870 = vrot.lane.b32.xlu0 %v866, 32
    %v871 = vpop.permute.xlu0 %870
    %874 = vrot.lane.b32.xlu0 %v868, 64
    %v875 = vpop.permute.xlu0 %874
    %v877 = vsel %vm611, %v864, %v871
    %v878 = vsel %vm688, %v877, %v875
    %s879 = scalar_lea.vmem [#allocation3], 31
    %v880 = vld [vmem:[%s879] ss:$4 sm:$0x7f]
    %s881 = scalar_lea.vmem [#allocation3], 33
    %v882 = vld [vmem:[%s881] ss:$4 sm:$0x7f]
    %s883 = scalar_lea.vmem [#allocation3], 35
    %v884 = vld [vmem:[%s883] ss:$4 sm:$0x7f]
    %886 = vrot.lane.b32.xlu0 %v882, 32
    %v887 = vpop.permute.xlu0 %886
    %890 = vrot.lane.b32.xlu0 %v884, 64
    %v891 = vpop.permute.xlu0 %890
    %v893 = vsel %vm611, %v880, %v887
    %v894 = vsel %vm688, %v893, %v891
    %v896 = vrot.slane %v894, 1
    %v898 = vsel %vm461, %v878, %v896
    %v899 = vld [vmem:[%s5] sm:$0xff]
    %v900 = vld [vmem:[%s5 + $0x8] sm:$0xff]
    %v901 = vld [vmem:[%s5 + $0x10] sm:$0xff]
    %v902 = vld [vmem:[%s5 + $0x18] sm:$0xff]
    %v903 = vld [vmem:[%s5 + $0x20] sm:$0xff]
    %v904 = vld [vmem:[%s5 + $0x28] sm:$0xff]
    %v905 = vld [vmem:[%s5 + $0x30] sm:$0xff]
    %v906 = vld [vmem:[%s5 + $0x38] sm:$0xff]
    %v907 = vld [vmem:[%s5 + $0x40] sm:$0xff]
    %v908 = vld [vmem:[%s5 + $0x48] sm:$0xff]
    %v909 = vld [vmem:[%s5 + $0x50] sm:$0xff]
    %v910 = vld [vmem:[%s5 + $0x58] sm:$0xff]
    %v911 = vld [vmem:[#allocation14] sm:$0x1]
    %v913 = vperm.slane %v911, 0
    %v916 = vsel %vm786, %v898, 0
    %v918 = vsel %vm786, %v896, 0
    %920 = vmatpush.msra.mxu0 0.0
    %921 = vmatpush.msra.mxu0 0.0
    %922 = vmatpush.msra.mxu0 0.0
    %923 = vmatpush.msra.mxu0 0.0
    %924 = vmatpush.msra.mxu0 %v910
    %925 = vmatpush.msra.mxu0 %v909
    %926 = vmatpush.msra.mxu0 %v908
    %927 = vmatpush.msra.mxu0 %v907
    %928 = vmatpush.msra.mxu0 %v906
    %929 = vmatpush.msra.mxu0 %v905
    %930 = vmatpush.msra.mxu0 %v904
    %931 = vmatpush.msra.mxu0 %v903
    %932 = vmatpush.msra.mxu0 %v902
    %933 = vmatpush.msra.mxu0 %v901
    %934 = vmatpush.msra.mxu0 %v900
    %935 = vmatpush.msra.mxu0 %v899
    %936 = vmatmul.f32.gmra.mxu0 %v916
    %v937 = vpop.f32.mrf.mxu0
    %v938 = vadd.f32 %v913, %v937
    %939 = vmatmul.f32.gmra.mxu0 %v918
    %v940 = vpop.f32.mrf.mxu0
    %v941 = vadd.f32 %v913, %v940
    %942 = vdwg.mxu0
    %v943 = vmax.f32 %v938, 0.0
    %v944 = vmax.f32 %v941, 0.0
    %945 = vst.msk [vmem:[#allocation2] sm:$0xff] %vm688, %v943
    %vm946 = vcmask 521216
    %947 = vst.msk [vmem:[#allocation2 + $0x8] sm:$0x3f] %vm946, %v944
    %v948 = vld [vmem:[#allocation2] ss:$2 sm:$0x7]
    %v949 = vld [vmem:[%s636] ss:$2 sm:$0x7]
    %v950 = vld [vmem:[%s644] ss:$2 sm:$0x7]
    %952 = vrot.lane.b32.xlu0 %v949, 64
    %v953 = vpop.permute.xlu0 %952
    %v955 = vsel %vm688, %v948, %v953
    %s956 = scalar_lea.vmem [#allocation2], 7
    %v957 = vld [vmem:[%s956] ss:$2 sm:$0x7]
    %s958 = scalar_lea.vmem [#allocation2], 8
    %v959 = vld [vmem:[%s958] ss:$2 sm:$0x7]
    %s960 = scalar_lea.vmem [#allocation2], 9
    %v961 = vld [vmem:[%s960] ss:$2 sm:$0x7]
    %963 = vrot.lane.b32.xlu0 %v959, 64
    %v964 = vpop.permute.xlu0 %963
    %v966 = vsel %vm688, %v957, %v964
    %v969 = vrot.slane %v966, 5
    %v970 = vrot.slane %v961, 5
    %vm973 = vcmask 1042432
    %v974 = vsel %vm973, %v955, %v969
    %v975 = vsel %vm973, %v950, %v970
    %v976 = vld [vmem:[%s7] sm:$0xff]
    %v977 = vld [vmem:[%s7 + $0x8] sm:$0xff]
    %v978 = vld [vmem:[%s7 + $0x10] sm:$0xff]
    %v979 = vld [vmem:[%s7 + $0x18] sm:$0xff]
    %v980 = vld [vmem:[%s7 + $0x20] sm:$0xff]
    %v981 = vld [vmem:[%s7 + $0x28] sm:$0xff]
    %v982 = vld [vmem:[%s7 + $0x30] sm:$0xff]
    %v983 = vld [vmem:[%s7 + $0x38] sm:$0xff]
    %v984 = vld [vmem:[%s7 + $0x40] sm:$0xff]
    %v985 = vld [vmem:[%s7 + $0x48] sm:$0xff]
    %v986 = vld [vmem:[%s7 + $0x50] sm:$0xff]
    %v987 = vld [vmem:[%s7 + $0x58] sm:$0xff]
    %v988 = vld [vmem:[%s7 + $0x60] sm:$0xff]
    %v989 = vld [vmem:[%s7 + $0x68] sm:$0xff]
    %v990 = vld [vmem:[%s7 + $0x70] sm:$0xff]
    %v991 = vld [vmem:[%s7 + $0x78] sm:$0xff]
    %v992 = vld [vmem:[%s7 + $0x80] sm:$0xff]
    %v993 = vld [vmem:[%s7 + $0x88] sm:$0xff]
    %v994 = vld [vmem:[%s7 + $0x90] sm:$0xff]
    %v995 = vld [vmem:[%s7 + $0x98] sm:$0xff]
    %v996 = vld [vmem:[%s7 + $0xa0] sm:$0xff]
    %v997 = vld [vmem:[%s7 + $0xa8] sm:$0xff]
    %v998 = vld [vmem:[%s7 + $0xb0] sm:$0xff]
    %v999 = vld [vmem:[%s7 + $0xb8] sm:$0xff]
    %v1000 = vld [vmem:[#allocation16] sm:$0x1]
    %v1002 = vperm.slane %v1000, 0
    %v1005 = vsel %vm688, %v975, 0
    %1007 = vmatpush.msra.mxu0 %v991
    %1008 = vmatpush.msra.mxu0 %v990
    %1009 = vmatpush.msra.mxu0 %v989
    %1010 = vmatpush.msra.mxu0 %v988
    %1011 = vmatpush.msra.mxu0 %v987
    %1012 = vmatpush.msra.mxu0 %v986
    %1013 = vmatpush.msra.mxu0 %v985
    %1014 = vmatpush.msra.mxu0 %v984
    %1015 = vmatpush.msra.mxu0 %v983
    %1016 = vmatpush.msra.mxu0 %v982
    %1017 = vmatpush.msra.mxu0 %v981
    %1018 = vmatpush.msra.mxu0 %v980
    %1019 = vmatpush.msra.mxu0 %v979
    %1020 = vmatpush.msra.mxu0 %v978
    %1021 = vmatpush.msra.mxu0 %v977
    %1022 = vmatpush.msra.mxu0 %v976
    %1023 = vmatmul.f32.gmra.mxu0 %v974
    %v1024 = vpop.f32.mrf.mxu0
    %v1025 = vadd.f32 %v1002, %v1024
    %1026 = vdwg.mxu0
    %1027 = vmatpush.msra.mxu0 0.0
    %1028 = vmatpush.msra.mxu0 0.0
    %1029 = vmatpush.msra.mxu0 0.0
    %1030 = vmatpush.msra.mxu0 0.0
    %1031 = vmatpush.msra.mxu0 0.0
    %1032 = vmatpush.msra.mxu0 0.0
    %1033 = vmatpush.msra.mxu0 0.0
    %1034 = vmatpush.msra.mxu0 0.0
    %1035 = vmatpush.msra.mxu0 %v999
    %1036 = vmatpush.msra.mxu0 %v998
    %1037 = vmatpush.msra.mxu0 %v997
    %1038 = vmatpush.msra.mxu0 %v996
    %1039 = vmatpush.msra.mxu0 %v995
    %1040 = vmatpush.msra.mxu0 %v994
    %1041 = vmatpush.msra.mxu0 %v993
    %1042 = vmatpush.msra.mxu0 %v992
    %1043 = vmatmul.f32.gmra.mxu0 %v1005
    %v1044 = vpop.f32.mrf.mxu0
    %v1045 = vadd.f32 %v1025, %v1044
    %1046 = vdwg.mxu0
    %v1047 = vmax.f32 %v1045, 0.0
    %1048 = vst.msk [vmem:[#allocation3] sm:$0x3f] %vm946, %v1047
    %1049 = vst [vmem:[#allocation4] sm:$0xff] 0.0
    %v1050 = vld [vmem:[#allocation3] sm:$0x1]
    %vm1051 = vcmask 516096
    %1052 = vst.msk [vmem:[#allocation4] sm:$0x1] %vm1051, %v1050
    %v1053 = vld [vmem:[#allocation3 + $0x2] sm:$0x1]
    %1055 = vrot.lane.b32.xlu0 %v1053, 64
    %v1056 = vpop.permute.xlu0 %1055
    %vm1058 = vcmask 1040896
    %1059 = vst.msk [vmem:[#allocation4] sm:$0x1] %vm1058, %v1056
    %v1060 = vld [vmem:[#allocation3 + $0x3] sm:$0x1]
    %1061 = vst.msk [vmem:[#allocation4 + $0x1] sm:$0x1] %vm1051, %v1060
    %v1062 = vld [vmem:[#allocation3 + $0x5] sm:$0x1]
    %1064 = vrot.lane.b32.xlu0 %v1062, 64
    %v1065 = vpop.permute.xlu0 %1064
    %1067 = vst.msk [vmem:[#allocation4 + $0x1] sm:$0x1] %vm1058, %v1065
    %s1068 = smul.u32 8, 16
    %s1069 = smul.u32 %s1068, 8
    %s1070 = sshll.u32 %s1069, 4
    %1071 = dma.done [#allocation8], %s1070
    %v1072 = vld [vmem:[#allocation4] sm:$0xff]
    %v1073 = vld [vmem:[#allocation5] sm:$0xff]
    %v1074 = vld [vmem:[#allocation5 + $0x8] sm:$0xff]
    %v1075 = vld [vmem:[#allocation5 + $0x10] sm:$0xff]
    %v1076 = vld [vmem:[#allocation5 + $0x18] sm:$0xff]
    %v1077 = vld [vmem:[#allocation5 + $0x20] sm:$0xff]
    %v1078 = vld [vmem:[#allocation5 + $0x28] sm:$0xff]
    %v1079 = vld [vmem:[#allocation5 + $0x30] sm:$0xff]
    %v1080 = vld [vmem:[#allocation5 + $0x38] sm:$0xff]
    %v1081 = vld [vmem:[#allocation5 + $0x40] sm:$0xff]
    %v1082 = vld [vmem:[#allocation5 + $0x48] sm:$0xff]
    %v1083 = vld [vmem:[#allocation5 + $0x50] sm:$0xff]
    %v1084 = vld [vmem:[#allocation5 + $0x58] sm:$0xff]
    %v1085 = vld [vmem:[#allocation5 + $0x60] sm:$0xff]
    %v1086 = vld [vmem:[#allocation5 + $0x68] sm:$0xff]
    %v1087 = vld [vmem:[#allocation5 + $0x70] sm:$0xff]
    %v1088 = vld [vmem:[#allocation5 + $0x78] sm:$0xff]
    %v1089 = vld [vmem:[#allocation5 + $0x80] sm:$0xff]
    %v1090 = vld [vmem:[#allocation5 + $0x88] sm:$0xff]
    %v1091 = vld [vmem:[#allocation5 + $0x90] sm:$0xff]
    %v1092 = vld [vmem:[#allocation5 + $0x98] sm:$0xff]
    %v1093 = vld [vmem:[#allocation5 + $0xa0] sm:$0xff]
    %v1094 = vld [vmem:[#allocation5 + $0xa8] sm:$0xff]
    %v1095 = vld [vmem:[#allocation5 + $0xb0] sm:$0xff]
    %v1096 = vld [vmem:[#allocation5 + $0xb8] sm:$0xff]
    %v1097 = vld [vmem:[#allocation5 + $0xc0] sm:$0xff]
    %v1098 = vld [vmem:[#allocation5 + $0xc8] sm:$0xff]
    %v1099 = vld [vmem:[#allocation5 + $0xd0] sm:$0xff]
    %v1100 = vld [vmem:[#allocation5 + $0xd8] sm:$0xff]
    %v1101 = vld [vmem:[#allocation5 + $0xe0] sm:$0xff]
    %v1102 = vld [vmem:[#allocation5 + $0xe8] sm:$0xff]
    %v1103 = vld [vmem:[#allocation5 + $0xf0] sm:$0xff]
    %v1104 = vld [vmem:[#allocation5 + $0xf8] sm:$0xff]
    %v1105 = vld [vmem:[#allocation5 + $0x100] sm:$0xff]
    %v1106 = vld [vmem:[#allocation5 + $0x108] sm:$0xff]
    %v1107 = vld [vmem:[#allocation5 + $0x110] sm:$0xff]
    %v1108 = vld [vmem:[#allocation5 + $0x118] sm:$0xff]
    %v1109 = vld [vmem:[#allocation5 + $0x120] sm:$0xff]
    %v1110 = vld [vmem:[#allocation5 + $0x128] sm:$0xff]
    %v1111 = vld [vmem:[#allocation5 + $0x130] sm:$0xff]
    %v1112 = vld [vmem:[#allocation5 + $0x138] sm:$0xff]
    %v1113 = vld [vmem:[#allocation5 + $0x140] sm:$0xff]
    %v1114 = vld [vmem:[#allocation5 + $0x148] sm:$0xff]
    %v1115 = vld [vmem:[#allocation5 + $0x150] sm:$0xff]
    %v1116 = vld [vmem:[#allocation5 + $0x158] sm:$0xff]
    %v1117 = vld [vmem:[#allocation5 + $0x160] sm:$0xff]
    %v1118 = vld [vmem:[#allocation5 + $0x168] sm:$0xff]
    %v1119 = vld [vmem:[#allocation5 + $0x170] sm:$0xff]
    %v1120 = vld [vmem:[#allocation5 + $0x178] sm:$0xff]
    %v1121 = vld [vmem:[#allocation5 + $0x180] sm:$0xff]
    %v1122 = vld [vmem:[#allocation5 + $0x188] sm:$0xff]
    %v1123 = vld [vmem:[#allocation5 + $0x190] sm:$0xff]
    %v1124 = vld [vmem:[#allocation5 + $0x198] sm:$0xff]
    %v1125 = vld [vmem:[#allocation5 + $0x1a0] sm:$0xff]
    %v1126 = vld [vmem:[#allocation5 + $0x1a8] sm:$0xff]
    %v1127 = vld [vmem:[#allocation5 + $0x1b0] sm:$0xff]
    %v1128 = vld [vmem:[#allocation5 + $0x1b8] sm:$0xff]
    %v1129 = vld [vmem:[#allocation5 + $0x1c0] sm:$0xff]
    %v1130 = vld [vmem:[#allocation5 + $0x1c8] sm:$0xff]
    %v1131 = vld [vmem:[#allocation5 + $0x1d0] sm:$0xff]
    %v1132 = vld [vmem:[#allocation5 + $0x1d8] sm:$0xff]
    %v1133 = vld [vmem:[#allocation5 + $0x1e0] sm:$0xff]
    %v1134 = vld [vmem:[#allocation5 + $0x1e8] sm:$0xff]
    %v1135 = vld [vmem:[#allocation5 + $0x1f0] sm:$0xff]
    %v1136 = vld [vmem:[#allocation5 + $0x1f8] sm:$0xff]
    %v1137 = vld [vmem:[#allocation5 + $0x200] sm:$0xff]
    %v1138 = vld [vmem:[#allocation5 + $0x208] sm:$0xff]
    %v1139 = vld [vmem:[#allocation5 + $0x210] sm:$0xff]
    %v1140 = vld [vmem:[#allocation5 + $0x218] sm:$0xff]
    %v1141 = vld [vmem:[#allocation5 + $0x220] sm:$0xff]
    %v1142 = vld [vmem:[#allocation5 + $0x228] sm:$0xff]
    %v1143 = vld [vmem:[#allocation5 + $0x230] sm:$0xff]
    %v1144 = vld [vmem:[#allocation5 + $0x238] sm:$0xff]
    %v1145 = vld [vmem:[#allocation5 + $0x240] sm:$0xff]
    %v1146 = vld [vmem:[#allocation5 + $0x248] sm:$0xff]
    %v1147 = vld [vmem:[#allocation5 + $0x250] sm:$0xff]
    %v1148 = vld [vmem:[#allocation5 + $0x258] sm:$0xff]
    %v1149 = vld [vmem:[#allocation5 + $0x260] sm:$0xff]
    %v1150 = vld [vmem:[#allocation5 + $0x268] sm:$0xff]
    %v1151 = vld [vmem:[#allocation5 + $0x270] sm:$0xff]
    %v1152 = vld [vmem:[#allocation5 + $0x278] sm:$0xff]
    %v1153 = vld [vmem:[#allocation5 + $0x280] sm:$0xff]
    %v1154 = vld [vmem:[#allocation5 + $0x288] sm:$0xff]
    %v1155 = vld [vmem:[#allocation5 + $0x290] sm:$0xff]
    %v1156 = vld [vmem:[#allocation5 + $0x298] sm:$0xff]
    %v1157 = vld [vmem:[#allocation5 + $0x2a0] sm:$0xff]
    %v1158 = vld [vmem:[#allocation5 + $0x2a8] sm:$0xff]
    %v1159 = vld [vmem:[#allocation5 + $0x2b0] sm:$0xff]
    %v1160 = vld [vmem:[#allocation5 + $0x2b8] sm:$0xff]
    %v1161 = vld [vmem:[#allocation5 + $0x2c0] sm:$0xff]
    %v1162 = vld [vmem:[#allocation5 + $0x2c8] sm:$0xff]
    %v1163 = vld [vmem:[#allocation5 + $0x2d0] sm:$0xff]
    %v1164 = vld [vmem:[#allocation5 + $0x2d8] sm:$0xff]
    %v1165 = vld [vmem:[#allocation5 + $0x2e0] sm:$0xff]
    %v1166 = vld [vmem:[#allocation5 + $0x2e8] sm:$0xff]
    %v1167 = vld [vmem:[#allocation5 + $0x2f0] sm:$0xff]
    %v1168 = vld [vmem:[#allocation5 + $0x2f8] sm:$0xff]
    %v1169 = vld [vmem:[#allocation5 + $0x300] sm:$0xff]
    %v1170 = vld [vmem:[#allocation5 + $0x308] sm:$0xff]
    %v1171 = vld [vmem:[#allocation5 + $0x310] sm:$0xff]
    %v1172 = vld [vmem:[#allocation5 + $0x318] sm:$0xff]
    %v1173 = vld [vmem:[#allocation5 + $0x320] sm:$0xff]
    %v1174 = vld [vmem:[#allocation5 + $0x328] sm:$0xff]
    %v1175 = vld [vmem:[#allocation5 + $0x330] sm:$0xff]
    %v1176 = vld [vmem:[#allocation5 + $0x338] sm:$0xff]
    %v1177 = vld [vmem:[#allocation5 + $0x340] sm:$0xff]
    %v1178 = vld [vmem:[#allocation5 + $0x348] sm:$0xff]
    %v1179 = vld [vmem:[#allocation5 + $0x350] sm:$0xff]
    %v1180 = vld [vmem:[#allocation5 + $0x358] sm:$0xff]
    %v1181 = vld [vmem:[#allocation5 + $0x360] sm:$0xff]
    %v1182 = vld [vmem:[#allocation5 + $0x368] sm:$0xff]
    %v1183 = vld [vmem:[#allocation5 + $0x370] sm:$0xff]
    %v1184 = vld [vmem:[#allocation5 + $0x378] sm:$0xff]
    %v1185 = vld [vmem:[#allocation5 + $0x380] sm:$0xff]
    %v1186 = vld [vmem:[#allocation5 + $0x388] sm:$0xff]
    %v1187 = vld [vmem:[#allocation5 + $0x390] sm:$0xff]
    %v1188 = vld [vmem:[#allocation5 + $0x398] sm:$0xff]
    %v1189 = vld [vmem:[#allocation5 + $0x3a0] sm:$0xff]
    %v1190 = vld [vmem:[#allocation5 + $0x3a8] sm:$0xff]
    %v1191 = vld [vmem:[#allocation5 + $0x3b0] sm:$0xff]
    %v1192 = vld [vmem:[#allocation5 + $0x3b8] sm:$0xff]
    %v1193 = vld [vmem:[#allocation5 + $0x3c0] sm:$0xff]
    %v1194 = vld [vmem:[#allocation5 + $0x3c8] sm:$0xff]
    %v1195 = vld [vmem:[#allocation5 + $0x3d0] sm:$0xff]
    %v1196 = vld [vmem:[#allocation5 + $0x3d8] sm:$0xff]
    %v1197 = vld [vmem:[#allocation5 + $0x3e0] sm:$0xff]
    %v1198 = vld [vmem:[#allocation5 + $0x3e8] sm:$0xff]
    %v1199 = vld [vmem:[#allocation5 + $0x3f0] sm:$0xff]
    %v1200 = vld [vmem:[#allocation5 + $0x3f8] sm:$0xff]
    %v1201 = vld [vmem:[#allocation17] sm:$0xff]
    %v1203 = vperm.slane %v1201, 0
    %v1204 = vperm.slane %v1201, 1
    %v1205 = vperm.slane %v1201, 2
    %v1206 = vperm.slane %v1201, 3
    %v1207 = vperm.slane %v1201, 4
    %v1208 = vperm.slane %v1201, 5
    %v1209 = vperm.slane %v1201, 6
    %v1210 = vperm.slane %v1201, 7
    %1219 = vmatpush.msra.mxu0 %v1193
    %1220 = vmatpush.msra.mxu0 %v1185
    %1221 = vmatpush.msra.mxu0 %v1177
    %1222 = vmatpush.msra.mxu0 %v1169
    %1223 = vmatpush.msra.mxu0 %v1161
    %1224 = vmatpush.msra.mxu0 %v1153
    %1225 = vmatpush.msra.mxu0 %v1145
    %1226 = vmatpush.msra.mxu0 %v1137
    %1227 = vmatpush.msra.mxu0 %v1129
    %1228 = vmatpush.msra.mxu0 %v1121
    %1229 = vmatpush.msra.mxu0 %v1113
    %1230 = vmatpush.msra.mxu0 %v1105
    %1231 = vmatpush.msra.mxu0 %v1097
    %1232 = vmatpush.msra.mxu0 %v1089
    %1233 = vmatpush.msra.mxu0 %v1081
    %1234 = vmatpush.msra.mxu0 %v1073
    %1235 = vmatmul.f32.gmra.mxu0 %v1072
    %v1236 = vpop.f32.mrf.mxu0
    %v1237 = vadd.f32 %v1203, %v1236
    %1238 = vdwg.mxu0
    %1239 = vmatpush.msra.mxu0 %v1194
    %1240 = vmatpush.msra.mxu0 %v1186
    %1241 = vmatpush.msra.mxu0 %v1178
    %1242 = vmatpush.msra.mxu0 %v1170
    %1243 = vmatpush.msra.mxu0 %v1162
    %1244 = vmatpush.msra.mxu0 %v1154
    %1245 = vmatpush.msra.mxu0 %v1146
    %1246 = vmatpush.msra.mxu0 %v1138
    %1247 = vmatpush.msra.mxu0 %v1130
    %1248 = vmatpush.msra.mxu0 %v1122
    %1249 = vmatpush.msra.mxu0 %v1114
    %1250 = vmatpush.msra.mxu0 %v1106
    %1251 = vmatpush.msra.mxu0 %v1098
    %1252 = vmatpush.msra.mxu0 %v1090
    %1253 = vmatpush.msra.mxu0 %v1082
    %1254 = vmatpush.msra.mxu0 %v1074
    %1255 = vmatmul.f32.gmra.mxu0 %v1072
    %v1256 = vpop.f32.mrf.mxu0
    %v1257 = vadd.f32 %v1204, %v1256
    %1258 = vdwg.mxu0
    %1259 = vmatpush.msra.mxu0 %v1195
    %1260 = vmatpush.msra.mxu0 %v1187
    %1261 = vmatpush.msra.mxu0 %v1179
    %1262 = vmatpush.msra.mxu0 %v1171
    %1263 = vmatpush.msra.mxu0 %v1163
    %1264 = vmatpush.msra.mxu0 %v1155
    %1265 = vmatpush.msra.mxu0 %v1147
    %1266 = vmatpush.msra.mxu0 %v1139
    %1267 = vmatpush.msra.mxu0 %v1131
    %1268 = vmatpush.msra.mxu0 %v1123
    %1269 = vmatpush.msra.mxu0 %v1115
    %1270 = vmatpush.msra.mxu0 %v1107
    %1271 = vmatpush.msra.mxu0 %v1099
    %1272 = vmatpush.msra.mxu0 %v1091
    %1273 = vmatpush.msra.mxu0 %v1083
    %1274 = vmatpush.msra.mxu0 %v1075
    %1275 = vmatmul.f32.gmra.mxu0 %v1072
    %v1276 = vpop.f32.mrf.mxu0
    %v1277 = vadd.f32 %v1205, %v1276
    %1278 = vdwg.mxu0
    %1279 = vmatpush.msra.mxu0 %v1196
    %1280 = vmatpush.msra.mxu0 %v1188
    %1281 = vmatpush.msra.mxu0 %v1180
    %1282 = vmatpush.msra.mxu0 %v1172
    %1283 = vmatpush.msra.mxu0 %v1164
    %1284 = vmatpush.msra.mxu0 %v1156
    %1285 = vmatpush.msra.mxu0 %v1148
    %1286 = vmatpush.msra.mxu0 %v1140
    %1287 = vmatpush.msra.mxu0 %v1132
    %1288 = vmatpush.msra.mxu0 %v1124
    %1289 = vmatpush.msra.mxu0 %v1116
    %1290 = vmatpush.msra.mxu0 %v1108
    %1291 = vmatpush.msra.mxu0 %v1100
    %1292 = vmatpush.msra.mxu0 %v1092
    %1293 = vmatpush.msra.mxu0 %v1084
    %1294 = vmatpush.msra.mxu0 %v1076
    %1295 = vmatmul.f32.gmra.mxu0 %v1072
    %v1296 = vpop.f32.mrf.mxu0
    %v1297 = vadd.f32 %v1206, %v1296
    %1298 = vdwg.mxu0
    %1299 = vmatpush.msra.mxu0 %v1197
    %1300 = vmatpush.msra.mxu0 %v1189
    %1301 = vmatpush.msra.mxu0 %v1181
    %1302 = vmatpush.msra.mxu0 %v1173
    %1303 = vmatpush.msra.mxu0 %v1165
    %1304 = vmatpush.msra.mxu0 %v1157
    %1305 = vmatpush.msra.mxu0 %v1149
    %1306 = vmatpush.msra.mxu0 %v1141
    %1307 = vmatpush.msra.mxu0 %v1133
    %1308 = vmatpush.msra.mxu0 %v1125
    %1309 = vmatpush.msra.mxu0 %v1117
    %1310 = vmatpush.msra.mxu0 %v1109
    %1311 = vmatpush.msra.mxu0 %v1101
    %1312 = vmatpush.msra.mxu0 %v1093
    %1313 = vmatpush.msra.mxu0 %v1085
    %1314 = vmatpush.msra.mxu0 %v1077
    %1315 = vmatmul.f32.gmra.mxu0 %v1072
    %v1316 = vpop.f32.mrf.mxu0
    %v1317 = vadd.f32 %v1207, %v1316
    %1318 = vdwg.mxu0
    %1319 = vmatpush.msra.mxu0 %v1198
    %1320 = vmatpush.msra.mxu0 %v1190
    %1321 = vmatpush.msra.mxu0 %v1182
    %1322 = vmatpush.msra.mxu0 %v1174
    %1323 = vmatpush.msra.mxu0 %v1166
    %1324 = vmatpush.msra.mxu0 %v1158
    %1325 = vmatpush.msra.mxu0 %v1150
    %1326 = vmatpush.msra.mxu0 %v1142
    %1327 = vmatpush.msra.mxu0 %v1134
    %1328 = vmatpush.msra.mxu0 %v1126
    %1329 = vmatpush.msra.mxu0 %v1118
    %1330 = vmatpush.msra.mxu0 %v1110
    %1331 = vmatpush.msra.mxu0 %v1102
    %1332 = vmatpush.msra.mxu0 %v1094
    %1333 = vmatpush.msra.mxu0 %v1086
    %1334 = vmatpush.msra.mxu0 %v1078
    %1335 = vmatmul.f32.gmra.mxu0 %v1072
    %v1336 = vpop.f32.mrf.mxu0
    %v1337 = vadd.f32 %v1208, %v1336
    %1338 = vdwg.mxu0
    %1339 = vmatpush.msra.mxu0 %v1199
    %1340 = vmatpush.msra.mxu0 %v1191
    %1341 = vmatpush.msra.mxu0 %v1183
    %1342 = vmatpush.msra.mxu0 %v1175
    %1343 = vmatpush.msra.mxu0 %v1167
    %1344 = vmatpush.msra.mxu0 %v1159
    %1345 = vmatpush.msra.mxu0 %v1151
    %1346 = vmatpush.msra.mxu0 %v1143
    %1347 = vmatpush.msra.mxu0 %v1135
    %1348 = vmatpush.msra.mxu0 %v1127
    %1349 = vmatpush.msra.mxu0 %v1119
    %1350 = vmatpush.msra.mxu0 %v1111
    %1351 = vmatpush.msra.mxu0 %v1103
    %1352 = vmatpush.msra.mxu0 %v1095
    %1353 = vmatpush.msra.mxu0 %v1087
    %1354 = vmatpush.msra.mxu0 %v1079
    %1355 = vmatmul.f32.gmra.mxu0 %v1072
    %v1356 = vpop.f32.mrf.mxu0
    %v1357 = vadd.f32 %v1209, %v1356
    %1358 = vdwg.mxu0
    %1359 = vmatpush.msra.mxu0 %v1200
    %1360 = vmatpush.msra.mxu0 %v1192
    %1361 = vmatpush.msra.mxu0 %v1184
    %1362 = vmatpush.msra.mxu0 %v1176
    %1363 = vmatpush.msra.mxu0 %v1168
    %1364 = vmatpush.msra.mxu0 %v1160
    %1365 = vmatpush.msra.mxu0 %v1152
    %1366 = vmatpush.msra.mxu0 %v1144
    %1367 = vmatpush.msra.mxu0 %v1136
    %1368 = vmatpush.msra.mxu0 %v1128
    %1369 = vmatpush.msra.mxu0 %v1120
    %1370 = vmatpush.msra.mxu0 %v1112
    %1371 = vmatpush.msra.mxu0 %v1104
    %1372 = vmatpush.msra.mxu0 %v1096
    %1373 = vmatpush.msra.mxu0 %v1088
    %1374 = vmatpush.msra.mxu0 %v1080
    %1375 = vmatmul.f32.gmra.mxu0 %v1072
    %v1376 = vpop.f32.mrf.mxu0
    %v1377 = vadd.f32 %v1210, %v1376
    %1378 = vdwg.mxu0
    %v1379 = vmax.f32 %v1237, 0.0
    %v1380 = vmax.f32 %v1257, 0.0
    %v1381 = vmax.f32 %v1277, 0.0
    %v1382 = vmax.f32 %v1297, 0.0
    %v1383 = vmax.f32 %v1317, 0.0
    %v1384 = vmax.f32 %v1337, 0.0
    %v1385 = vmax.f32 %v1357, 0.0
    %v1386 = vmax.f32 %v1377, 0.0
    %s1387 = smul.u32 8, 128
    %s1388 = smul.u32 %s1387, 4
    %s1389 = sshll.u32 %s1388, 4
    %1390 = dma.done %s168, %s1389
    %v1391 = vld [vmem:[#allocation6] sm:$0xff]
    %v1392 = vld [vmem:[#allocation6 + $0x8] sm:$0xff]
    %v1393 = vld [vmem:[#allocation6 + $0x10] sm:$0xff]
    %v1394 = vld [vmem:[#allocation6 + $0x18] sm:$0xff]
    %v1395 = vld [vmem:[#allocation6 + $0x20] sm:$0xff]
    %v1396 = vld [vmem:[#allocation6 + $0x28] sm:$0xff]
    %v1397 = vld [vmem:[#allocation6 + $0x30] sm:$0xff]
    %v1398 = vld [vmem:[#allocation6 + $0x38] sm:$0xff]
    %v1399 = vld [vmem:[#allocation6 + $0x40] sm:$0xff]
    %v1400 = vld [vmem:[#allocation6 + $0x48] sm:$0xff]
    %v1401 = vld [vmem:[#allocation6 + $0x50] sm:$0xff]
    %v1402 = vld [vmem:[#allocation6 + $0x58] sm:$0xff]
    %v1403 = vld [vmem:[#allocation6 + $0x60] sm:$0xff]
    %v1404 = vld [vmem:[#allocation6 + $0x68] sm:$0xff]
    %v1405 = vld [vmem:[#allocation6 + $0x70] sm:$0xff]
    %v1406 = vld [vmem:[#allocation6 + $0x78] sm:$0xff]
    %v1407 = vld [vmem:[#allocation6 + $0x80] sm:$0xff]
    %v1408 = vld [vmem:[#allocation6 + $0x88] sm:$0xff]
    %v1409 = vld [vmem:[#allocation6 + $0x90] sm:$0xff]
    %v1410 = vld [vmem:[#allocation6 + $0x98] sm:$0xff]
    %v1411 = vld [vmem:[#allocation6 + $0xa0] sm:$0xff]
    %v1412 = vld [vmem:[#allocation6 + $0xa8] sm:$0xff]
    %v1413 = vld [vmem:[#allocation6 + $0xb0] sm:$0xff]
    %v1414 = vld [vmem:[#allocation6 + $0xb8] sm:$0xff]
    %v1415 = vld [vmem:[#allocation6 + $0xc0] sm:$0xff]
    %v1416 = vld [vmem:[#allocation6 + $0xc8] sm:$0xff]
    %v1417 = vld [vmem:[#allocation6 + $0xd0] sm:$0xff]
    %v1418 = vld [vmem:[#allocation6 + $0xd8] sm:$0xff]
    %v1419 = vld [vmem:[#allocation6 + $0xe0] sm:$0xff]
    %v1420 = vld [vmem:[#allocation6 + $0xe8] sm:$0xff]
    %v1421 = vld [vmem:[#allocation6 + $0xf0] sm:$0xff]
    %v1422 = vld [vmem:[#allocation6 + $0xf8] sm:$0xff]
    %v1423 = vld [vmem:[#allocation6 + $0x100] sm:$0xff]
    %v1424 = vld [vmem:[#allocation6 + $0x108] sm:$0xff]
    %v1425 = vld [vmem:[#allocation6 + $0x110] sm:$0xff]
    %v1426 = vld [vmem:[#allocation6 + $0x118] sm:$0xff]
    %v1427 = vld [vmem:[#allocation6 + $0x120] sm:$0xff]
    %v1428 = vld [vmem:[#allocation6 + $0x128] sm:$0xff]
    %v1429 = vld [vmem:[#allocation6 + $0x130] sm:$0xff]
    %v1430 = vld [vmem:[#allocation6 + $0x138] sm:$0xff]
    %v1431 = vld [vmem:[#allocation6 + $0x140] sm:$0xff]
    %v1432 = vld [vmem:[#allocation6 + $0x148] sm:$0xff]
    %v1433 = vld [vmem:[#allocation6 + $0x150] sm:$0xff]
    %v1434 = vld [vmem:[#allocation6 + $0x158] sm:$0xff]
    %v1435 = vld [vmem:[#allocation6 + $0x160] sm:$0xff]
    %v1436 = vld [vmem:[#allocation6 + $0x168] sm:$0xff]
    %v1437 = vld [vmem:[#allocation6 + $0x170] sm:$0xff]
    %v1438 = vld [vmem:[#allocation6 + $0x178] sm:$0xff]
    %v1439 = vld [vmem:[#allocation6 + $0x180] sm:$0xff]
    %v1440 = vld [vmem:[#allocation6 + $0x188] sm:$0xff]
    %v1441 = vld [vmem:[#allocation6 + $0x190] sm:$0xff]
    %v1442 = vld [vmem:[#allocation6 + $0x198] sm:$0xff]
    %v1443 = vld [vmem:[#allocation6 + $0x1a0] sm:$0xff]
    %v1444 = vld [vmem:[#allocation6 + $0x1a8] sm:$0xff]
    %v1445 = vld [vmem:[#allocation6 + $0x1b0] sm:$0xff]
    %v1446 = vld [vmem:[#allocation6 + $0x1b8] sm:$0xff]
    %v1447 = vld [vmem:[#allocation6 + $0x1c0] sm:$0xff]
    %v1448 = vld [vmem:[#allocation6 + $0x1c8] sm:$0xff]
    %v1449 = vld [vmem:[#allocation6 + $0x1d0] sm:$0xff]
    %v1450 = vld [vmem:[#allocation6 + $0x1d8] sm:$0xff]
    %v1451 = vld [vmem:[#allocation6 + $0x1e0] sm:$0xff]
    %v1452 = vld [vmem:[#allocation6 + $0x1e8] sm:$0xff]
    %v1453 = vld [vmem:[#allocation6 + $0x1f0] sm:$0xff]
    %v1454 = vld [vmem:[#allocation6 + $0x1f8] sm:$0xff]
    %v1455 = vld [vmem:[#allocation6 + $0x200] sm:$0xff]
    %v1456 = vld [vmem:[#allocation6 + $0x208] sm:$0xff]
    %v1457 = vld [vmem:[#allocation6 + $0x210] sm:$0xff]
    %v1458 = vld [vmem:[#allocation6 + $0x218] sm:$0xff]
    %v1459 = vld [vmem:[#allocation6 + $0x220] sm:$0xff]
    %v1460 = vld [vmem:[#allocation6 + $0x228] sm:$0xff]
    %v1461 = vld [vmem:[#allocation6 + $0x230] sm:$0xff]
    %v1462 = vld [vmem:[#allocation6 + $0x238] sm:$0xff]
    %v1463 = vld [vmem:[#allocation6 + $0x240] sm:$0xff]
    %v1464 = vld [vmem:[#allocation6 + $0x248] sm:$0xff]
    %v1465 = vld [vmem:[#allocation6 + $0x250] sm:$0xff]
    %v1466 = vld [vmem:[#allocation6 + $0x258] sm:$0xff]
    %v1467 = vld [vmem:[#allocation6 + $0x260] sm:$0xff]
    %v1468 = vld [vmem:[#allocation6 + $0x268] sm:$0xff]
    %v1469 = vld [vmem:[#allocation6 + $0x270] sm:$0xff]
    %v1470 = vld [vmem:[#allocation6 + $0x278] sm:$0xff]
    %v1471 = vld [vmem:[#allocation6 + $0x280] sm:$0xff]
    %v1472 = vld [vmem:[#allocation6 + $0x288] sm:$0xff]
    %v1473 = vld [vmem:[#allocation6 + $0x290] sm:$0xff]
    %v1474 = vld [vmem:[#allocation6 + $0x298] sm:$0xff]
    %v1475 = vld [vmem:[#allocation6 + $0x2a0] sm:$0xff]
    %v1476 = vld [vmem:[#allocation6 + $0x2a8] sm:$0xff]
    %v1477 = vld [vmem:[#allocation6 + $0x2b0] sm:$0xff]
    %v1478 = vld [vmem:[#allocation6 + $0x2b8] sm:$0xff]
    %v1479 = vld [vmem:[#allocation6 + $0x2c0] sm:$0xff]
    %v1480 = vld [vmem:[#allocation6 + $0x2c8] sm:$0xff]
    %v1481 = vld [vmem:[#allocation6 + $0x2d0] sm:$0xff]
    %v1482 = vld [vmem:[#allocation6 + $0x2d8] sm:$0xff]
    %v1483 = vld [vmem:[#allocation6 + $0x2e0] sm:$0xff]
    %v1484 = vld [vmem:[#allocation6 + $0x2e8] sm:$0xff]
    %v1485 = vld [vmem:[#allocation6 + $0x2f0] sm:$0xff]
    %v1486 = vld [vmem:[#allocation6 + $0x2f8] sm:$0xff]
    %v1487 = vld [vmem:[#allocation6 + $0x300] sm:$0xff]
    %v1488 = vld [vmem:[#allocation6 + $0x308] sm:$0xff]
    %v1489 = vld [vmem:[#allocation6 + $0x310] sm:$0xff]
    %v1490 = vld [vmem:[#allocation6 + $0x318] sm:$0xff]
    %v1491 = vld [vmem:[#allocation6 + $0x320] sm:$0xff]
    %v1492 = vld [vmem:[#allocation6 + $0x328] sm:$0xff]
    %v1493 = vld [vmem:[#allocation6 + $0x330] sm:$0xff]
    %v1494 = vld [vmem:[#allocation6 + $0x338] sm:$0xff]
    %v1495 = vld [vmem:[#allocation6 + $0x340] sm:$0xff]
    %v1496 = vld [vmem:[#allocation6 + $0x348] sm:$0xff]
    %v1497 = vld [vmem:[#allocation6 + $0x350] sm:$0xff]
    %v1498 = vld [vmem:[#allocation6 + $0x358] sm:$0xff]
    %v1499 = vld [vmem:[#allocation6 + $0x360] sm:$0xff]
    %v1500 = vld [vmem:[#allocation6 + $0x368] sm:$0xff]
    %v1501 = vld [vmem:[#allocation6 + $0x370] sm:$0xff]
    %v1502 = vld [vmem:[#allocation6 + $0x378] sm:$0xff]
    %v1503 = vld [vmem:[#allocation6 + $0x380] sm:$0xff]
    %v1504 = vld [vmem:[#allocation6 + $0x388] sm:$0xff]
    %v1505 = vld [vmem:[#allocation6 + $0x390] sm:$0xff]
    %v1506 = vld [vmem:[#allocation6 + $0x398] sm:$0xff]
    %v1507 = vld [vmem:[#allocation6 + $0x3a0] sm:$0xff]
    %v1508 = vld [vmem:[#allocation6 + $0x3a8] sm:$0xff]
    %v1509 = vld [vmem:[#allocation6 + $0x3b0] sm:$0xff]
    %v1510 = vld [vmem:[#allocation6 + $0x3b8] sm:$0xff]
    %v1511 = vld [vmem:[#allocation6 + $0x3c0] sm:$0xff]
    %v1512 = vld [vmem:[#allocation6 + $0x3c8] sm:$0xff]
    %v1513 = vld [vmem:[#allocation6 + $0x3d0] sm:$0xff]
    %v1514 = vld [vmem:[#allocation6 + $0x3d8] sm:$0xff]
    %v1515 = vld [vmem:[#allocation6 + $0x3e0] sm:$0xff]
    %v1516 = vld [vmem:[#allocation6 + $0x3e8] sm:$0xff]
    %v1517 = vld [vmem:[#allocation6 + $0x3f0] sm:$0xff]
    %v1518 = vld [vmem:[#allocation6 + $0x3f8] sm:$0xff]
    %v1519 = vld [vmem:[#allocation6 + $0x400] sm:$0xff]
    %v1520 = vld [vmem:[#allocation6 + $0x408] sm:$0xff]
    %v1521 = vld [vmem:[#allocation6 + $0x410] sm:$0xff]
    %v1522 = vld [vmem:[#allocation6 + $0x418] sm:$0xff]
    %v1523 = vld [vmem:[#allocation6 + $0x420] sm:$0xff]
    %v1524 = vld [vmem:[#allocation6 + $0x428] sm:$0xff]
    %v1525 = vld [vmem:[#allocation6 + $0x430] sm:$0xff]
    %v1526 = vld [vmem:[#allocation6 + $0x438] sm:$0xff]
    %v1527 = vld [vmem:[#allocation6 + $0x440] sm:$0xff]
    %v1528 = vld [vmem:[#allocation6 + $0x448] sm:$0xff]
    %v1529 = vld [vmem:[#allocation6 + $0x450] sm:$0xff]
    %v1530 = vld [vmem:[#allocation6 + $0x458] sm:$0xff]
    %v1531 = vld [vmem:[#allocation6 + $0x460] sm:$0xff]
    %v1532 = vld [vmem:[#allocation6 + $0x468] sm:$0xff]
    %v1533 = vld [vmem:[#allocation6 + $0x470] sm:$0xff]
    %v1534 = vld [vmem:[#allocation6 + $0x478] sm:$0xff]
    %v1535 = vld [vmem:[#allocation6 + $0x480] sm:$0xff]
    %v1536 = vld [vmem:[#allocation6 + $0x488] sm:$0xff]
    %v1537 = vld [vmem:[#allocation6 + $0x490] sm:$0xff]
    %v1538 = vld [vmem:[#allocation6 + $0x498] sm:$0xff]
    %v1539 = vld [vmem:[#allocation6 + $0x4a0] sm:$0xff]
    %v1540 = vld [vmem:[#allocation6 + $0x4a8] sm:$0xff]
    %v1541 = vld [vmem:[#allocation6 + $0x4b0] sm:$0xff]
    %v1542 = vld [vmem:[#allocation6 + $0x4b8] sm:$0xff]
    %v1543 = vld [vmem:[#allocation6 + $0x4c0] sm:$0xff]
    %v1544 = vld [vmem:[#allocation6 + $0x4c8] sm:$0xff]
    %v1545 = vld [vmem:[#allocation6 + $0x4d0] sm:$0xff]
    %v1546 = vld [vmem:[#allocation6 + $0x4d8] sm:$0xff]
    %v1547 = vld [vmem:[#allocation6 + $0x4e0] sm:$0xff]
    %v1548 = vld [vmem:[#allocation6 + $0x4e8] sm:$0xff]
    %v1549 = vld [vmem:[#allocation6 + $0x4f0] sm:$0xff]
    %v1550 = vld [vmem:[#allocation6 + $0x4f8] sm:$0xff]
    %v1551 = vld [vmem:[#allocation6 + $0x500] sm:$0xff]
    %v1552 = vld [vmem:[#allocation6 + $0x508] sm:$0xff]
    %v1553 = vld [vmem:[#allocation6 + $0x510] sm:$0xff]
    %v1554 = vld [vmem:[#allocation6 + $0x518] sm:$0xff]
    %v1555 = vld [vmem:[#allocation6 + $0x520] sm:$0xff]
    %v1556 = vld [vmem:[#allocation6 + $0x528] sm:$0xff]
    %v1557 = vld [vmem:[#allocation6 + $0x530] sm:$0xff]
    %v1558 = vld [vmem:[#allocation6 + $0x538] sm:$0xff]
    %v1559 = vld [vmem:[#allocation6 + $0x540] sm:$0xff]
    %v1560 = vld [vmem:[#allocation6 + $0x548] sm:$0xff]
    %v1561 = vld [vmem:[#allocation6 + $0x550] sm:$0xff]
    %v1562 = vld [vmem:[#allocation6 + $0x558] sm:$0xff]
    %v1563 = vld [vmem:[#allocation6 + $0x560] sm:$0xff]
    %v1564 = vld [vmem:[#allocation6 + $0x568] sm:$0xff]
    %v1565 = vld [vmem:[#allocation6 + $0x570] sm:$0xff]
    %v1566 = vld [vmem:[#allocation6 + $0x578] sm:$0xff]
    %v1567 = vld [vmem:[#allocation6 + $0x580] sm:$0xff]
    %v1568 = vld [vmem:[#allocation6 + $0x588] sm:$0xff]
    %v1569 = vld [vmem:[#allocation6 + $0x590] sm:$0xff]
    %v1570 = vld [vmem:[#allocation6 + $0x598] sm:$0xff]
    %v1571 = vld [vmem:[#allocation6 + $0x5a0] sm:$0xff]
    %v1572 = vld [vmem:[#allocation6 + $0x5a8] sm:$0xff]
    %v1573 = vld [vmem:[#allocation6 + $0x5b0] sm:$0xff]
    %v1574 = vld [vmem:[#allocation6 + $0x5b8] sm:$0xff]
    %v1575 = vld [vmem:[#allocation6 + $0x5c0] sm:$0xff]
    %v1576 = vld [vmem:[#allocation6 + $0x5c8] sm:$0xff]
    %v1577 = vld [vmem:[#allocation6 + $0x5d0] sm:$0xff]
    %v1578 = vld [vmem:[#allocation6 + $0x5d8] sm:$0xff]
    %v1579 = vld [vmem:[#allocation6 + $0x5e0] sm:$0xff]
    %v1580 = vld [vmem:[#allocation6 + $0x5e8] sm:$0xff]
    %v1581 = vld [vmem:[#allocation6 + $0x5f0] sm:$0xff]
    %v1582 = vld [vmem:[#allocation6 + $0x5f8] sm:$0xff]
    %v1583 = vld [vmem:[#allocation6 + $0x600] sm:$0xff]
    %v1584 = vld [vmem:[#allocation6 + $0x608] sm:$0xff]
    %v1585 = vld [vmem:[#allocation6 + $0x610] sm:$0xff]
    %v1586 = vld [vmem:[#allocation6 + $0x618] sm:$0xff]
    %v1587 = vld [vmem:[#allocation6 + $0x620] sm:$0xff]
    %v1588 = vld [vmem:[#allocation6 + $0x628] sm:$0xff]
    %v1589 = vld [vmem:[#allocation6 + $0x630] sm:$0xff]
    %v1590 = vld [vmem:[#allocation6 + $0x638] sm:$0xff]
    %v1591 = vld [vmem:[#allocation6 + $0x640] sm:$0xff]
    %v1592 = vld [vmem:[#allocation6 + $0x648] sm:$0xff]
    %v1593 = vld [vmem:[#allocation6 + $0x650] sm:$0xff]
    %v1594 = vld [vmem:[#allocation6 + $0x658] sm:$0xff]
    %v1595 = vld [vmem:[#allocation6 + $0x660] sm:$0xff]
    %v1596 = vld [vmem:[#allocation6 + $0x668] sm:$0xff]
    %v1597 = vld [vmem:[#allocation6 + $0x670] sm:$0xff]
    %v1598 = vld [vmem:[#allocation6 + $0x678] sm:$0xff]
    %v1599 = vld [vmem:[#allocation6 + $0x680] sm:$0xff]
    %v1600 = vld [vmem:[#allocation6 + $0x688] sm:$0xff]
    %v1601 = vld [vmem:[#allocation6 + $0x690] sm:$0xff]
    %v1602 = vld [vmem:[#allocation6 + $0x698] sm:$0xff]
    %v1603 = vld [vmem:[#allocation6 + $0x6a0] sm:$0xff]
    %v1604 = vld [vmem:[#allocation6 + $0x6a8] sm:$0xff]
    %v1605 = vld [vmem:[#allocation6 + $0x6b0] sm:$0xff]
    %v1606 = vld [vmem:[#allocation6 + $0x6b8] sm:$0xff]
    %v1607 = vld [vmem:[#allocation6 + $0x6c0] sm:$0xff]
    %v1608 = vld [vmem:[#allocation6 + $0x6c8] sm:$0xff]
    %v1609 = vld [vmem:[#allocation6 + $0x6d0] sm:$0xff]
    %v1610 = vld [vmem:[#allocation6 + $0x6d8] sm:$0xff]
    %v1611 = vld [vmem:[#allocation6 + $0x6e0] sm:$0xff]
    %v1612 = vld [vmem:[#allocation6 + $0x6e8] sm:$0xff]
    %v1613 = vld [vmem:[#allocation6 + $0x6f0] sm:$0xff]
    %v1614 = vld [vmem:[#allocation6 + $0x6f8] sm:$0xff]
    %v1615 = vld [vmem:[#allocation6 + $0x700] sm:$0xff]
    %v1616 = vld [vmem:[#allocation6 + $0x708] sm:$0xff]
    %v1617 = vld [vmem:[#allocation6 + $0x710] sm:$0xff]
    %v1618 = vld [vmem:[#allocation6 + $0x718] sm:$0xff]
    %v1619 = vld [vmem:[#allocation6 + $0x720] sm:$0xff]
    %v1620 = vld [vmem:[#allocation6 + $0x728] sm:$0xff]
    %v1621 = vld [vmem:[#allocation6 + $0x730] sm:$0xff]
    %v1622 = vld [vmem:[#allocation6 + $0x738] sm:$0xff]
    %v1623 = vld [vmem:[#allocation6 + $0x740] sm:$0xff]
    %v1624 = vld [vmem:[#allocation6 + $0x748] sm:$0xff]
    %v1625 = vld [vmem:[#allocation6 + $0x750] sm:$0xff]
    %v1626 = vld [vmem:[#allocation6 + $0x758] sm:$0xff]
    %v1627 = vld [vmem:[#allocation6 + $0x760] sm:$0xff]
    %v1628 = vld [vmem:[#allocation6 + $0x768] sm:$0xff]
    %v1629 = vld [vmem:[#allocation6 + $0x770] sm:$0xff]
    %v1630 = vld [vmem:[#allocation6 + $0x778] sm:$0xff]
    %v1631 = vld [vmem:[#allocation6 + $0x780] sm:$0xff]
    %v1632 = vld [vmem:[#allocation6 + $0x788] sm:$0xff]
    %v1633 = vld [vmem:[#allocation6 + $0x790] sm:$0xff]
    %v1634 = vld [vmem:[#allocation6 + $0x798] sm:$0xff]
    %v1635 = vld [vmem:[#allocation6 + $0x7a0] sm:$0xff]
    %v1636 = vld [vmem:[#allocation6 + $0x7a8] sm:$0xff]
    %v1637 = vld [vmem:[#allocation6 + $0x7b0] sm:$0xff]
    %v1638 = vld [vmem:[#allocation6 + $0x7b8] sm:$0xff]
    %v1639 = vld [vmem:[#allocation6 + $0x7c0] sm:$0xff]
    %v1640 = vld [vmem:[#allocation6 + $0x7c8] sm:$0xff]
    %v1641 = vld [vmem:[#allocation6 + $0x7d0] sm:$0xff]
    %v1642 = vld [vmem:[#allocation6 + $0x7d8] sm:$0xff]
    %v1643 = vld [vmem:[#allocation6 + $0x7e0] sm:$0xff]
    %v1644 = vld [vmem:[#allocation6 + $0x7e8] sm:$0xff]
    %v1645 = vld [vmem:[#allocation6 + $0x7f0] sm:$0xff]
    %v1646 = vld [vmem:[#allocation6 + $0x7f8] sm:$0xff]
    %v1647 = vld [vmem:[#allocation6 + $0x800] sm:$0xff]
    %v1648 = vld [vmem:[#allocation6 + $0x808] sm:$0xff]
    %v1649 = vld [vmem:[#allocation6 + $0x810] sm:$0xff]
    %v1650 = vld [vmem:[#allocation6 + $0x818] sm:$0xff]
    %v1651 = vld [vmem:[#allocation6 + $0x820] sm:$0xff]
    %v1652 = vld [vmem:[#allocation6 + $0x828] sm:$0xff]
    %v1653 = vld [vmem:[#allocation6 + $0x830] sm:$0xff]
    %v1654 = vld [vmem:[#allocation6 + $0x838] sm:$0xff]
    %v1655 = vld [vmem:[#allocation6 + $0x840] sm:$0xff]
    %v1656 = vld [vmem:[#allocation6 + $0x848] sm:$0xff]
    %v1657 = vld [vmem:[#allocation6 + $0x850] sm:$0xff]
    %v1658 = vld [vmem:[#allocation6 + $0x858] sm:$0xff]
    %v1659 = vld [vmem:[#allocation6 + $0x860] sm:$0xff]
    %v1660 = vld [vmem:[#allocation6 + $0x868] sm:$0xff]
    %v1661 = vld [vmem:[#allocation6 + $0x870] sm:$0xff]
    %v1662 = vld [vmem:[#allocation6 + $0x878] sm:$0xff]
    %v1663 = vld [vmem:[#allocation6 + $0x880] sm:$0xff]
    %v1664 = vld [vmem:[#allocation6 + $0x888] sm:$0xff]
    %v1665 = vld [vmem:[#allocation6 + $0x890] sm:$0xff]
    %v1666 = vld [vmem:[#allocation6 + $0x898] sm:$0xff]
    %v1667 = vld [vmem:[#allocation6 + $0x8a0] sm:$0xff]
    %v1668 = vld [vmem:[#allocation6 + $0x8a8] sm:$0xff]
    %v1669 = vld [vmem:[#allocation6 + $0x8b0] sm:$0xff]
    %v1670 = vld [vmem:[#allocation6 + $0x8b8] sm:$0xff]
    %v1671 = vld [vmem:[#allocation6 + $0x8c0] sm:$0xff]
    %v1672 = vld [vmem:[#allocation6 + $0x8c8] sm:$0xff]
    %v1673 = vld [vmem:[#allocation6 + $0x8d0] sm:$0xff]
    %v1674 = vld [vmem:[#allocation6 + $0x8d8] sm:$0xff]
    %v1675 = vld [vmem:[#allocation6 + $0x8e0] sm:$0xff]
    %v1676 = vld [vmem:[#allocation6 + $0x8e8] sm:$0xff]
    %v1677 = vld [vmem:[#allocation6 + $0x8f0] sm:$0xff]
    %v1678 = vld [vmem:[#allocation6 + $0x8f8] sm:$0xff]
    %v1679 = vld [vmem:[#allocation6 + $0x900] sm:$0xff]
    %v1680 = vld [vmem:[#allocation6 + $0x908] sm:$0xff]
    %v1681 = vld [vmem:[#allocation6 + $0x910] sm:$0xff]
    %v1682 = vld [vmem:[#allocation6 + $0x918] sm:$0xff]
    %v1683 = vld [vmem:[#allocation6 + $0x920] sm:$0xff]
    %v1684 = vld [vmem:[#allocation6 + $0x928] sm:$0xff]
    %v1685 = vld [vmem:[#allocation6 + $0x930] sm:$0xff]
    %v1686 = vld [vmem:[#allocation6 + $0x938] sm:$0xff]
    %v1687 = vld [vmem:[#allocation6 + $0x940] sm:$0xff]
    %v1688 = vld [vmem:[#allocation6 + $0x948] sm:$0xff]
    %v1689 = vld [vmem:[#allocation6 + $0x950] sm:$0xff]
    %v1690 = vld [vmem:[#allocation6 + $0x958] sm:$0xff]
    %v1691 = vld [vmem:[#allocation6 + $0x960] sm:$0xff]
    %v1692 = vld [vmem:[#allocation6 + $0x968] sm:$0xff]
    %v1693 = vld [vmem:[#allocation6 + $0x970] sm:$0xff]
    %v1694 = vld [vmem:[#allocation6 + $0x978] sm:$0xff]
    %v1695 = vld [vmem:[#allocation6 + $0x980] sm:$0xff]
    %v1696 = vld [vmem:[#allocation6 + $0x988] sm:$0xff]
    %v1697 = vld [vmem:[#allocation6 + $0x990] sm:$0xff]
    %v1698 = vld [vmem:[#allocation6 + $0x998] sm:$0xff]
    %v1699 = vld [vmem:[#allocation6 + $0x9a0] sm:$0xff]
    %v1700 = vld [vmem:[#allocation6 + $0x9a8] sm:$0xff]
    %v1701 = vld [vmem:[#allocation6 + $0x9b0] sm:$0xff]
    %v1702 = vld [vmem:[#allocation6 + $0x9b8] sm:$0xff]
    %v1703 = vld [vmem:[#allocation6 + $0x9c0] sm:$0xff]
    %v1704 = vld [vmem:[#allocation6 + $0x9c8] sm:$0xff]
    %v1705 = vld [vmem:[#allocation6 + $0x9d0] sm:$0xff]
    %v1706 = vld [vmem:[#allocation6 + $0x9d8] sm:$0xff]
    %v1707 = vld [vmem:[#allocation6 + $0x9e0] sm:$0xff]
    %v1708 = vld [vmem:[#allocation6 + $0x9e8] sm:$0xff]
    %v1709 = vld [vmem:[#allocation6 + $0x9f0] sm:$0xff]
    %v1710 = vld [vmem:[#allocation6 + $0x9f8] sm:$0xff]
    %v1711 = vld [vmem:[#allocation6 + $0xa00] sm:$0xff]
    %v1712 = vld [vmem:[#allocation6 + $0xa08] sm:$0xff]
    %v1713 = vld [vmem:[#allocation6 + $0xa10] sm:$0xff]
    %v1714 = vld [vmem:[#allocation6 + $0xa18] sm:$0xff]
    %v1715 = vld [vmem:[#allocation6 + $0xa20] sm:$0xff]
    %v1716 = vld [vmem:[#allocation6 + $0xa28] sm:$0xff]
    %v1717 = vld [vmem:[#allocation6 + $0xa30] sm:$0xff]
    %v1718 = vld [vmem:[#allocation6 + $0xa38] sm:$0xff]
    %v1719 = vld [vmem:[#allocation6 + $0xa40] sm:$0xff]
    %v1720 = vld [vmem:[#allocation6 + $0xa48] sm:$0xff]
    %v1721 = vld [vmem:[#allocation6 + $0xa50] sm:$0xff]
    %v1722 = vld [vmem:[#allocation6 + $0xa58] sm:$0xff]
    %v1723 = vld [vmem:[#allocation6 + $0xa60] sm:$0xff]
    %v1724 = vld [vmem:[#allocation6 + $0xa68] sm:$0xff]
    %v1725 = vld [vmem:[#allocation6 + $0xa70] sm:$0xff]
    %v1726 = vld [vmem:[#allocation6 + $0xa78] sm:$0xff]
    %v1727 = vld [vmem:[#allocation6 + $0xa80] sm:$0xff]
    %v1728 = vld [vmem:[#allocation6 + $0xa88] sm:$0xff]
    %v1729 = vld [vmem:[#allocation6 + $0xa90] sm:$0xff]
    %v1730 = vld [vmem:[#allocation6 + $0xa98] sm:$0xff]
    %v1731 = vld [vmem:[#allocation6 + $0xaa0] sm:$0xff]
    %v1732 = vld [vmem:[#allocation6 + $0xaa8] sm:$0xff]
    %v1733 = vld [vmem:[#allocation6 + $0xab0] sm:$0xff]
    %v1734 = vld [vmem:[#allocation6 + $0xab8] sm:$0xff]
    %v1735 = vld [vmem:[#allocation6 + $0xac0] sm:$0xff]
    %v1736 = vld [vmem:[#allocation6 + $0xac8] sm:$0xff]
    %v1737 = vld [vmem:[#allocation6 + $0xad0] sm:$0xff]
    %v1738 = vld [vmem:[#allocation6 + $0xad8] sm:$0xff]
    %v1739 = vld [vmem:[#allocation6 + $0xae0] sm:$0xff]
    %v1740 = vld [vmem:[#allocation6 + $0xae8] sm:$0xff]
    %v1741 = vld [vmem:[#allocation6 + $0xaf0] sm:$0xff]
    %v1742 = vld [vmem:[#allocation6 + $0xaf8] sm:$0xff]
    %v1743 = vld [vmem:[#allocation6 + $0xb00] sm:$0xff]
    %v1744 = vld [vmem:[#allocation6 + $0xb08] sm:$0xff]
    %v1745 = vld [vmem:[#allocation6 + $0xb10] sm:$0xff]
    %v1746 = vld [vmem:[#allocation6 + $0xb18] sm:$0xff]
    %v1747 = vld [vmem:[#allocation6 + $0xb20] sm:$0xff]
    %v1748 = vld [vmem:[#allocation6 + $0xb28] sm:$0xff]
    %v1749 = vld [vmem:[#allocation6 + $0xb30] sm:$0xff]
    %v1750 = vld [vmem:[#allocation6 + $0xb38] sm:$0xff]
    %v1751 = vld [vmem:[#allocation6 + $0xb40] sm:$0xff]
    %v1752 = vld [vmem:[#allocation6 + $0xb48] sm:$0xff]
    %v1753 = vld [vmem:[#allocation6 + $0xb50] sm:$0xff]
    %v1754 = vld [vmem:[#allocation6 + $0xb58] sm:$0xff]
    %v1755 = vld [vmem:[#allocation6 + $0xb60] sm:$0xff]
    %v1756 = vld [vmem:[#allocation6 + $0xb68] sm:$0xff]
    %v1757 = vld [vmem:[#allocation6 + $0xb70] sm:$0xff]
    %v1758 = vld [vmem:[#allocation6 + $0xb78] sm:$0xff]
    %v1759 = vld [vmem:[#allocation6 + $0xb80] sm:$0xff]
    %v1760 = vld [vmem:[#allocation6 + $0xb88] sm:$0xff]
    %v1761 = vld [vmem:[#allocation6 + $0xb90] sm:$0xff]
    %v1762 = vld [vmem:[#allocation6 + $0xb98] sm:$0xff]
    %v1763 = vld [vmem:[#allocation6 + $0xba0] sm:$0xff]
    %v1764 = vld [vmem:[#allocation6 + $0xba8] sm:$0xff]
    %v1765 = vld [vmem:[#allocation6 + $0xbb0] sm:$0xff]
    %v1766 = vld [vmem:[#allocation6 + $0xbb8] sm:$0xff]
    %v1767 = vld [vmem:[#allocation6 + $0xbc0] sm:$0xff]
    %v1768 = vld [vmem:[#allocation6 + $0xbc8] sm:$0xff]
    %v1769 = vld [vmem:[#allocation6 + $0xbd0] sm:$0xff]
    %v1770 = vld [vmem:[#allocation6 + $0xbd8] sm:$0xff]
    %v1771 = vld [vmem:[#allocation6 + $0xbe0] sm:$0xff]
    %v1772 = vld [vmem:[#allocation6 + $0xbe8] sm:$0xff]
    %v1773 = vld [vmem:[#allocation6 + $0xbf0] sm:$0xff]
    %v1774 = vld [vmem:[#allocation6 + $0xbf8] sm:$0xff]
    %v1775 = vld [vmem:[#allocation6 + $0xc00] sm:$0xff]
    %v1776 = vld [vmem:[#allocation6 + $0xc08] sm:$0xff]
    %v1777 = vld [vmem:[#allocation6 + $0xc10] sm:$0xff]
    %v1778 = vld [vmem:[#allocation6 + $0xc18] sm:$0xff]
    %v1779 = vld [vmem:[#allocation6 + $0xc20] sm:$0xff]
    %v1780 = vld [vmem:[#allocation6 + $0xc28] sm:$0xff]
    %v1781 = vld [vmem:[#allocation6 + $0xc30] sm:$0xff]
    %v1782 = vld [vmem:[#allocation6 + $0xc38] sm:$0xff]
    %v1783 = vld [vmem:[#allocation6 + $0xc40] sm:$0xff]
    %v1784 = vld [vmem:[#allocation6 + $0xc48] sm:$0xff]
    %v1785 = vld [vmem:[#allocation6 + $0xc50] sm:$0xff]
    %v1786 = vld [vmem:[#allocation6 + $0xc58] sm:$0xff]
    %v1787 = vld [vmem:[#allocation6 + $0xc60] sm:$0xff]
    %v1788 = vld [vmem:[#allocation6 + $0xc68] sm:$0xff]
    %v1789 = vld [vmem:[#allocation6 + $0xc70] sm:$0xff]
    %v1790 = vld [vmem:[#allocation6 + $0xc78] sm:$0xff]
    %v1791 = vld [vmem:[#allocation6 + $0xc80] sm:$0xff]
    %v1792 = vld [vmem:[#allocation6 + $0xc88] sm:$0xff]
    %v1793 = vld [vmem:[#allocation6 + $0xc90] sm:$0xff]
    %v1794 = vld [vmem:[#allocation6 + $0xc98] sm:$0xff]
    %v1795 = vld [vmem:[#allocation6 + $0xca0] sm:$0xff]
    %v1796 = vld [vmem:[#allocation6 + $0xca8] sm:$0xff]
    %v1797 = vld [vmem:[#allocation6 + $0xcb0] sm:$0xff]
    %v1798 = vld [vmem:[#allocation6 + $0xcb8] sm:$0xff]
    %v1799 = vld [vmem:[#allocation6 + $0xcc0] sm:$0xff]
    %v1800 = vld [vmem:[#allocation6 + $0xcc8] sm:$0xff]
    %v1801 = vld [vmem:[#allocation6 + $0xcd0] sm:$0xff]
    %v1802 = vld [vmem:[#allocation6 + $0xcd8] sm:$0xff]
    %v1803 = vld [vmem:[#allocation6 + $0xce0] sm:$0xff]
    %v1804 = vld [vmem:[#allocation6 + $0xce8] sm:$0xff]
    %v1805 = vld [vmem:[#allocation6 + $0xcf0] sm:$0xff]
    %v1806 = vld [vmem:[#allocation6 + $0xcf8] sm:$0xff]
    %v1807 = vld [vmem:[#allocation6 + $0xd00] sm:$0xff]
    %v1808 = vld [vmem:[#allocation6 + $0xd08] sm:$0xff]
    %v1809 = vld [vmem:[#allocation6 + $0xd10] sm:$0xff]
    %v1810 = vld [vmem:[#allocation6 + $0xd18] sm:$0xff]
    %v1811 = vld [vmem:[#allocation6 + $0xd20] sm:$0xff]
    %v1812 = vld [vmem:[#allocation6 + $0xd28] sm:$0xff]
    %v1813 = vld [vmem:[#allocation6 + $0xd30] sm:$0xff]
    %v1814 = vld [vmem:[#allocation6 + $0xd38] sm:$0xff]
    %v1815 = vld [vmem:[#allocation6 + $0xd40] sm:$0xff]
    %v1816 = vld [vmem:[#allocation6 + $0xd48] sm:$0xff]
    %v1817 = vld [vmem:[#allocation6 + $0xd50] sm:$0xff]
    %v1818 = vld [vmem:[#allocation6 + $0xd58] sm:$0xff]
    %v1819 = vld [vmem:[#allocation6 + $0xd60] sm:$0xff]
    %v1820 = vld [vmem:[#allocation6 + $0xd68] sm:$0xff]
    %v1821 = vld [vmem:[#allocation6 + $0xd70] sm:$0xff]
    %v1822 = vld [vmem:[#allocation6 + $0xd78] sm:$0xff]
    %v1823 = vld [vmem:[#allocation6 + $0xd80] sm:$0xff]
    %v1824 = vld [vmem:[#allocation6 + $0xd88] sm:$0xff]
    %v1825 = vld [vmem:[#allocation6 + $0xd90] sm:$0xff]
    %v1826 = vld [vmem:[#allocation6 + $0xd98] sm:$0xff]
    %v1827 = vld [vmem:[#allocation6 + $0xda0] sm:$0xff]
    %v1828 = vld [vmem:[#allocation6 + $0xda8] sm:$0xff]
    %v1829 = vld [vmem:[#allocation6 + $0xdb0] sm:$0xff]
    %v1830 = vld [vmem:[#allocation6 + $0xdb8] sm:$0xff]
    %v1831 = vld [vmem:[#allocation6 + $0xdc0] sm:$0xff]
    %v1832 = vld [vmem:[#allocation6 + $0xdc8] sm:$0xff]
    %v1833 = vld [vmem:[#allocation6 + $0xdd0] sm:$0xff]
    %v1834 = vld [vmem:[#allocation6 + $0xdd8] sm:$0xff]
    %v1835 = vld [vmem:[#allocation6 + $0xde0] sm:$0xff]
    %v1836 = vld [vmem:[#allocation6 + $0xde8] sm:$0xff]
    %v1837 = vld [vmem:[#allocation6 + $0xdf0] sm:$0xff]
    %v1838 = vld [vmem:[#allocation6 + $0xdf8] sm:$0xff]
    %v1839 = vld [vmem:[#allocation6 + $0xe00] sm:$0xff]
    %v1840 = vld [vmem:[#allocation6 + $0xe08] sm:$0xff]
    %v1841 = vld [vmem:[#allocation6 + $0xe10] sm:$0xff]
    %v1842 = vld [vmem:[#allocation6 + $0xe18] sm:$0xff]
    %v1843 = vld [vmem:[#allocation6 + $0xe20] sm:$0xff]
    %v1844 = vld [vmem:[#allocation6 + $0xe28] sm:$0xff]
    %v1845 = vld [vmem:[#allocation6 + $0xe30] sm:$0xff]
    %v1846 = vld [vmem:[#allocation6 + $0xe38] sm:$0xff]
    %v1847 = vld [vmem:[#allocation6 + $0xe40] sm:$0xff]
    %v1848 = vld [vmem:[#allocation6 + $0xe48] sm:$0xff]
    %v1849 = vld [vmem:[#allocation6 + $0xe50] sm:$0xff]
    %v1850 = vld [vmem:[#allocation6 + $0xe58] sm:$0xff]
    %v1851 = vld [vmem:[#allocation6 + $0xe60] sm:$0xff]
    %v1852 = vld [vmem:[#allocation6 + $0xe68] sm:$0xff]
    %v1853 = vld [vmem:[#allocation6 + $0xe70] sm:$0xff]
    %v1854 = vld [vmem:[#allocation6 + $0xe78] sm:$0xff]
    %v1855 = vld [vmem:[#allocation6 + $0xe80] sm:$0xff]
    %v1856 = vld [vmem:[#allocation6 + $0xe88] sm:$0xff]
    %v1857 = vld [vmem:[#allocation6 + $0xe90] sm:$0xff]
    %v1858 = vld [vmem:[#allocation6 + $0xe98] sm:$0xff]
    %v1859 = vld [vmem:[#allocation6 + $0xea0] sm:$0xff]
    %v1860 = vld [vmem:[#allocation6 + $0xea8] sm:$0xff]
    %v1861 = vld [vmem:[#allocation6 + $0xeb0] sm:$0xff]
    %v1862 = vld [vmem:[#allocation6 + $0xeb8] sm:$0xff]
    %v1863 = vld [vmem:[#allocation6 + $0xec0] sm:$0xff]
    %v1864 = vld [vmem:[#allocation6 + $0xec8] sm:$0xff]
    %v1865 = vld [vmem:[#allocation6 + $0xed0] sm:$0xff]
    %v1866 = vld [vmem:[#allocation6 + $0xed8] sm:$0xff]
    %v1867 = vld [vmem:[#allocation6 + $0xee0] sm:$0xff]
    %v1868 = vld [vmem:[#allocation6 + $0xee8] sm:$0xff]
    %v1869 = vld [vmem:[#allocation6 + $0xef0] sm:$0xff]
    %v1870 = vld [vmem:[#allocation6 + $0xef8] sm:$0xff]
    %v1871 = vld [vmem:[#allocation6 + $0xf00] sm:$0xff]
    %v1872 = vld [vmem:[#allocation6 + $0xf08] sm:$0xff]
    %v1873 = vld [vmem:[#allocation6 + $0xf10] sm:$0xff]
    %v1874 = vld [vmem:[#allocation6 + $0xf18] sm:$0xff]
    %v1875 = vld [vmem:[#allocation6 + $0xf20] sm:$0xff]
    %v1876 = vld [vmem:[#allocation6 + $0xf28] sm:$0xff]
    %v1877 = vld [vmem:[#allocation6 + $0xf30] sm:$0xff]
    %v1878 = vld [vmem:[#allocation6 + $0xf38] sm:$0xff]
    %v1879 = vld [vmem:[#allocation6 + $0xf40] sm:$0xff]
    %v1880 = vld [vmem:[#allocation6 + $0xf48] sm:$0xff]
    %v1881 = vld [vmem:[#allocation6 + $0xf50] sm:$0xff]
    %v1882 = vld [vmem:[#allocation6 + $0xf58] sm:$0xff]
    %v1883 = vld [vmem:[#allocation6 + $0xf60] sm:$0xff]
    %v1884 = vld [vmem:[#allocation6 + $0xf68] sm:$0xff]
    %v1885 = vld [vmem:[#allocation6 + $0xf70] sm:$0xff]
    %v1886 = vld [vmem:[#allocation6 + $0xf78] sm:$0xff]
    %v1887 = vld [vmem:[#allocation6 + $0xf80] sm:$0xff]
    %v1888 = vld [vmem:[#allocation6 + $0xf88] sm:$0xff]
    %v1889 = vld [vmem:[#allocation6 + $0xf90] sm:$0xff]
    %v1890 = vld [vmem:[#allocation6 + $0xf98] sm:$0xff]
    %v1891 = vld [vmem:[#allocation6 + $0xfa0] sm:$0xff]
    %v1892 = vld [vmem:[#allocation6 + $0xfa8] sm:$0xff]
    %v1893 = vld [vmem:[#allocation6 + $0xfb0] sm:$0xff]
    %v1894 = vld [vmem:[#allocation6 + $0xfb8] sm:$0xff]
    %v1895 = vld [vmem:[#allocation6 + $0xfc0] sm:$0xff]
    %v1896 = vld [vmem:[#allocation6 + $0xfc8] sm:$0xff]
    %v1897 = vld [vmem:[#allocation6 + $0xfd0] sm:$0xff]
    %v1898 = vld [vmem:[#allocation6 + $0xfd8] sm:$0xff]
    %v1899 = vld [vmem:[#allocation6 + $0xfe0] sm:$0xff]
    %v1900 = vld [vmem:[#allocation6 + $0xfe8] sm:$0xff]
    %v1901 = vld [vmem:[#allocation6 + $0xff0] sm:$0xff]
    %v1902 = vld [vmem:[#allocation6 + $0xff8] sm:$0xff]
    %v1903 = vld [vmem:[#allocation19] sm:$0xf]
    %v1905 = vperm.slane %v1903, 0
    %v1906 = vperm.slane %v1903, 1
    %v1907 = vperm.slane %v1903, 2
    %v1908 = vperm.slane %v1903, 3
    %1913 = vmatpush.msra.mxu0 %v1451
    %1914 = vmatpush.msra.mxu0 %v1447
    %1915 = vmatpush.msra.mxu0 %v1443
    %1916 = vmatpush.msra.mxu0 %v1439
    %1917 = vmatpush.msra.mxu0 %v1435
    %1918 = vmatpush.msra.mxu0 %v1431
    %1919 = vmatpush.msra.mxu0 %v1427
    %1920 = vmatpush.msra.mxu0 %v1423
    %1921 = vmatpush.msra.mxu0 %v1419
    %1922 = vmatpush.msra.mxu0 %v1415
    %1923 = vmatpush.msra.mxu0 %v1411
    %1924 = vmatpush.msra.mxu0 %v1407
    %1925 = vmatpush.msra.mxu0 %v1403
    %1926 = vmatpush.msra.mxu0 %v1399
    %1927 = vmatpush.msra.mxu0 %v1395
    %1928 = vmatpush.msra.mxu0 %v1391
    %1929 = vmatmul.f32.gmra.mxu0 %v1379
    %v1930 = vpop.f32.mrf.mxu0
    %v1931 = vadd.f32 %v1905, %v1930
    %1932 = vdwg.mxu0
    %1933 = vmatpush.msra.mxu0 %v1515
    %1934 = vmatpush.msra.mxu0 %v1511
    %1935 = vmatpush.msra.mxu0 %v1507
    %1936 = vmatpush.msra.mxu0 %v1503
    %1937 = vmatpush.msra.mxu0 %v1499
    %1938 = vmatpush.msra.mxu0 %v1495
    %1939 = vmatpush.msra.mxu0 %v1491
    %1940 = vmatpush.msra.mxu0 %v1487
    %1941 = vmatpush.msra.mxu0 %v1483
    %1942 = vmatpush.msra.mxu0 %v1479
    %1943 = vmatpush.msra.mxu0 %v1475
    %1944 = vmatpush.msra.mxu0 %v1471
    %1945 = vmatpush.msra.mxu0 %v1467
    %1946 = vmatpush.msra.mxu0 %v1463
    %1947 = vmatpush.msra.mxu0 %v1459
    %1948 = vmatpush.msra.mxu0 %v1455
    %1949 = vmatmul.f32.gmra.mxu0 %v1380
    %v1950 = vpop.f32.mrf.mxu0
    %v1951 = vadd.f32 %v1931, %v1950
    %1952 = vdwg.mxu0
    %1953 = vmatpush.msra.mxu0 %v1579
    %1954 = vmatpush.msra.mxu0 %v1575
    %1955 = vmatpush.msra.mxu0 %v1571
    %1956 = vmatpush.msra.mxu0 %v1567
    %1957 = vmatpush.msra.mxu0 %v1563
    %1958 = vmatpush.msra.mxu0 %v1559
    %1959 = vmatpush.msra.mxu0 %v1555
    %1960 = vmatpush.msra.mxu0 %v1551
    %1961 = vmatpush.msra.mxu0 %v1547
    %1962 = vmatpush.msra.mxu0 %v1543
    %1963 = vmatpush.msra.mxu0 %v1539
    %1964 = vmatpush.msra.mxu0 %v1535
    %1965 = vmatpush.msra.mxu0 %v1531
    %1966 = vmatpush.msra.mxu0 %v1527
    %1967 = vmatpush.msra.mxu0 %v1523
    %1968 = vmatpush.msra.mxu0 %v1519
    %1969 = vmatmul.f32.gmra.mxu0 %v1381
    %v1970 = vpop.f32.mrf.mxu0
    %v1971 = vadd.f32 %v1951, %v1970
    %1972 = vdwg.mxu0
    %1973 = vmatpush.msra.mxu0 %v1643
    %1974 = vmatpush.msra.mxu0 %v1639
    %1975 = vmatpush.msra.mxu0 %v1635
    %1976 = vmatpush.msra.mxu0 %v1631
    %1977 = vmatpush.msra.mxu0 %v1627
    %1978 = vmatpush.msra.mxu0 %v1623
    %1979 = vmatpush.msra.mxu0 %v1619
    %1980 = vmatpush.msra.mxu0 %v1615
    %1981 = vmatpush.msra.mxu0 %v1611
    %1982 = vmatpush.msra.mxu0 %v1607
    %1983 = vmatpush.msra.mxu0 %v1603
    %1984 = vmatpush.msra.mxu0 %v1599
    %1985 = vmatpush.msra.mxu0 %v1595
    %1986 = vmatpush.msra.mxu0 %v1591
    %1987 = vmatpush.msra.mxu0 %v1587
    %1988 = vmatpush.msra.mxu0 %v1583
    %1989 = vmatmul.f32.gmra.mxu0 %v1382
    %v1990 = vpop.f32.mrf.mxu0
    %v1991 = vadd.f32 %v1971, %v1990
    %1992 = vdwg.mxu0
    %1993 = vmatpush.msra.mxu0 %v1707
    %1994 = vmatpush.msra.mxu0 %v1703
    %1995 = vmatpush.msra.mxu0 %v1699
    %1996 = vmatpush.msra.mxu0 %v1695
    %1997 = vmatpush.msra.mxu0 %v1691
    %1998 = vmatpush.msra.mxu0 %v1687
    %1999 = vmatpush.msra.mxu0 %v1683
    %2000 = vmatpush.msra.mxu0 %v1679
    %2001 = vmatpush.msra.mxu0 %v1675
    %2002 = vmatpush.msra.mxu0 %v1671
    %2003 = vmatpush.msra.mxu0 %v1667
    %2004 = vmatpush.msra.mxu0 %v1663
    %2005 = vmatpush.msra.mxu0 %v1659
    %2006 = vmatpush.msra.mxu0 %v1655
    %2007 = vmatpush.msra.mxu0 %v1651
    %2008 = vmatpush.msra.mxu0 %v1647
    %2009 = vmatmul.f32.gmra.mxu0 %v1383
    %v2010 = vpop.f32.mrf.mxu0
    %v2011 = vadd.f32 %v1991, %v2010
    %2012 = vdwg.mxu0
    %2013 = vmatpush.msra.mxu0 %v1771
    %2014 = vmatpush.msra.mxu0 %v1767
    %2015 = vmatpush.msra.mxu0 %v1763
    %2016 = vmatpush.msra.mxu0 %v1759
    %2017 = vmatpush.msra.mxu0 %v1755
    %2018 = vmatpush.msra.mxu0 %v1751
    %2019 = vmatpush.msra.mxu0 %v1747
    %2020 = vmatpush.msra.mxu0 %v1743
    %2021 = vmatpush.msra.mxu0 %v1739
    %2022 = vmatpush.msra.mxu0 %v1735
    %2023 = vmatpush.msra.mxu0 %v1731
    %2024 = vmatpush.msra.mxu0 %v1727
    %2025 = vmatpush.msra.mxu0 %v1723
    %2026 = vmatpush.msra.mxu0 %v1719
    %2027 = vmatpush.msra.mxu0 %v1715
    %2028 = vmatpush.msra.mxu0 %v1711
    %2029 = vmatmul.f32.gmra.mxu0 %v1384
    %v2030 = vpop.f32.mrf.mxu0
    %v2031 = vadd.f32 %v2011, %v2030
    %2032 = vdwg.mxu0
    %2033 = vmatpush.msra.mxu0 %v1835
    %2034 = vmatpush.msra.mxu0 %v1831
    %2035 = vmatpush.msra.mxu0 %v1827
    %2036 = vmatpush.msra.mxu0 %v1823
    %2037 = vmatpush.msra.mxu0 %v1819
    %2038 = vmatpush.msra.mxu0 %v1815
    %2039 = vmatpush.msra.mxu0 %v1811
    %2040 = vmatpush.msra.mxu0 %v1807
    %2041 = vmatpush.msra.mxu0 %v1803
    %2042 = vmatpush.msra.mxu0 %v1799
    %2043 = vmatpush.msra.mxu0 %v1795
    %2044 = vmatpush.msra.mxu0 %v1791
    %2045 = vmatpush.msra.mxu0 %v1787
    %2046 = vmatpush.msra.mxu0 %v1783
    %2047 = vmatpush.msra.mxu0 %v1779
    %2048 = vmatpush.msra.mxu0 %v1775
    %2049 = vmatmul.f32.gmra.mxu0 %v1385
    %v2050 = vpop.f32.mrf.mxu0
    %v2051 = vadd.f32 %v2031, %v2050
    %2052 = vdwg.mxu0
    %2053 = vmatpush.msra.mxu0 %v1899
    %2054 = vmatpush.msra.mxu0 %v1895
    %2055 = vmatpush.msra.mxu0 %v1891
    %2056 = vmatpush.msra.mxu0 %v1887
    %2057 = vmatpush.msra.mxu0 %v1883
    %2058 = vmatpush.msra.mxu0 %v1879
    %2059 = vmatpush.msra.mxu0 %v1875
    %2060 = vmatpush.msra.mxu0 %v1871
    %2061 = vmatpush.msra.mxu0 %v1867
    %2062 = vmatpush.msra.mxu0 %v1863
    %2063 = vmatpush.msra.mxu0 %v1859
    %2064 = vmatpush.msra.mxu0 %v1855
    %2065 = vmatpush.msra.mxu0 %v1851
    %2066 = vmatpush.msra.mxu0 %v1847
    %2067 = vmatpush.msra.mxu0 %v1843
    %2068 = vmatpush.msra.mxu0 %v1839
    %2069 = vmatmul.f32.gmra.mxu0 %v1386
    %v2070 = vpop.f32.mrf.mxu0
    %v2071 = vadd.f32 %v2051, %v2070
    %2072 = vdwg.mxu0
    %2073 = vmatpush.msra.mxu0 %v1452
    %2074 = vmatpush.msra.mxu0 %v1448
    %2075 = vmatpush.msra.mxu0 %v1444
    %2076 = vmatpush.msra.mxu0 %v1440
    %2077 = vmatpush.msra.mxu0 %v1436
    %2078 = vmatpush.msra.mxu0 %v1432
    %2079 = vmatpush.msra.mxu0 %v1428
    %2080 = vmatpush.msra.mxu0 %v1424
    %2081 = vmatpush.msra.mxu0 %v1420
    %2082 = vmatpush.msra.mxu0 %v1416
    %2083 = vmatpush.msra.mxu0 %v1412
    %2084 = vmatpush.msra.mxu0 %v1408
    %2085 = vmatpush.msra.mxu0 %v1404
    %2086 = vmatpush.msra.mxu0 %v1400
    %2087 = vmatpush.msra.mxu0 %v1396
    %2088 = vmatpush.msra.mxu0 %v1392
    %2089 = vmatmul.f32.gmra.mxu0 %v1379
    %v2090 = vpop.f32.mrf.mxu0
    %v2091 = vadd.f32 %v1906, %v2090
    %2092 = vdwg.mxu0
    %2093 = vmatpush.msra.mxu0 %v1516
    %2094 = vmatpush.msra.mxu0 %v1512
    %2095 = vmatpush.msra.mxu0 %v1508
    %2096 = vmatpush.msra.mxu0 %v1504
    %2097 = vmatpush.msra.mxu0 %v1500
    %2098 = vmatpush.msra.mxu0 %v1496
    %2099 = vmatpush.msra.mxu0 %v1492
    %2100 = vmatpush.msra.mxu0 %v1488
    %2101 = vmatpush.msra.mxu0 %v1484
    %2102 = vmatpush.msra.mxu0 %v1480
    %2103 = vmatpush.msra.mxu0 %v1476
    %2104 = vmatpush.msra.mxu0 %v1472
    %2105 = vmatpush.msra.mxu0 %v1468
    %2106 = vmatpush.msra.mxu0 %v1464
    %2107 = vmatpush.msra.mxu0 %v1460
    %2108 = vmatpush.msra.mxu0 %v1456
    %2109 = vmatmul.f32.gmra.mxu0 %v1380
    %v2110 = vpop.f32.mrf.mxu0
    %v2111 = vadd.f32 %v2091, %v2110
    %2112 = vdwg.mxu0
    %2113 = vmatpush.msra.mxu0 %v1580
    %2114 = vmatpush.msra.mxu0 %v1576
    %2115 = vmatpush.msra.mxu0 %v1572
    %2116 = vmatpush.msra.mxu0 %v1568
    %2117 = vmatpush.msra.mxu0 %v1564
    %2118 = vmatpush.msra.mxu0 %v1560
    %2119 = vmatpush.msra.mxu0 %v1556
    %2120 = vmatpush.msra.mxu0 %v1552
    %2121 = vmatpush.msra.mxu0 %v1548
    %2122 = vmatpush.msra.mxu0 %v1544
    %2123 = vmatpush.msra.mxu0 %v1540
    %2124 = vmatpush.msra.mxu0 %v1536
    %2125 = vmatpush.msra.mxu0 %v1532
    %2126 = vmatpush.msra.mxu0 %v1528
    %2127 = vmatpush.msra.mxu0 %v1524
    %2128 = vmatpush.msra.mxu0 %v1520
    %2129 = vmatmul.f32.gmra.mxu0 %v1381
    %v2130 = vpop.f32.mrf.mxu0
    %v2131 = vadd.f32 %v2111, %v2130
    %2132 = vdwg.mxu0
    %2133 = vmatpush.msra.mxu0 %v1644
    %2134 = vmatpush.msra.mxu0 %v1640
    %2135 = vmatpush.msra.mxu0 %v1636
    %2136 = vmatpush.msra.mxu0 %v1632
    %2137 = vmatpush.msra.mxu0 %v1628
    %2138 = vmatpush.msra.mxu0 %v1624
    %2139 = vmatpush.msra.mxu0 %v1620
    %2140 = vmatpush.msra.mxu0 %v1616
    %2141 = vmatpush.msra.mxu0 %v1612
    %2142 = vmatpush.msra.mxu0 %v1608
    %2143 = vmatpush.msra.mxu0 %v1604
    %2144 = vmatpush.msra.mxu0 %v1600
    %2145 = vmatpush.msra.mxu0 %v1596
    %2146 = vmatpush.msra.mxu0 %v1592
    %2147 = vmatpush.msra.mxu0 %v1588
    %2148 = vmatpush.msra.mxu0 %v1584
    %2149 = vmatmul.f32.gmra.mxu0 %v1382
    %v2150 = vpop.f32.mrf.mxu0
    %v2151 = vadd.f32 %v2131, %v2150
    %2152 = vdwg.mxu0
    %2153 = vmatpush.msra.mxu0 %v1708
    %2154 = vmatpush.msra.mxu0 %v1704
    %2155 = vmatpush.msra.mxu0 %v1700
    %2156 = vmatpush.msra.mxu0 %v1696
    %2157 = vmatpush.msra.mxu0 %v1692
    %2158 = vmatpush.msra.mxu0 %v1688
    %2159 = vmatpush.msra.mxu0 %v1684
    %2160 = vmatpush.msra.mxu0 %v1680
    %2161 = vmatpush.msra.mxu0 %v1676
    %2162 = vmatpush.msra.mxu0 %v1672
    %2163 = vmatpush.msra.mxu0 %v1668
    %2164 = vmatpush.msra.mxu0 %v1664
    %2165 = vmatpush.msra.mxu0 %v1660
    %2166 = vmatpush.msra.mxu0 %v1656
    %2167 = vmatpush.msra.mxu0 %v1652
    %2168 = vmatpush.msra.mxu0 %v1648
    %2169 = vmatmul.f32.gmra.mxu0 %v1383
    %v2170 = vpop.f32.mrf.mxu0
    %v2171 = vadd.f32 %v2151, %v2170
    %2172 = vdwg.mxu0
    %2173 = vmatpush.msra.mxu0 %v1772
    %2174 = vmatpush.msra.mxu0 %v1768
    %2175 = vmatpush.msra.mxu0 %v1764
    %2176 = vmatpush.msra.mxu0 %v1760
    %2177 = vmatpush.msra.mxu0 %v1756
    %2178 = vmatpush.msra.mxu0 %v1752
    %2179 = vmatpush.msra.mxu0 %v1748
    %2180 = vmatpush.msra.mxu0 %v1744
    %2181 = vmatpush.msra.mxu0 %v1740
    %2182 = vmatpush.msra.mxu0 %v1736
    %2183 = vmatpush.msra.mxu0 %v1732
    %2184 = vmatpush.msra.mxu0 %v1728
    %2185 = vmatpush.msra.mxu0 %v1724
    %2186 = vmatpush.msra.mxu0 %v1720
    %2187 = vmatpush.msra.mxu0 %v1716
    %2188 = vmatpush.msra.mxu0 %v1712
    %2189 = vmatmul.f32.gmra.mxu0 %v1384
    %v2190 = vpop.f32.mrf.mxu0
    %v2191 = vadd.f32 %v2171, %v2190
    %2192 = vdwg.mxu0
    %2193 = vmatpush.msra.mxu0 %v1836
    %2194 = vmatpush.msra.mxu0 %v1832
    %2195 = vmatpush.msra.mxu0 %v1828
    %2196 = vmatpush.msra.mxu0 %v1824
    %2197 = vmatpush.msra.mxu0 %v1820
    %2198 = vmatpush.msra.mxu0 %v1816
    %2199 = vmatpush.msra.mxu0 %v1812
    %2200 = vmatpush.msra.mxu0 %v1808
    %2201 = vmatpush.msra.mxu0 %v1804
    %2202 = vmatpush.msra.mxu0 %v1800
    %2203 = vmatpush.msra.mxu0 %v1796
    %2204 = vmatpush.msra.mxu0 %v1792
    %2205 = vmatpush.msra.mxu0 %v1788
    %2206 = vmatpush.msra.mxu0 %v1784
    %2207 = vmatpush.msra.mxu0 %v1780
    %2208 = vmatpush.msra.mxu0 %v1776
    %2209 = vmatmul.f32.gmra.mxu0 %v1385
    %v2210 = vpop.f32.mrf.mxu0
    %v2211 = vadd.f32 %v2191, %v2210
    %2212 = vdwg.mxu0
    %2213 = vmatpush.msra.mxu0 %v1900
    %2214 = vmatpush.msra.mxu0 %v1896
    %2215 = vmatpush.msra.mxu0 %v1892
    %2216 = vmatpush.msra.mxu0 %v1888
    %2217 = vmatpush.msra.mxu0 %v1884
    %2218 = vmatpush.msra.mxu0 %v1880
    %2219 = vmatpush.msra.mxu0 %v1876
    %2220 = vmatpush.msra.mxu0 %v1872
    %2221 = vmatpush.msra.mxu0 %v1868
    %2222 = vmatpush.msra.mxu0 %v1864
    %2223 = vmatpush.msra.mxu0 %v1860
    %2224 = vmatpush.msra.mxu0 %v1856
    %2225 = vmatpush.msra.mxu0 %v1852
    %2226 = vmatpush.msra.mxu0 %v1848
    %2227 = vmatpush.msra.mxu0 %v1844
    %2228 = vmatpush.msra.mxu0 %v1840
    %2229 = vmatmul.f32.gmra.mxu0 %v1386
    %v2230 = vpop.f32.mrf.mxu0
    %v2231 = vadd.f32 %v2211, %v2230
    %2232 = vdwg.mxu0
    %2233 = vmatpush.msra.mxu0 %v1453
    %2234 = vmatpush.msra.mxu0 %v1449
    %2235 = vmatpush.msra.mxu0 %v1445
    %2236 = vmatpush.msra.mxu0 %v1441
    %2237 = vmatpush.msra.mxu0 %v1437
    %2238 = vmatpush.msra.mxu0 %v1433
    %2239 = vmatpush.msra.mxu0 %v1429
    %2240 = vmatpush.msra.mxu0 %v1425
    %2241 = vmatpush.msra.mxu0 %v1421
    %2242 = vmatpush.msra.mxu0 %v1417
    %2243 = vmatpush.msra.mxu0 %v1413
    %2244 = vmatpush.msra.mxu0 %v1409
    %2245 = vmatpush.msra.mxu0 %v1405
    %2246 = vmatpush.msra.mxu0 %v1401
    %2247 = vmatpush.msra.mxu0 %v1397
    %2248 = vmatpush.msra.mxu0 %v1393
    %2249 = vmatmul.f32.gmra.mxu0 %v1379
    %v2250 = vpop.f32.mrf.mxu0
    %v2251 = vadd.f32 %v1907, %v2250
    %2252 = vdwg.mxu0
    %2253 = vmatpush.msra.mxu0 %v1517
    %2254 = vmatpush.msra.mxu0 %v1513
    %2255 = vmatpush.msra.mxu0 %v1509
    %2256 = vmatpush.msra.mxu0 %v1505
    %2257 = vmatpush.msra.mxu0 %v1501
    %2258 = vmatpush.msra.mxu0 %v1497
    %2259 = vmatpush.msra.mxu0 %v1493
    %2260 = vmatpush.msra.mxu0 %v1489
    %2261 = vmatpush.msra.mxu0 %v1485
    %2262 = vmatpush.msra.mxu0 %v1481
    %2263 = vmatpush.msra.mxu0 %v1477
    %2264 = vmatpush.msra.mxu0 %v1473
    %2265 = vmatpush.msra.mxu0 %v1469
    %2266 = vmatpush.msra.mxu0 %v1465
    %2267 = vmatpush.msra.mxu0 %v1461
    %2268 = vmatpush.msra.mxu0 %v1457
    %2269 = vmatmul.f32.gmra.mxu0 %v1380
    %v2270 = vpop.f32.mrf.mxu0
    %v2271 = vadd.f32 %v2251, %v2270
    %2272 = vdwg.mxu0
    %2273 = vmatpush.msra.mxu0 %v1581
    %2274 = vmatpush.msra.mxu0 %v1577
    %2275 = vmatpush.msra.mxu0 %v1573
    %2276 = vmatpush.msra.mxu0 %v1569
    %2277 = vmatpush.msra.mxu0 %v1565
    %2278 = vmatpush.msra.mxu0 %v1561
    %2279 = vmatpush.msra.mxu0 %v1557
    %2280 = vmatpush.msra.mxu0 %v1553
    %2281 = vmatpush.msra.mxu0 %v1549
    %2282 = vmatpush.msra.mxu0 %v1545
    %2283 = vmatpush.msra.mxu0 %v1541
    %2284 = vmatpush.msra.mxu0 %v1537
    %2285 = vmatpush.msra.mxu0 %v1533
    %2286 = vmatpush.msra.mxu0 %v1529
    %2287 = vmatpush.msra.mxu0 %v1525
    %2288 = vmatpush.msra.mxu0 %v1521
    %2289 = vmatmul.f32.gmra.mxu0 %v1381
    %v2290 = vpop.f32.mrf.mxu0
    %v2291 = vadd.f32 %v2271, %v2290
    %2292 = vdwg.mxu0
    %2293 = vmatpush.msra.mxu0 %v1645
    %2294 = vmatpush.msra.mxu0 %v1641
    %2295 = vmatpush.msra.mxu0 %v1637
    %2296 = vmatpush.msra.mxu0 %v1633
    %2297 = vmatpush.msra.mxu0 %v1629
    %2298 = vmatpush.msra.mxu0 %v1625
    %2299 = vmatpush.msra.mxu0 %v1621
    %2300 = vmatpush.msra.mxu0 %v1617
    %2301 = vmatpush.msra.mxu0 %v1613
    %2302 = vmatpush.msra.mxu0 %v1609
    %2303 = vmatpush.msra.mxu0 %v1605
    %2304 = vmatpush.msra.mxu0 %v1601
    %2305 = vmatpush.msra.mxu0 %v1597
    %2306 = vmatpush.msra.mxu0 %v1593
    %2307 = vmatpush.msra.mxu0 %v1589
    %2308 = vmatpush.msra.mxu0 %v1585
    %2309 = vmatmul.f32.gmra.mxu0 %v1382
    %v2310 = vpop.f32.mrf.mxu0
    %v2311 = vadd.f32 %v2291, %v2310
    %2312 = vdwg.mxu0
    %2313 = vmatpush.msra.mxu0 %v1709
    %2314 = vmatpush.msra.mxu0 %v1705
    %2315 = vmatpush.msra.mxu0 %v1701
    %2316 = vmatpush.msra.mxu0 %v1697
    %2317 = vmatpush.msra.mxu0 %v1693
    %2318 = vmatpush.msra.mxu0 %v1689
    %2319 = vmatpush.msra.mxu0 %v1685
    %2320 = vmatpush.msra.mxu0 %v1681
    %2321 = vmatpush.msra.mxu0 %v1677
    %2322 = vmatpush.msra.mxu0 %v1673
    %2323 = vmatpush.msra.mxu0 %v1669
    %2324 = vmatpush.msra.mxu0 %v1665
    %2325 = vmatpush.msra.mxu0 %v1661
    %2326 = vmatpush.msra.mxu0 %v1657
    %2327 = vmatpush.msra.mxu0 %v1653
    %2328 = vmatpush.msra.mxu0 %v1649
    %2329 = vmatmul.f32.gmra.mxu0 %v1383
    %v2330 = vpop.f32.mrf.mxu0
    %v2331 = vadd.f32 %v2311, %v2330
    %2332 = vdwg.mxu0
    %2333 = vmatpush.msra.mxu0 %v1773
    %2334 = vmatpush.msra.mxu0 %v1769
    %2335 = vmatpush.msra.mxu0 %v1765
    %2336 = vmatpush.msra.mxu0 %v1761
    %2337 = vmatpush.msra.mxu0 %v1757
    %2338 = vmatpush.msra.mxu0 %v1753
    %2339 = vmatpush.msra.mxu0 %v1749
    %2340 = vmatpush.msra.mxu0 %v1745
    %2341 = vmatpush.msra.mxu0 %v1741
    %2342 = vmatpush.msra.mxu0 %v1737
    %2343 = vmatpush.msra.mxu0 %v1733
    %2344 = vmatpush.msra.mxu0 %v1729
    %2345 = vmatpush.msra.mxu0 %v1725
    %2346 = vmatpush.msra.mxu0 %v1721
    %2347 = vmatpush.msra.mxu0 %v1717
    %2348 = vmatpush.msra.mxu0 %v1713
    %2349 = vmatmul.f32.gmra.mxu0 %v1384
    %v2350 = vpop.f32.mrf.mxu0
    %v2351 = vadd.f32 %v2331, %v2350
    %2352 = vdwg.mxu0
    %2353 = vmatpush.msra.mxu0 %v1837
    %2354 = vmatpush.msra.mxu0 %v1833
    %2355 = vmatpush.msra.mxu0 %v1829
    %2356 = vmatpush.msra.mxu0 %v1825
    %2357 = vmatpush.msra.mxu0 %v1821
    %2358 = vmatpush.msra.mxu0 %v1817
    %2359 = vmatpush.msra.mxu0 %v1813
    %2360 = vmatpush.msra.mxu0 %v1809
    %2361 = vmatpush.msra.mxu0 %v1805
    %2362 = vmatpush.msra.mxu0 %v1801
    %2363 = vmatpush.msra.mxu0 %v1797
    %2364 = vmatpush.msra.mxu0 %v1793
    %2365 = vmatpush.msra.mxu0 %v1789
    %2366 = vmatpush.msra.mxu0 %v1785
    %2367 = vmatpush.msra.mxu0 %v1781
    %2368 = vmatpush.msra.mxu0 %v1777
    %2369 = vmatmul.f32.gmra.mxu0 %v1385
    %v2370 = vpop.f32.mrf.mxu0
    %v2371 = vadd.f32 %v2351, %v2370
    %2372 = vdwg.mxu0
    %2373 = vmatpush.msra.mxu0 %v1901
    %2374 = vmatpush.msra.mxu0 %v1897
    %2375 = vmatpush.msra.mxu0 %v1893
    %2376 = vmatpush.msra.mxu0 %v1889
    %2377 = vmatpush.msra.mxu0 %v1885
    %2378 = vmatpush.msra.mxu0 %v1881
    %2379 = vmatpush.msra.mxu0 %v1877
    %2380 = vmatpush.msra.mxu0 %v1873
    %2381 = vmatpush.msra.mxu0 %v1869
    %2382 = vmatpush.msra.mxu0 %v1865
    %2383 = vmatpush.msra.mxu0 %v1861
    %2384 = vmatpush.msra.mxu0 %v1857
    %2385 = vmatpush.msra.mxu0 %v1853
    %2386 = vmatpush.msra.mxu0 %v1849
    %2387 = vmatpush.msra.mxu0 %v1845
    %2388 = vmatpush.msra.mxu0 %v1841
    %2389 = vmatmul.f32.gmra.mxu0 %v1386
    %v2390 = vpop.f32.mrf.mxu0
    %v2391 = vadd.f32 %v2371, %v2390
    %2392 = vdwg.mxu0
    %2393 = vmatpush.msra.mxu0 %v1454
    %2394 = vmatpush.msra.mxu0 %v1450
    %2395 = vmatpush.msra.mxu0 %v1446
    %2396 = vmatpush.msra.mxu0 %v1442
    %2397 = vmatpush.msra.mxu0 %v1438
    %2398 = vmatpush.msra.mxu0 %v1434
    %2399 = vmatpush.msra.mxu0 %v1430
    %2400 = vmatpush.msra.mxu0 %v1426
    %2401 = vmatpush.msra.mxu0 %v1422
    %2402 = vmatpush.msra.mxu0 %v1418
    %2403 = vmatpush.msra.mxu0 %v1414
    %2404 = vmatpush.msra.mxu0 %v1410
    %2405 = vmatpush.msra.mxu0 %v1406
    %2406 = vmatpush.msra.mxu0 %v1402
    %2407 = vmatpush.msra.mxu0 %v1398
    %2408 = vmatpush.msra.mxu0 %v1394
    %2409 = vmatmul.f32.gmra.mxu0 %v1379
    %v2410 = vpop.f32.mrf.mxu0
    %v2411 = vadd.f32 %v1908, %v2410
    %2412 = vdwg.mxu0
    %2413 = vmatpush.msra.mxu0 %v1518
    %2414 = vmatpush.msra.mxu0 %v1514
    %2415 = vmatpush.msra.mxu0 %v1510
    %2416 = vmatpush.msra.mxu0 %v1506
    %2417 = vmatpush.msra.mxu0 %v1502
    %2418 = vmatpush.msra.mxu0 %v1498
    %2419 = vmatpush.msra.mxu0 %v1494
    %2420 = vmatpush.msra.mxu0 %v1490
    %2421 = vmatpush.msra.mxu0 %v1486
    %2422 = vmatpush.msra.mxu0 %v1482
    %2423 = vmatpush.msra.mxu0 %v1478
    %2424 = vmatpush.msra.mxu0 %v1474
    %2425 = vmatpush.msra.mxu0 %v1470
    %2426 = vmatpush.msra.mxu0 %v1466
    %2427 = vmatpush.msra.mxu0 %v1462
    %2428 = vmatpush.msra.mxu0 %v1458
    %2429 = vmatmul.f32.gmra.mxu0 %v1380
    %v2430 = vpop.f32.mrf.mxu0
    %v2431 = vadd.f32 %v2411, %v2430
    %2432 = vdwg.mxu0
    %2433 = vmatpush.msra.mxu0 %v1582
    %2434 = vmatpush.msra.mxu0 %v1578
    %2435 = vmatpush.msra.mxu0 %v1574
    %2436 = vmatpush.msra.mxu0 %v1570
    %2437 = vmatpush.msra.mxu0 %v1566
    %2438 = vmatpush.msra.mxu0 %v1562
    %2439 = vmatpush.msra.mxu0 %v1558
    %2440 = vmatpush.msra.mxu0 %v1554
    %2441 = vmatpush.msra.mxu0 %v1550
    %2442 = vmatpush.msra.mxu0 %v1546
    %2443 = vmatpush.msra.mxu0 %v1542
    %2444 = vmatpush.msra.mxu0 %v1538
    %2445 = vmatpush.msra.mxu0 %v1534
    %2446 = vmatpush.msra.mxu0 %v1530
    %2447 = vmatpush.msra.mxu0 %v1526
    %2448 = vmatpush.msra.mxu0 %v1522
    %2449 = vmatmul.f32.gmra.mxu0 %v1381
    %v2450 = vpop.f32.mrf.mxu0
    %v2451 = vadd.f32 %v2431, %v2450
    %2452 = vdwg.mxu0
    %2453 = vmatpush.msra.mxu0 %v1646
    %2454 = vmatpush.msra.mxu0 %v1642
    %2455 = vmatpush.msra.mxu0 %v1638
    %2456 = vmatpush.msra.mxu0 %v1634
    %2457 = vmatpush.msra.mxu0 %v1630
    %2458 = vmatpush.msra.mxu0 %v1626
    %2459 = vmatpush.msra.mxu0 %v1622
    %2460 = vmatpush.msra.mxu0 %v1618
    %2461 = vmatpush.msra.mxu0 %v1614
    %2462 = vmatpush.msra.mxu0 %v1610
    %2463 = vmatpush.msra.mxu0 %v1606
    %2464 = vmatpush.msra.mxu0 %v1602
    %2465 = vmatpush.msra.mxu0 %v1598
    %2466 = vmatpush.msra.mxu0 %v1594
    %2467 = vmatpush.msra.mxu0 %v1590
    %2468 = vmatpush.msra.mxu0 %v1586
    %2469 = vmatmul.f32.gmra.mxu0 %v1382
    %v2470 = vpop.f32.mrf.mxu0
    %v2471 = vadd.f32 %v2451, %v2470
    %2472 = vdwg.mxu0
    %2473 = vmatpush.msra.mxu0 %v1710
    %2474 = vmatpush.msra.mxu0 %v1706
    %2475 = vmatpush.msra.mxu0 %v1702
    %2476 = vmatpush.msra.mxu0 %v1698
    %2477 = vmatpush.msra.mxu0 %v1694
    %2478 = vmatpush.msra.mxu0 %v1690
    %2479 = vmatpush.msra.mxu0 %v1686
    %2480 = vmatpush.msra.mxu0 %v1682
    %2481 = vmatpush.msra.mxu0 %v1678
    %2482 = vmatpush.msra.mxu0 %v1674
    %2483 = vmatpush.msra.mxu0 %v1670
    %2484 = vmatpush.msra.mxu0 %v1666
    %2485 = vmatpush.msra.mxu0 %v1662
    %2486 = vmatpush.msra.mxu0 %v1658
    %2487 = vmatpush.msra.mxu0 %v1654
    %2488 = vmatpush.msra.mxu0 %v1650
    %2489 = vmatmul.f32.gmra.mxu0 %v1383
    %v2490 = vpop.f32.mrf.mxu0
    %v2491 = vadd.f32 %v2471, %v2490
    %2492 = vdwg.mxu0
    %2493 = vmatpush.msra.mxu0 %v1774
    %2494 = vmatpush.msra.mxu0 %v1770
    %2495 = vmatpush.msra.mxu0 %v1766
    %2496 = vmatpush.msra.mxu0 %v1762
    %2497 = vmatpush.msra.mxu0 %v1758
    %2498 = vmatpush.msra.mxu0 %v1754
    %2499 = vmatpush.msra.mxu0 %v1750
    %2500 = vmatpush.msra.mxu0 %v1746
    %2501 = vmatpush.msra.mxu0 %v1742
    %2502 = vmatpush.msra.mxu0 %v1738
    %2503 = vmatpush.msra.mxu0 %v1734
    %2504 = vmatpush.msra.mxu0 %v1730
    %2505 = vmatpush.msra.mxu0 %v1726
    %2506 = vmatpush.msra.mxu0 %v1722
    %2507 = vmatpush.msra.mxu0 %v1718
    %2508 = vmatpush.msra.mxu0 %v1714
    %2509 = vmatmul.f32.gmra.mxu0 %v1384
    %v2510 = vpop.f32.mrf.mxu0
    %v2511 = vadd.f32 %v2491, %v2510
    %2512 = vdwg.mxu0
    %2513 = vmatpush.msra.mxu0 %v1838
    %2514 = vmatpush.msra.mxu0 %v1834
    %2515 = vmatpush.msra.mxu0 %v1830
    %2516 = vmatpush.msra.mxu0 %v1826
    %2517 = vmatpush.msra.mxu0 %v1822
    %2518 = vmatpush.msra.mxu0 %v1818
    %2519 = vmatpush.msra.mxu0 %v1814
    %2520 = vmatpush.msra.mxu0 %v1810
    %2521 = vmatpush.msra.mxu0 %v1806
    %2522 = vmatpush.msra.mxu0 %v1802
    %2523 = vmatpush.msra.mxu0 %v1798
    %2524 = vmatpush.msra.mxu0 %v1794
    %2525 = vmatpush.msra.mxu0 %v1790
    %2526 = vmatpush.msra.mxu0 %v1786
    %2527 = vmatpush.msra.mxu0 %v1782
    %2528 = vmatpush.msra.mxu0 %v1778
    %2529 = vmatmul.f32.gmra.mxu0 %v1385
    %v2530 = vpop.f32.mrf.mxu0
    %v2531 = vadd.f32 %v2511, %v2530
    %2532 = vdwg.mxu0
    %2533 = vmatpush.msra.mxu0 %v1902
    %2534 = vmatpush.msra.mxu0 %v1898
    %2535 = vmatpush.msra.mxu0 %v1894
    %2536 = vmatpush.msra.mxu0 %v1890
    %2537 = vmatpush.msra.mxu0 %v1886
    %2538 = vmatpush.msra.mxu0 %v1882
    %2539 = vmatpush.msra.mxu0 %v1878
    %2540 = vmatpush.msra.mxu0 %v1874
    %2541 = vmatpush.msra.mxu0 %v1870
    %2542 = vmatpush.msra.mxu0 %v1866
    %2543 = vmatpush.msra.mxu0 %v1862
    %2544 = vmatpush.msra.mxu0 %v1858
    %2545 = vmatpush.msra.mxu0 %v1854
    %2546 = vmatpush.msra.mxu0 %v1850
    %2547 = vmatpush.msra.mxu0 %v1846
    %2548 = vmatpush.msra.mxu0 %v1842
    %2549 = vmatmul.f32.gmra.mxu0 %v1386
    %v2550 = vpop.f32.mrf.mxu0
    %v2551 = vadd.f32 %v2531, %v2550
    %2552 = vdwg.mxu0
    %v2553 = vmax.f32 %v2071, 0.0
    %v2554 = vmax.f32 %v2231, 0.0
    %v2555 = vmax.f32 %v2391, 0.0
    %v2556 = vmax.f32 %v2551, 0.0
    %s2557 = smul.u32 512, 1
    %s2558 = sshll.u32 %s2557, 4
    %2559 = dma.done %s182, %s2558
    %v2560 = vld [vmem:[#allocation7] sm:$0xff]
    %v2561 = vld [vmem:[#allocation7 + $0x8] sm:$0xff]
    %v2562 = vld [vmem:[#allocation7 + $0x10] sm:$0xff]
    %v2563 = vld [vmem:[#allocation7 + $0x18] sm:$0xff]
    %v2564 = vld [vmem:[#allocation7 + $0x20] sm:$0xff]
    %v2565 = vld [vmem:[#allocation7 + $0x28] sm:$0xff]
    %v2566 = vld [vmem:[#allocation7 + $0x30] sm:$0xff]
    %v2567 = vld [vmem:[#allocation7 + $0x38] sm:$0xff]
    %v2568 = vld [vmem:[#allocation7 + $0x40] sm:$0xff]
    %v2569 = vld [vmem:[#allocation7 + $0x48] sm:$0xff]
    %v2570 = vld [vmem:[#allocation7 + $0x50] sm:$0xff]
    %v2571 = vld [vmem:[#allocation7 + $0x58] sm:$0xff]
    %v2572 = vld [vmem:[#allocation7 + $0x60] sm:$0xff]
    %v2573 = vld [vmem:[#allocation7 + $0x68] sm:$0xff]
    %v2574 = vld [vmem:[#allocation7 + $0x70] sm:$0xff]
    %v2575 = vld [vmem:[#allocation7 + $0x78] sm:$0xff]
    %v2576 = vld [vmem:[#allocation7 + $0x80] sm:$0xff]
    %v2577 = vld [vmem:[#allocation7 + $0x88] sm:$0xff]
    %v2578 = vld [vmem:[#allocation7 + $0x90] sm:$0xff]
    %v2579 = vld [vmem:[#allocation7 + $0x98] sm:$0xff]
    %v2580 = vld [vmem:[#allocation7 + $0xa0] sm:$0xff]
    %v2581 = vld [vmem:[#allocation7 + $0xa8] sm:$0xff]
    %v2582 = vld [vmem:[#allocation7 + $0xb0] sm:$0xff]
    %v2583 = vld [vmem:[#allocation7 + $0xb8] sm:$0xff]
    %v2584 = vld [vmem:[#allocation7 + $0xc0] sm:$0xff]
    %v2585 = vld [vmem:[#allocation7 + $0xc8] sm:$0xff]
    %v2586 = vld [vmem:[#allocation7 + $0xd0] sm:$0xff]
    %v2587 = vld [vmem:[#allocation7 + $0xd8] sm:$0xff]
    %v2588 = vld [vmem:[#allocation7 + $0xe0] sm:$0xff]
    %v2589 = vld [vmem:[#allocation7 + $0xe8] sm:$0xff]
    %v2590 = vld [vmem:[#allocation7 + $0xf0] sm:$0xff]
    %v2591 = vld [vmem:[#allocation7 + $0xf8] sm:$0xff]
    %v2592 = vld [vmem:[#allocation7 + $0x100] sm:$0xff]
    %v2593 = vld [vmem:[#allocation7 + $0x108] sm:$0xff]
    %v2594 = vld [vmem:[#allocation7 + $0x110] sm:$0xff]
    %v2595 = vld [vmem:[#allocation7 + $0x118] sm:$0xff]
    %v2596 = vld [vmem:[#allocation7 + $0x120] sm:$0xff]
    %v2597 = vld [vmem:[#allocation7 + $0x128] sm:$0xff]
    %v2598 = vld [vmem:[#allocation7 + $0x130] sm:$0xff]
    %v2599 = vld [vmem:[#allocation7 + $0x138] sm:$0xff]
    %v2600 = vld [vmem:[#allocation7 + $0x140] sm:$0xff]
    %v2601 = vld [vmem:[#allocation7 + $0x148] sm:$0xff]
    %v2602 = vld [vmem:[#allocation7 + $0x150] sm:$0xff]
    %v2603 = vld [vmem:[#allocation7 + $0x158] sm:$0xff]
    %v2604 = vld [vmem:[#allocation7 + $0x160] sm:$0xff]
    %v2605 = vld [vmem:[#allocation7 + $0x168] sm:$0xff]
    %v2606 = vld [vmem:[#allocation7 + $0x170] sm:$0xff]
    %v2607 = vld [vmem:[#allocation7 + $0x178] sm:$0xff]
    %v2608 = vld [vmem:[#allocation7 + $0x180] sm:$0xff]
    %v2609 = vld [vmem:[#allocation7 + $0x188] sm:$0xff]
    %v2610 = vld [vmem:[#allocation7 + $0x190] sm:$0xff]
    %v2611 = vld [vmem:[#allocation7 + $0x198] sm:$0xff]
    %v2612 = vld [vmem:[#allocation7 + $0x1a0] sm:$0xff]
    %v2613 = vld [vmem:[#allocation7 + $0x1a8] sm:$0xff]
    %v2614 = vld [vmem:[#allocation7 + $0x1b0] sm:$0xff]
    %v2615 = vld [vmem:[#allocation7 + $0x1b8] sm:$0xff]
    %v2616 = vld [vmem:[#allocation7 + $0x1c0] sm:$0xff]
    %v2617 = vld [vmem:[#allocation7 + $0x1c8] sm:$0xff]
    %v2618 = vld [vmem:[#allocation7 + $0x1d0] sm:$0xff]
    %v2619 = vld [vmem:[#allocation7 + $0x1d8] sm:$0xff]
    %v2620 = vld [vmem:[#allocation7 + $0x1e0] sm:$0xff]
    %v2621 = vld [vmem:[#allocation7 + $0x1e8] sm:$0xff]
    %v2622 = vld [vmem:[#allocation7 + $0x1f0] sm:$0xff]
    %v2623 = vld [vmem:[#allocation7 + $0x1f8] sm:$0xff]
    %v2624 = vld [vmem:[#allocation20] sm:$0x1]
    %v2626 = vperm.slane %v2624, 0
    %2628 = vmatpush.msra.mxu0 %v2575
    %2629 = vmatpush.msra.mxu0 %v2574
    %2630 = vmatpush.msra.mxu0 %v2573
    %2631 = vmatpush.msra.mxu0 %v2572
    %2632 = vmatpush.msra.mxu0 %v2571
    %2633 = vmatpush.msra.mxu0 %v2570
    %2634 = vmatpush.msra.mxu0 %v2569
    %2635 = vmatpush.msra.mxu0 %v2568
    %2636 = vmatpush.msra.mxu0 %v2567
    %2637 = vmatpush.msra.mxu0 %v2566
    %2638 = vmatpush.msra.mxu0 %v2565
    %2639 = vmatpush.msra.mxu0 %v2564
    %2640 = vmatpush.msra.mxu0 %v2563
    %2641 = vmatpush.msra.mxu0 %v2562
    %2642 = vmatpush.msra.mxu0 %v2561
    %2643 = vmatpush.msra.mxu0 %v2560
    %2644 = vmatmul.f32.gmra.mxu0 %v2553
    %v2645 = vpop.f32.mrf.mxu0
    %v2646 = vadd.f32 %v2626, %v2645
    %2647 = vdwg.mxu0
    %2648 = vmatpush.msra.mxu0 %v2591
    %2649 = vmatpush.msra.mxu0 %v2590
    %2650 = vmatpush.msra.mxu0 %v2589
    %2651 = vmatpush.msra.mxu0 %v2588
    %2652 = vmatpush.msra.mxu0 %v2587
    %2653 = vmatpush.msra.mxu0 %v2586
    %2654 = vmatpush.msra.mxu0 %v2585
    %2655 = vmatpush.msra.mxu0 %v2584
    %2656 = vmatpush.msra.mxu0 %v2583
    %2657 = vmatpush.msra.mxu0 %v2582
    %2658 = vmatpush.msra.mxu0 %v2581
    %2659 = vmatpush.msra.mxu0 %v2580
    %2660 = vmatpush.msra.mxu0 %v2579
    %2661 = vmatpush.msra.mxu0 %v2578
    %2662 = vmatpush.msra.mxu0 %v2577
    %2663 = vmatpush.msra.mxu0 %v2576
    %2664 = vmatmul.f32.gmra.mxu0 %v2554
    %v2665 = vpop.f32.mrf.mxu0
    %v2666 = vadd.f32 %v2646, %v2665
    %2667 = vdwg.mxu0
    %2668 = vmatpush.msra.mxu0 %v2607
    %2669 = vmatpush.msra.mxu0 %v2606
    %2670 = vmatpush.msra.mxu0 %v2605
    %2671 = vmatpush.msra.mxu0 %v2604
    %2672 = vmatpush.msra.mxu0 %v2603
    %2673 = vmatpush.msra.mxu0 %v2602
    %2674 = vmatpush.msra.mxu0 %v2601
    %2675 = vmatpush.msra.mxu0 %v2600
    %2676 = vmatpush.msra.mxu0 %v2599
    %2677 = vmatpush.msra.mxu0 %v2598
    %2678 = vmatpush.msra.mxu0 %v2597
    %2679 = vmatpush.msra.mxu0 %v2596
    %2680 = vmatpush.msra.mxu0 %v2595
    %2681 = vmatpush.msra.mxu0 %v2594
    %2682 = vmatpush.msra.mxu0 %v2593
    %2683 = vmatpush.msra.mxu0 %v2592
    %2684 = vmatmul.f32.gmra.mxu0 %v2555
    %v2685 = vpop.f32.mrf.mxu0
    %v2686 = vadd.f32 %v2666, %v2685
    %2687 = vdwg.mxu0
    %2688 = vmatpush.msra.mxu0 %v2623
    %2689 = vmatpush.msra.mxu0 %v2622
    %2690 = vmatpush.msra.mxu0 %v2621
    %2691 = vmatpush.msra.mxu0 %v2620
    %2692 = vmatpush.msra.mxu0 %v2619
    %2693 = vmatpush.msra.mxu0 %v2618
    %2694 = vmatpush.msra.mxu0 %v2617
    %2695 = vmatpush.msra.mxu0 %v2616
    %2696 = vmatpush.msra.mxu0 %v2615
    %2697 = vmatpush.msra.mxu0 %v2614
    %2698 = vmatpush.msra.mxu0 %v2613
    %2699 = vmatpush.msra.mxu0 %v2612
    %2700 = vmatpush.msra.mxu0 %v2611
    %2701 = vmatpush.msra.mxu0 %v2610
    %2702 = vmatpush.msra.mxu0 %v2609
    %2703 = vmatpush.msra.mxu0 %v2608
    %2704 = vmatmul.f32.gmra.mxu0 %v2556
    %v2705 = vpop.f32.mrf.mxu0
    %v2706 = vadd.f32 %v2686, %v2705
    %2707 = vdwg.mxu0
    %2708 = vst [vmem:[%s15] sm:$0xff] %v2706
    // Predicated region
    $region94: #{conv4_fc2_forward.1} parent=1 // pred_check
      _
    $region95: #{conv4_fc2_forward.1} parent=1 // pred_check_branch
      %2710 = sbr.rel (0) target = $region97
    $region96: #{conv4_fc2_forward.1} parent=1 // pred_region
      _
    $region97: #{conv4_fc2_forward.1} parent=1 // pred_fallthru
      _
    // Predicated region
    $region98: #{conv4_fc2_forward.1} parent=1 // pred_check
      _
    $region99: #{conv4_fc2_forward.1} parent=1 // pred_check_branch
      %2712 = sbr.rel (0) target = $region101
    $region100: #{conv4_fc2_forward.1} parent=1 // pred_region
      _
    $region101: #{conv4_fc2_forward.1} parent=1 // pred_fallthru
      _
    %2713 = vsyncpa [#allocation10], 1
    %2714 = vsyncpa [#allocation12], 1
    %2715 = vsyncpa [#allocation15], 1
    %2716 = vsyncpa [#allocation18], 1
    %2717 = vsyncpa [#allocation21], 1
  %2718 = vsyncmov [#allocation8]
  %s2719 = vpop.sfrf %2718
  %p2720 = scmp.eq.s32.totalorder %s2719, 0
  %p2721 = pneg %p2720
  %2723 = shalt.err (%p2721)
  %s2724 = scalar_lea.sflag [#allocation8], 1
  %2725 = vsyncmov %s2724
  %s2726 = vpop.sfrf %2725
  %p2727 = scmp.eq.s32.totalorder %s2726, 0
  %p2728 = pneg %p2727
  %2730 = shalt.err (%p2728)
  %s2731 = scalar_lea.sflag [#allocation8], 2
  %2732 = vsyncmov %s2731
  %s2733 = vpop.sfrf %2732
  %p2734 = scmp.eq.s32.totalorder %s2733, 0
  %p2735 = pneg %p2734
  %2737 = shalt.err (%p2735)

</llo_original>
